<compile_context>
chip_gen: v6e
topology: v6e:2x2x1
jax: 0.10.0
libtpu: 0.0.40
codegen_flags: <defaults>
</compile_context>

<pallas_src>
import functools
import math

import jax
import jax.numpy as jnp
import numpy as np
from jax.experimental import pallas as pl
from jax.experimental.pallas import tpu as pltpu

NEG_INF = -1e30  # finite "minus infinity": keeps masked max/exp math NaN-free
VMEM_LIMIT = 48 * 1024 * 1024  # <= v7x physical VMEM (64 MiB), plenty on v5e/v6e


def _round_up(x, m):
    return ((x + m - 1) // m) * m


# ---------------------------------------------------------------------------
# Kernel A: projection xp = x @ W  and packed attention logits
#           alpha[:, 0] = xp . a_src,  alpha[:, 1] = xp . a_dst
# ---------------------------------------------------------------------------
def proj_kernel(x_ref, w_ref, apack_ref, xp_ref, alpha_ref):
    xp = jnp.dot(x_ref[...], w_ref[...], preferred_element_type=jnp.float32)
    xp_bf = xp.astype(jnp.bfloat16)
    # one bf16 MXU matmul (single pass) instead of f32 operands / VPU reduce
    alpha_ref[...] = jnp.dot(xp_bf, apack_ref[...],
                             preferred_element_type=jnp.float32)
    xp_ref[...] = xp_bf


# ---------------------------------------------------------------------------
# Kernel B: tiled masked attention (online softmax over src blocks),
#           aggregation + GAT bias + relu, fused output Linear.
#           grid = (dst blocks i [parallel], src blocks j [arbitrary])
# ---------------------------------------------------------------------------
def attn_kernel(occ_ref, adst_ref, asrc_ref, adj_ref, xp_ref, bgat_ref,
                wout_ref, bout_ref, h_ref, z_ref, m_sc, l_sc,
                *, xp_resident):
    i = pl.program_id(0)
    j = pl.program_id(1)
    nj = pl.num_programs(1)

    @pl.when(j == 0)
    def _init():
        m_sc[...] = jnp.full_like(m_sc, NEG_INF)
        l_sc[...] = jnp.zeros_like(l_sc)
        h_ref[...] = jnp.zeros_like(h_ref)   # unnormalized acc lives in h_ref

    # Skip fully empty adjacency tiles entirely (occupancy table in SMEM).
    @pl.when(occ_ref[i * nj + j] != 0)
    def _update():
        edge = adj_ref[...] != 0                         # [TI, TJ] bool

        # e[i, j] = LeakyReLU(alpha_dst[i] + alpha_src[j], 0.2), masked for max
        asrc = asrc_ref[j]                               # resident row -> (1, TJ)
        e = adst_ref[...] + asrc                         # [TI,1]+[1,TJ] -> [TI,TJ]
        e = jnp.where(e >= 0.0, e, 0.2 * e)
        e = jnp.where(edge, e, NEG_INF)

        # online softmax update (elementwise math in f32)
        m_prev = m_sc[...]
        m_new = jnp.maximum(m_prev, jnp.max(e, axis=-1, keepdims=True))
        corr = jnp.exp(m_prev - m_new)
        # reuse the edge predicate: no int8->f32 convert pass
        p = jnp.where(edge, jnp.exp(e - m_new), 0.0)
        l_sc[...] = corr * l_sc[...] + jnp.sum(p, axis=-1, keepdims=True)

        if xp_resident:
            xp_blk = xp_ref[j]                           # (TJ, Hp) bf16, VMEM-resident
        else:
            xp_blk = xp_ref[0]                           # streamed per-j block
        h_ref[...] = corr * h_ref[...] + jnp.dot(        # bf16 MXU, f32 accumulation
            p.astype(jnp.bfloat16), xp_blk, preferred_element_type=jnp.float32)
        m_sc[...] = m_new

    @pl.when(j == nj - 1)
    def _finalize():
        # deferred normalization: one [TI,1] EUP reciprocal
        inv_l = pl.reciprocal(l_sc[...], approx=True)
        h = jnp.maximum(h_ref[...] * inv_l + bgat_ref[...], 0.0)
        h_ref[...] = h
        z_ref[...] = (jnp.dot(h.astype(jnp.bfloat16), wout_ref[...],
                              preferred_element_type=jnp.float32)
                      + bout_ref[...])


# ---------------------------------------------------------------------------
# Wrapper: padding / layout plumbing + the two pallas_calls
# ---------------------------------------------------------------------------
def gat_forward(x, edge_index, params, *, ti=512, tj=512):
    """x: [N, F] float32, edge_index: [2, E] int32 (row 0 = src, row 1 = dst)."""
    N, F = x.shape
    W, a_src, a_dst = params["W"], params["a_src"], params["a_dst"]
    b_gat, W_out, b_out = params["b_gat"], params["W_out"], params["b_out"]
    H = W.shape[1]
    C = W_out.shape[1]

    f32, bf16 = jnp.float32, jnp.bfloat16

    # lane-dense, tile-aligned padded sizes
    Np = _round_up(max(N, 1), math.lcm(ti, tj))
    Fp = _round_up(F, 128)
    Hp = _round_up(H, 128)
    Cp = _round_up(C, 128)
    ni, nj = Np // ti, Np // tj

    # projection-kernel row tile: as large as evenly divides Np (>= ti)
    ta = ti
    for cand in (2048, 1024, 512):
        if cand >= ti and Np % cand == 0:
            ta = cand
            break
    na = Np // ta

    # padded / packed parameters (pure layout plumbing, zero-padded)
    x_p = jnp.zeros((Np, Fp), f32).at[:N, :F].set(x).astype(bf16)
    W_p = jnp.zeros((Fp, Hp), f32).at[:F, :H].set(W).astype(bf16)
    apack = (jnp.zeros((Hp, 128), f32)
             .at[:H, 0].set(a_src.reshape(-1))
             .at[:H, 1].set(a_dst.reshape(-1))).astype(bf16)
    bgat_p = jnp.zeros((1, Hp), f32).at[:, :H].set(b_gat)
    Wout_p = jnp.zeros((Hp, Cp), f32).at[:H, :C].set(W_out).astype(bf16)
    bout_p = jnp.zeros((1, Cp), f32).at[:, :C].set(b_out)

    # dense adjacency mask as int8: adj[dst, src] = 1, self loops on every row
    # (padded rows get only a self loop -> well-defined softmax, rows discarded)
    src, dst = edge_index[0], edge_index[1]
    adj = jnp.zeros((Np, Np), jnp.int8)
    adj = adj.at[dst, src].set(1)
    diag = jnp.arange(Np)
    adj = adj.at[diag, diag].set(1)      # add_self_loops=True

    # per-(i,j)-tile occupancy table (int32, flattened) -> scalar prefetch
    occ = (adj.reshape(ni, ti, nj, tj).max(axis=(1, 3)) > 0)
    occ = occ.astype(jnp.int32).reshape(-1)

    cparams_1d = pltpu.CompilerParams(
        dimension_semantics=("parallel",),
        vmem_limit_bytes=VMEM_LIMIT)
    cparams_2d = pltpu.CompilerParams(
        dimension_semantics=("parallel", "arbitrary"),
        vmem_limit_bytes=VMEM_LIMIT)

    # ---- kernel A: projection + attention-logit halves ----
    xp, alpha = pl.pallas_call(
        proj_kernel,
        out_shape=(jax.ShapeDtypeStruct((Np, Hp), bf16),
                   jax.ShapeDtypeStruct((Np, 128), f32)),
        grid_spec=pltpu.PrefetchScalarGridSpec(
            num_scalar_prefetch=0,
            grid=(na,),
            in_specs=[pl.BlockSpec((ta, Fp), lambda i: (i, 0)),
                      pl.BlockSpec((Fp, Hp), lambda i: (0, 0)),
                      pl.BlockSpec((Hp, 128), lambda i: (0, 0))],
            out_specs=[pl.BlockSpec((ta, Hp), lambda i: (i, 0)),
                       pl.BlockSpec((ta, 128), lambda i: (i, 0))]),
        compiler_params=cparams_1d,
    )(x_p, W_p, apack)

    # layout plumbing: dst logits as a column, src logits as (nj, 1, tj) so the
    # full row is VMEM-resident and each j slice is a leading-axis load
    alpha_dst_col = alpha[:, 1].reshape(Np, 1)
    alpha_src3 = alpha[:, 0].reshape(nj, 1, tj)
    xp3 = xp.reshape(nj, tj, Hp)

    # xp fully VMEM-resident when it is small; otherwise streamed per-j block
    xp_resident = (Np * Hp * 2) <= (8 * 1024 * 1024)
    if xp_resident:
        xp_spec = pl.BlockSpec((nj, tj, Hp), lambda i, j, occ: (0, 0, 0))
    else:
        xp_spec = pl.BlockSpec((1, tj, Hp), lambda i, j, occ: (j, 0, 0))

    # ---- kernel B: tiled masked softmax + aggregation + output Linear ----
    h_p, z_p = pl.pallas_call(
        functools.partial(attn_kernel, xp_resident=xp_resident),
        out_shape=(jax.ShapeDtypeStruct((Np, Hp), f32),
                   jax.ShapeDtypeStruct((Np, Cp), f32)),
        grid_spec=pltpu.PrefetchScalarGridSpec(
            num_scalar_prefetch=1,
            grid=(ni, nj),
            in_specs=[pl.BlockSpec((ti, 1), lambda i, j, occ: (i, 0)),
                      pl.BlockSpec((nj, 1, tj), lambda i, j, occ: (0, 0, 0)),
                      pl.BlockSpec((ti, tj), lambda i, j, occ: (i, j)),
                      xp_spec,
                      pl.BlockSpec((1, Hp), lambda i, j, occ: (0, 0)),
                      pl.BlockSpec((Hp, Cp), lambda i, j, occ: (0, 0)),
                      pl.BlockSpec((1, Cp), lambda i, j, occ: (0, 0))],
            out_specs=[pl.BlockSpec((ti, Hp), lambda i, j, occ: (i, 0)),
                       pl.BlockSpec((ti, Cp), lambda i, j, occ: (i, 0))],
            scratch_shapes=[pltpu.VMEM((ti, 1), f32),      # running max
                            pltpu.VMEM((ti, 1), f32)]),    # running denom
        compiler_params=cparams_2d,
    )(occ, alpha_dst_col, alpha_src3, adj, xp3, bgat_p, Wout_p, bout_p)

    return h_p[:N, :H], z_p[:N, :C]


# ---------------------------------------------------------------------------
# Pure-JAX reference (f32), params, and demo
# ---------------------------------------------------------------------------
def gat_reference(x, edge_index, params):
    N = x.shape[0]
    W, a_src, a_dst = params["W"], params["a_src"], params["a_dst"]
    b_gat, W_out, b_out = params["b_gat"], params["W_out"], params["b_out"]
    xp = x @ W
    al_s = jnp.sum(xp * a_src, axis=-1, keepdims=True)
    al_d = jnp.sum(xp * a_dst, axis=-1, keepdims=True)
    adj = jnp.zeros((N, N), jnp.float32)
    adj = adj.at[edge_index[1], edge_index[0]].set(1.0)
    adj = adj.at[jnp.arange(N), jnp.arange(N)].set(1.0)
    e = al_d + al_s.T
    e = jnp.where(e >= 0.0, e, 0.2 * e)
    e = jnp.where(adj > 0.0, e, NEG_INF)
    m = jnp.max(e, axis=-1, keepdims=True)
    p = jnp.exp(e - m) * adj
    attn = p / jnp.sum(p, axis=-1, keepdims=True)
    h = jnp.maximum(attn @ xp + b_gat, 0.0)
    z = h @ W_out + b_out
    return h, z


def init_params(key, num_features, num_classes, hidden_dim):
    ks = jax.random.split(key, 6)
    scale_w = 1.0 / jnp.sqrt(num_features)
    scale_a = 1.0 / jnp.sqrt(hidden_dim)
    return {
        "W":     jax.random.normal(ks[0], (num_features, hidden_dim), jnp.float32) * scale_w,
        "a_src": jax.random.normal(ks[1], (1, hidden_dim), jnp.float32) * scale_a,
        "a_dst": jax.random.normal(ks[2], (1, hidden_dim), jnp.float32) * scale_a,
        "b_gat": jnp.zeros((1, hidden_dim), jnp.float32),
        "W_out": jax.random.normal(ks[3], (hidden_dim, num_classes), jnp.float32) * scale_a,
        "b_out": jax.random.normal(ks[4], (1, num_classes), jnp.float32) * 0.01,
    }


if __name__ == "__main__":
    # N > tile so the attention grid is (3, 3): exercises multi-tile online
    # softmax, tile-occupancy skipping, padding, and resident accumulators.
    # (Production defaults are ti=tj=512; 256 here keeps the demo multi-tile
    #  at small N.)
    N, F_IN, HIDDEN, C = 600, 8, 32, 4

    key = jax.random.PRNGKey(0)
    k_x, k_e, k_p = jax.random.split(key, 3)

    x = jax.random.normal(k_x, (N, F_IN), jnp.float32)

    # deterministic small graph: a ring plus a few random chords
    ring_src = jnp.arange(N, dtype=jnp.int32)
    ring_dst = (ring_src + 1) % N
    extra_src = jax.random.randint(k_e, (32,), 0, N, dtype=jnp.int32)
    extra_dst = (extra_src + 7) % N
    edge_index = jnp.stack([jnp.concatenate([ring_src, extra_src]),
                            jnp.concatenate([ring_dst, extra_dst])], axis=0)

    params = init_params(k_p, F_IN, C, HIDDEN)

    gat_fn = jax.jit(functools.partial(gat_forward, ti=256, tj=256))
    h, z = gat_fn(x, edge_index, params)
    jax.block_until_ready((h, z))

    assert h.shape == (N, HIDDEN) and z.shape == (N, C)

    # loose tolerance: kernel uses bf16 MXU inputs + approx reciprocal
    h_exp, z_exp = gat_reference(x, edge_index, params)
    np.testing.assert_allclose(np.asarray(h), np.asarray(h_exp), rtol=5e-2, atol=5e-2)
    np.testing.assert_allclose(np.asarray(z), np.asarray(z_exp), rtol=5e-2, atol=5e-2)

    print("KERNEL_OK")
</pallas_src>

<mosaic_0001>
module attributes {stable_mosaic.version = 11 : i64} {
  func.func @proj_kernel(%arg0: i32, %arg1: memref<256x128xbf16, #tpu.memory_space<vmem>>, %arg2: memref<128x128xbf16, #tpu.memory_space<vmem>>, %arg3: memref<128x128xbf16, #tpu.memory_space<vmem>>, %arg4: memref<256x128xbf16, #tpu.memory_space<vmem>>, %arg5: memref<256x128xf32, #tpu.memory_space<vmem>>) attributes {dimension_semantics = [#tpu.dimension_semantics<parallel>], iteration_bounds = array<i64: 3>, scalar_prefetch = 0 : i64, scratch_operands = 0 : i64, tpu.core_type = #tpu.core_type<tc>, window_params = [{transform_indices = @transform_0, window_bounds = array<i64: 256, 128>}, {pipeline_mode = #tpu.pipeline_mode<synchronous>, transform_indices = @transform_1, window_bounds = array<i64: 128, 128>}, {pipeline_mode = #tpu.pipeline_mode<synchronous>, transform_indices = @transform_2, window_bounds = array<i64: 128, 128>}, {transform_indices = @transform_3, window_bounds = array<i64: 256, 128>}, {transform_indices = @transform_4, window_bounds = array<i64: 256, 128>}]} {
    %c0 = arith.constant 0 : index
    %c0_0 = arith.constant 0 : index
    %0 = vector.load %arg1[%c0, %c0_0] : memref<256x128xbf16, #tpu.memory_space<vmem>>, vector<256x128xbf16>
    %c0_1 = arith.constant 0 : index
    %c0_2 = arith.constant 0 : index
    %1 = vector.load %arg2[%c0_1, %c0_2] : memref<128x128xbf16, #tpu.memory_space<vmem>>, vector<128x128xbf16>
    %cst = arith.constant dense<0.000000e+00> : vector<256x128xf32>
    %2 = tpu.matmul %0, %1, %cst {dimension_numbers = #tpu.dot_dimension_numbers<[1], [0], [0], [1], [0, 0, 1, 1], [], []>} : vector<256x128xbf16>, vector<128x128xbf16>, vector<256x128xf32> -> vector<256x128xf32>
    %3 = arith.truncf %2 : vector<256x128xf32> to vector<256x128xbf16>
    %c0_3 = arith.constant 0 : index
    %c0_4 = arith.constant 0 : index
    %4 = vector.load %arg3[%c0_3, %c0_4] : memref<128x128xbf16, #tpu.memory_space<vmem>>, vector<128x128xbf16>
    %cst_5 = arith.constant dense<0.000000e+00> : vector<256x128xf32>
    %5 = tpu.matmul %3, %4, %cst_5 {dimension_numbers = #tpu.dot_dimension_numbers<[1], [0], [0], [1], [0, 0, 1, 1], [], []>} : vector<256x128xbf16>, vector<128x128xbf16>, vector<256x128xf32> -> vector<256x128xf32>
    %c0_6 = arith.constant 0 : index
    %c0_7 = arith.constant 0 : index
    %6 = vector.load %arg5[%c0_6, %c0_7] : memref<256x128xf32, #tpu.memory_space<vmem>>, vector<256x128xf32>
    tpu.vector_store %arg5[%c0_6, %c0_7], %5 {strides = array<i32>} : memref<256x128xf32, #tpu.memory_space<vmem>>, vector<256x128xf32>,
    %c0_8 = arith.constant 0 : index
    %c0_9 = arith.constant 0 : index
    %7 = vector.load %arg4[%c0_8, %c0_9] : memref<256x128xbf16, #tpu.memory_space<vmem>>, vector<256x128xbf16>
    tpu.vector_store %arg4[%c0_8, %c0_9], %3 {strides = array<i32>} : memref<256x128xbf16, #tpu.memory_space<vmem>>, vector<256x128xbf16>,
    return
  }
  func.func @transform_0(%arg0: i32) -> (i32, i32) {
    %c0_i32 = arith.constant 0 : i32
    %c0_i32_0 = arith.constant 0 : i32
    return %arg0, %c0_i32 : i32, i32
  }
  func.func @transform_1(%arg0: i32) -> (i32, i32) {
    %c0_i32 = arith.constant 0 : i32
    %c0_i32_0 = arith.constant 0 : i32
    %c0_i32_1 = arith.constant 0 : i32
    return %c0_i32, %c0_i32_0 : i32, i32
  }
  func.func @transform_2(%arg0: i32) -> (i32, i32) {
    %c0_i32 = arith.constant 0 : i32
    %c0_i32_0 = arith.constant 0 : i32
    %c0_i32_1 = arith.constant 0 : i32
    return %c0_i32, %c0_i32_0 : i32, i32
  }
  func.func @transform_3(%arg0: i32) -> (i32, i32) {
    %c0_i32 = arith.constant 0 : i32
    %c0_i32_0 = arith.constant 0 : i32
    return %arg0, %c0_i32 : i32, i32
  }
  func.func @transform_4(%arg0: i32) -> (i32, i32) {
    %c0_i32 = arith.constant 0 : i32
    %c0_i32_0 = arith.constant 0 : i32
    return %arg0, %c0_i32 : i32, i32
  }
}

module attributes {stable_mosaic.version = 11 : i64} {
  func.func @attn_kernel(%arg0: i32, %arg1: i32, %arg2: memref<9xi32, #tpu.memory_space<smem>>, %arg3: memref<256x1xf32, #tpu.memory_space<vmem>>, %arg4: memref<3x1x256xf32, #tpu.memory_space<vmem>>, %arg5: memref<256x256xi8, #tpu.memory_space<vmem>>, %arg6: memref<3x256x128xbf16, #tpu.memory_space<vmem>>, %arg7: memref<1x128xf32, #tpu.memory_space<vmem>>, %arg8: memref<128x128xbf16, #tpu.memory_space<vmem>>, %arg9: memref<1x128xf32, #tpu.memory_space<vmem>>, %arg10: memref<256x128xf32, #tpu.memory_space<vmem>>, %arg11: memref<256x128xf32, #tpu.memory_space<vmem>>, %arg12: memref<256x1xf32, #tpu.memory_space<vmem>>, %arg13: memref<256x1xf32, #tpu.memory_space<vmem>>) attributes {dimension_semantics = [#tpu.dimension_semantics<parallel>, #tpu.dimension_semantics<arbitrary>], iteration_bounds = array<i64: 3, 3>, scalar_prefetch = 1 : i64, scratch_operands = 2 : i64, tpu.core_type = #tpu.core_type<tc>, window_params = [{transform_indices = @transform_0, window_bounds = array<i64: 256, 1>}, {pipeline_mode = #tpu.pipeline_mode<synchronous>, transform_indices = @transform_1, window_bounds = array<i64: 3, 1, 256>}, {transform_indices = @transform_2, window_bounds = array<i64: 256, 256>}, {pipeline_mode = #tpu.pipeline_mode<synchronous>, transform_indices = @transform_3, window_bounds = array<i64: 3, 256, 128>}, {pipeline_mode = #tpu.pipeline_mode<synchronous>, transform_indices = @transform_4, window_bounds = array<i64: 1, 128>}, {pipeline_mode = #tpu.pipeline_mode<synchronous>, transform_indices = @transform_5, window_bounds = array<i64: 128, 128>}, {pipeline_mode = #tpu.pipeline_mode<synchronous>, transform_indices = @transform_6, window_bounds = array<i64: 1, 128>}, {transform_indices = @transform_7, window_bounds = array<i64: 256, 128>}, {transform_indices = @transform_8, window_bounds = array<i64: 256, 128>}]} {
    %c0_i32 = arith.constant 0 : i32
    %0 = arith.cmpi eq, %arg1, %c0_i32 : i32
    %1 = arith.extui %0 : i1 to i32
    %c0_i32_0 = arith.constant 0 : i32
    %2 = arith.cmpi ne, %1, %c0_i32_0 : i32
    scf.if %2 {
      %cst = arith.constant -1.000000e+30 : f32
      %13 = vector.broadcast %cst : f32 to vector<256x1xf32>
      %c0 = arith.constant 0 : index
      %c0_4 = arith.constant 0 : index
      %14 = vector.load %arg12[%c0, %c0_4] : memref<256x1xf32, #tpu.memory_space<vmem>>, vector<256x1xf32>
      tpu.vector_store %arg12[%c0, %c0_4], %13 {strides = array<i32>} : memref<256x1xf32, #tpu.memory_space<vmem>>, vector<256x1xf32>,
      %cst_5 = arith.constant 0.000000e+00 : f32
      %15 = vector.broadcast %cst_5 : f32 to vector<256x1xf32>
      %c0_6 = arith.constant 0 : index
      %c0_7 = arith.constant 0 : index
      %16 = vector.load %arg13[%c0_6, %c0_7] : memref<256x1xf32, #tpu.memory_space<vmem>>, vector<256x1xf32>
      tpu.vector_store %arg13[%c0_6, %c0_7], %15 {strides = array<i32>} : memref<256x1xf32, #tpu.memory_space<vmem>>, vector<256x1xf32>,
      %cst_8 = arith.constant 0.000000e+00 : f32
      %17 = vector.broadcast %cst_8 : f32 to vector<256x128xf32>
      %c0_9 = arith.constant 0 : index
      %c0_10 = arith.constant 0 : index
      %18 = vector.load %arg10[%c0_9, %c0_10] : memref<256x128xf32, #tpu.memory_space<vmem>>, vector<256x128xf32>
      tpu.vector_store %arg10[%c0_9, %c0_10], %17 {strides = array<i32>} : memref<256x128xf32, #tpu.memory_space<vmem>>, vector<256x128xf32>,
    } else {
    }
    %c3_i32 = arith.constant 3 : i32
    %3 = arith.muli %arg0, %c3_i32 : i32
    %4 = arith.addi %3, %arg1 : i32
    %5 = arith.index_cast %4 : i32 to index
    %6 = memref.load %arg2[%5] : memref<9xi32, #tpu.memory_space<smem>>
    %c0_i32_1 = arith.constant 0 : i32
    %7 = arith.cmpi ne, %6, %c0_i32_1 : i32
    %8 = arith.extui %7 : i1 to i32
    %c0_i32_2 = arith.constant 0 : i32
    %9 = arith.cmpi ne, %8, %c0_i32_2 : i32
    scf.if %9 {
      %c0 = arith.constant 0 : index
      %c0_4 = arith.constant 0 : index
      %13 = vector.load %arg5[%c0, %c0_4] : memref<256x256xi8, #tpu.memory_space<vmem>>, vector<256x256xi8>
      %c0_i8 = arith.constant 0 : i8
      %14 = vector.broadcast %c0_i8 : i8 to vector<256x256xi8>
      %15 = arith.cmpi ne, %13, %14 : vector<256x256xi8>
      %16 = arith.index_cast %arg1 : i32 to index
      %c0_5 = arith.constant 0 : index
      %c0_6 = arith.constant 0 : index
      %17 = vector.load %arg4[%16, %c0_5, %c0_6] : memref<3x1x256xf32, #tpu.memory_space<vmem>>, vector<1x1x256xf32>
      %18 = vector.shape_cast %17 : vector<1x1x256xf32> to vector<1x256xf32>
      %c0_7 = arith.constant 0 : index
      %c0_8 = arith.constant 0 : index
      %19 = vector.load %arg3[%c0_7, %c0_8] : memref<256x1xf32, #tpu.memory_space<vmem>>, vector<256x1xf32>
      %20 = vector.broadcast %19 : vector<256x1xf32> to vector<256x256xf32>
      %21 = vector.broadcast %18 : vector<1x256xf32> to vector<256x256xf32>
      %22 = arith.addf %20, %21 : vector<256x256xf32>
      %cst = arith.constant 0.000000e+00 : f32
      %23 = vector.broadcast %cst : f32 to vector<256x256xf32>
      %24 = arith.cmpf oge, %22, %23 : vector<256x256xf32>
      %cst_9 = arith.constant 2.000000e-01 : f32
      %25 = vector.broadcast %cst_9 : f32 to vector<256x256xf32>
      %26 = arith.mulf %25, %22 : vector<256x256xf32>
      %27 = arith.select %24, %22, %26 : vector<256x256xi1>, vector<256x256xf32>
      %cst_10 = arith.constant -1.000000e+30 : f32
      %28 = vector.broadcast %cst_10 : f32 to vector<256x256xf32>
      %29 = arith.select %15, %27, %28 : vector<256x256xi1>, vector<256x256xf32>
      %c0_11 = arith.constant 0 : index
      %c0_12 = arith.constant 0 : index
      %30 = vector.load %arg12[%c0_11, %c0_12] : memref<256x1xf32, #tpu.memory_space<vmem>>, vector<256x1xf32>
      %cst_13 = arith.constant dense<0xFF800000> : vector<256xf32>
      %31 = vector.multi_reduction <maximumf>, %29, %cst_13 [1] : vector<256x256xf32> to vector<256xf32>
      %32 = vector.shape_cast %31 : vector<256xf32> to vector<256x1xf32>
      %33 = arith.maximumf %30, %32 : vector<256x1xf32>
      %34 = arith.subf %30, %33 : vector<256x1xf32>
      %35 = math.exp %34 : vector<256x1xf32>
      %36 = vector.broadcast %33 : vector<256x1xf32> to vector<256x256xf32>
      %37 = arith.subf %29, %36 : vector<256x256xf32>
      %38 = math.exp %37 : vector<256x256xf32>
      %cst_14 = arith.constant 0.000000e+00 : f32
      %39 = vector.broadcast %cst_14 : f32 to vector<256x256xf32>
      %40 = arith.select %15, %38, %39 : vector<256x256xi1>, vector<256x256xf32>
      %c0_15 = arith.constant 0 : index
      %c0_16 = arith.constant 0 : index
      %41 = vector.load %arg13[%c0_15, %c0_16] : memref<256x1xf32, #tpu.memory_space<vmem>>, vector<256x1xf32>
      %42 = arith.mulf %35, %41 : vector<256x1xf32>
      %cst_17 = arith.constant dense<0.000000e+00> : vector<256xf32>
      %43 = vector.multi_reduction <add>, %40, %cst_17 [1] : vector<256x256xf32> to vector<256xf32>
      %44 = vector.shape_cast %43 : vector<256xf32> to vector<256x1xf32>
      %45 = arith.addf %42, %44 : vector<256x1xf32>
      %c0_18 = arith.constant 0 : index
      %c0_19 = arith.constant 0 : index
      %46 = vector.load %arg13[%c0_18, %c0_19] : memref<256x1xf32, #tpu.memory_space<vmem>>, vector<256x1xf32>
      tpu.vector_store %arg13[%c0_18, %c0_19], %45 {strides = array<i32>} : memref<256x1xf32, #tpu.memory_space<vmem>>, vector<256x1xf32>,
      %47 = arith.index_cast %arg1 : i32 to index
      %c0_20 = arith.constant 0 : index
      %c0_21 = arith.constant 0 : index
      %48 = vector.load %arg6[%47, %c0_20, %c0_21] : memref<3x256x128xbf16, #tpu.memory_space<vmem>>, vector<1x256x128xbf16>
      %49 = vector.shape_cast %48 : vector<1x256x128xbf16> to vector<256x128xbf16>
      %c0_22 = arith.constant 0 : index
      %c0_23 = arith.constant 0 : index
      %50 = vector.load %arg10[%c0_22, %c0_23] : memref<256x128xf32, #tpu.memory_space<vmem>>, vector<256x128xf32>
      %51 = vector.broadcast %35 : vector<256x1xf32> to vector<256x128xf32>
      %52 = arith.mulf %51, %50 : vector<256x128xf32>
      %53 = arith.truncf %40 : vector<256x256xf32> to vector<256x256xbf16>
      %cst_24 = arith.constant dense<0.000000e+00> : vector<256x128xf32>
      %54 = tpu.matmul %53, %49, %cst_24 {dimension_numbers = #tpu.dot_dimension_numbers<[1], [0], [0], [1], [0, 0, 1, 1], [], []>} : vector<256x256xbf16>, vector<256x128xbf16>, vector<256x128xf32> -> vector<256x128xf32>
      %55 = arith.addf %52, %54 : vector<256x128xf32>
      %c0_25 = arith.constant 0 : index
      %c0_26 = arith.constant 0 : index
      %56 = vector.load %arg10[%c0_25, %c0_26] : memref<256x128xf32, #tpu.memory_space<vmem>>, vector<256x128xf32>
      tpu.vector_store %arg10[%c0_25, %c0_26], %55 {strides = array<i32>} : memref<256x128xf32, #tpu.memory_space<vmem>>, vector<256x128xf32>,
      %c0_27 = arith.constant 0 : index
      %c0_28 = arith.constant 0 : index
      %57 = vector.load %arg12[%c0_27, %c0_28] : memref<256x1xf32, #tpu.memory_space<vmem>>, vector<256x1xf32>
      tpu.vector_store %arg12[%c0_27, %c0_28], %33 {strides = array<i32>} : memref<256x1xf32, #tpu.memory_space<vmem>>, vector<256x1xf32>,
    } else {
    }
    %c2_i32 = arith.constant 2 : i32
    %10 = arith.cmpi eq, %arg1, %c2_i32 : i32
    %11 = arith.extui %10 : i1 to i32
    %c0_i32_3 = arith.constant 0 : i32
    %12 = arith.cmpi ne, %11, %c0_i32_3 : i32
    scf.if %12 {
      %c0 = arith.constant 0 : index
      %c0_4 = arith.constant 0 : index
      %13 = vector.load %arg13[%c0, %c0_4] : memref<256x1xf32, #tpu.memory_space<vmem>>, vector<256x1xf32>
      %14 = tpu.reciprocal %13 {approx = true} : vector<256x1xf32> -> vector<256x1xf32>
      %c0_5 = arith.constant 0 : index
      %c0_6 = arith.constant 0 : index
      %15 = vector.load %arg10[%c0_5, %c0_6] : memref<256x128xf32, #tpu.memory_space<vmem>>, vector<256x128xf32>
      %16 = vector.broadcast %14 : vector<256x1xf32> to vector<256x128xf32>
      %17 = arith.mulf %15, %16 : vector<256x128xf32>
      %c0_7 = arith.constant 0 : index
      %c0_8 = arith.constant 0 : index
      %18 = vector.load %arg7[%c0_7, %c0_8] : memref<1x128xf32, #tpu.memory_space<vmem>>, vector<1x128xf32>
      %19 = vector.broadcast %18 : vector<1x128xf32> to vector<256x128xf32>
      %20 = arith.addf %17, %19 : vector<256x128xf32>
      %cst = arith.constant 0.000000e+00 : f32
      %21 = vector.broadcast %cst : f32 to vector<256x128xf32>
      %22 = arith.maximumf %20, %21 : vector<256x128xf32>
      %c0_9 = arith.constant 0 : index
      %c0_10 = arith.constant 0 : index
      %23 = vector.load %arg10[%c0_9, %c0_10] : memref<256x128xf32, #tpu.memory_space<vmem>>, vector<256x128xf32>
      tpu.vector_store %arg10[%c0_9, %c0_10], %22 {strides = array<i32>} : memref<256x128xf32, #tpu.memory_space<vmem>>, vector<256x128xf32>,
      %24 = arith.truncf %22 : vector<256x128xf32> to vector<256x128xbf16>
      %c0_11 = arith.constant 0 : index
      %c0_12 = arith.constant 0 : index
      %25 = vector.load %arg8[%c0_11, %c0_12] : memref<128x128xbf16, #tpu.memory_space<vmem>>, vector<128x128xbf16>
      %cst_13 = arith.constant dense<0.000000e+00> : vector<256x128xf32>
      %26 = tpu.matmul %24, %25, %cst_13 {dimension_numbers = #tpu.dot_dimension_numbers<[1], [0], [0], [1], [0, 0, 1, 1], [], []>} : vector<256x128xbf16>, vector<128x128xbf16>, vector<256x128xf32> -> vector<256x128xf32>
      %c0_14 = arith.constant 0 : index
      %c0_15 = arith.constant 0 : index
      %27 = vector.load %arg9[%c0_14, %c0_15] : memref<1x128xf32, #tpu.memory_space<vmem>>, vector<1x128xf32>
      %28 = vector.broadcast %27 : vector<1x128xf32> to vector<256x128xf32>
      %29 = arith.addf %26, %28 : vector<256x128xf32>
      %c0_16 = arith.constant 0 : index
      %c0_17 = arith.constant 0 : index
      %30 = vector.load %arg11[%c0_16, %c0_17] : memref<256x128xf32, #tpu.memory_space<vmem>>, vector<256x128xf32>
      tpu.vector_store %arg11[%c0_16, %c0_17], %29 {strides = array<i32>} : memref<256x128xf32, #tpu.memory_space<vmem>>, vector<256x128xf32>,
    } else {
    }
    return
  }
  func.func @transform_0(%arg0: i32, %arg1: i32, %arg2: memref<9xi32, #tpu.memory_space<smem>>) -> (i32, i32) {
    %c0_i32 = arith.constant 0 : i32
    %c0_i32_0 = arith.constant 0 : i32
    return %arg0, %c0_i32 : i32, i32
  }
  func.func @transform_1(%arg0: i32, %arg1: i32, %arg2: memref<9xi32, #tpu.memory_space<smem>>) -> (i32, i32, i32) {
    %c0_i32 = arith.constant 0 : i32
    %c0_i32_0 = arith.constant 0 : i32
    %c0_i32_1 = arith.constant 0 : i32
    %c0_i32_2 = arith.constant 0 : i32
    return %c0_i32, %c0_i32_0, %c0_i32_1 : i32, i32, i32
  }
  func.func @transform_2(%arg0: i32, %arg1: i32, %arg2: memref<9xi32, #tpu.memory_space<smem>>) -> (i32, i32) {
    %c0_i32 = arith.constant 0 : i32
    return %arg0, %arg1 : i32, i32
  }
  func.func @transform_3(%arg0: i32, %arg1: i32, %arg2: memref<9xi32, #tpu.memory_space<smem>>) -> (i32, i32, i32) {
    %c0_i32 = arith.constant 0 : i32
    %c0_i32_0 = arith.constant 0 : i32
    %c0_i32_1 = arith.constant 0 : i32
    %c0_i32_2 = arith.constant 0 : i32
    return %c0_i32, %c0_i32_0, %c0_i32_1 : i32, i32, i32
  }
  func.func @transform_4(%arg0: i32, %arg1: i32, %arg2: memref<9xi32, #tpu.memory_space<smem>>) -> (i32, i32) {
    %c0_i32 = arith.constant 0 : i32
    %c0_i32_0 = arith.constant 0 : i32
    %c0_i32_1 = arith.constant 0 : i32
    return %c0_i32, %c0_i32_0 : i32, i32
  }
  func.func @transform_5(%arg0: i32, %arg1: i32, %arg2: memref<9xi32, #tpu.memory_space<smem>>) -> (i32, i32) {
    %c0_i32 = arith.constant 0 : i32
    %c0_i32_0 = arith.constant 0 : i32
    %c0_i32_1 = arith.constant 0 : i32
    return %c0_i32, %c0_i32_0 : i32, i32
  }
  func.func @transform_6(%arg0: i32, %arg1: i32, %arg2: memref<9xi32, #tpu.memory_space<smem>>) -> (i32, i32) {
    %c0_i32 = arith.constant 0 : i32
    %c0_i32_0 = arith.constant 0 : i32
    %c0_i32_1 = arith.constant 0 : i32
    return %c0_i32, %c0_i32_0 : i32, i32
  }
  func.func @transform_7(%arg0: i32, %arg1: i32, %arg2: memref<9xi32, #tpu.memory_space<smem>>) -> (i32, i32) {
    %c0_i32 = arith.constant 0 : i32
    %c0_i32_0 = arith.constant 0 : i32
    return %arg0, %c0_i32 : i32, i32
  }
  func.func @transform_8(%arg0: i32, %arg1: i32, %arg2: memref<9xi32, #tpu.memory_space<smem>>) -> (i32, i32) {
    %c0_i32 = arith.constant 0 : i32
    %c0_i32_0 = arith.constant 0 : i32
    return %arg0, %c0_i32 : i32, i32
  }
}

</mosaic_0001>

<llo_original>
// kernel: squeeze.0
$region0: #{squeeze.0}
  %s0 = inlined_call_operand.vmem [shape: f32[768], index: 0, kind: input, shape index: {}]
  %s1 = inlined_call_operand.vmem [shape: f32[3,1,256], index: 1, kind: output, shape index: {}]
  $region1: #{squeeze.0} parent=0
    #allocation0 [shape = 'u8[24576]{0}', space=vmem, size = 0x6000, scoped, tag = 'scoped mem for output reshape']
    %v2 = vld [vmem:[%s0] sm:$0x3f]
    %3 = vst [vmem:[#allocation0] ss:$8 sm:$0xf] %v2
    %4 = vst [vmem:[#allocation0] ss:$8 sm:$0x30] %v2
    %s6 = sshll.u32 1, 1
    %s7 = ssub.s32 %s6, 1
    %v9 = vld [vmem:[#allocation0] sm:%s7]
    %s10 = sshll.u32 1, 1
    %s11 = ssub.s32 %s10, 1
    %12 = vst [vmem:[%s1] sm:%s11] %v9
    %s13 = scalar_lea.vmem [#allocation0], 8
    %v14 = vld [vmem:[%s13] sm:%s7]
    %s15 = sshll.u32 1, 1
    %s16 = ssub.s32 %s15, 1
    %s17 = scalar_lea.vmem %s1, 1
    %18 = vst [vmem:[%s17] sm:%s16] %v14
    %s19 = scalar_lea.vmem [#allocation0], 16
    %v20 = vld [vmem:[%s19] sm:%s7]
    %s21 = sshll.u32 1, 1
    %s22 = ssub.s32 %s21, 1
    %s23 = smul.addr 1, 2
    %s24 = scalar_lea.vmem %s1, %s23
    %25 = vst [vmem:[%s24] sm:%s22] %v20
    %s26 = scalar_lea.vmem [#allocation0], 24
    %v27 = vld [vmem:[%s26] sm:%s7]
    %s28 = sshll.u32 1, 1
    %s29 = ssub.s32 %s28, 1
    %s30 = smul.addr 1, 3
    %s31 = scalar_lea.vmem %s1, %s30
    %32 = vst [vmem:[%s31] sm:%s29] %v27
    %s33 = scalar_lea.vmem [#allocation0], 32
    %v34 = vld [vmem:[%s33] sm:%s7]
    %s35 = sshll.u32 1, 1
    %s36 = ssub.s32 %s35, 1
    %s37 = smul.addr 1, 4
    %s38 = scalar_lea.vmem %s1, %s37
    %39 = vst [vmem:[%s38] sm:%s36] %v34
    %s40 = scalar_lea.vmem [#allocation0], 40
    %v41 = vld [vmem:[%s40] sm:%s7]
    %s42 = sshll.u32 1, 1
    %s43 = ssub.s32 %s42, 1
    %s44 = smul.addr 1, 5
    %s45 = scalar_lea.vmem %s1, %s44
    %46 = vst [vmem:[%s45] sm:%s43] %v41

// kernel: gat_forward.2
$region0: #{gat_forward.2}
  #allocation0 [shape = 'u32[]', space=smem, size = 0x4, offset = 0x4, fixed_abs, tag = 'smem constant byte address 0x4 - core index']
  #allocation1 [shape = 'u32[144,128]{1,0:T(1,128)}', space=vmem, size = 0x12000, scoped, tag = 'internal scratch']
  %s0 = inlined_call_operand.vmem [shape: bf16[768,128], index: 0, kind: input, shape index: {}]
  %s1 = inlined_call_operand.vmem [shape: bf16[128,128], index: 1, kind: input, shape index: {}]
  %s2 = inlined_call_operand.vmem [shape: bf16[128,128], index: 2, kind: input, shape index: {}]
  %s3 = inlined_call_operand.vmem [shape: bf16[768,128], index: 3, kind: output, shape index: {0}]
  %s4 = inlined_call_operand.vmem [shape: f32[768,128], index: 4, kind: output, shape index: {1}]
  %5 = xla_tuple %s3, %s4
  %s6 = sld [smem:[#allocation0]]
  $region53: #{gat_forward.2} parent=0
    _
  %s8 = ssub.s32 1, %s6
  %s9 = scalar_select 0, %s8, %s6
  loop: start=0, step=1, limit=5
  $region2: #{gat_forward.2} parent=0 // loop_pre_header
    _
  $region3: #{gat_forward.2} parent=0 // loop_header
    %s11 = sphi 0, %s15
    %p12 = scmp.ge.s32.totalorder %s11, 5
    %s21 = sphi 0, %s23
    %s24 = sphi 0, %s21
    %s25 = sphi 0, %s24
    %s41 = sphi 0, %s25
    %s45 = sphi 0, %s45
    %s47 = sphi 0, %s45
    %s48 = sphi 0, %s47
    %s62 = sphi 0, %s48
    %s66 = sphi 0, %s66
    %s68 = sphi 0, %s66
    %s69 = sphi 0, %s68
    %s83 = sphi 0, %s69
    %s89 = sphi 0, %s91
    %s92 = sphi 0, %s89
    %s93 = sphi 0, %s92
    %s109 = sphi 0, %s93
    %s115 = sphi 0, %s117
    %s118 = sphi 0, %s115
    %s119 = sphi 0, %s118
    %s135 = sphi 0, %s119
  $region4: #{gat_forward.2} parent=0 // loop_header_branch
    %14 = sbr.rel (%p12) target = $region8
  $region5: #{gat_forward.2} parent=0 // loop_body
    %s16 = ssub.s32 %s11, 1
    %s17 = ssub.s32 %s11, 2
    %s18 = sadd.s32 %s11, 1
    %s19 = ssub.s32 %s11, %s18
    %p20 = scmp.eq.s32.totalorder %s19, 0
    %s22 = sadd.s32 %s21, 1
    %s23 = scalar_select %p20, %s21, %s22
    %p26 = pneg %p20
    %p27 = scmp.eq.s32.totalorder %s11, 2
    %p28 = por %p26, %p27
    %p29 = scmp.ne.s32.totalorder %s21, %s24
    %p30 = scmp.eq.s32.totalorder %s11, 0
    %p31 = por %p29, %p30
    %p32 = scmp.ne.s32.totalorder %s21, %s24
    %p33 = scmp.eq.s32.totalorder %s16, 2
    %p34 = por %p32, %p33
    %p35 = scmp.ne.s32.totalorder %s24, %s25
    %p36 = scmp.eq.s32.totalorder %s16, 0
    %p37 = por %p35, %p36
    %p38 = scmp.ne.s32.totalorder %s24, %s25
    %p39 = scmp.eq.s32.totalorder %s17, 2
    %p40 = por %p38, %p39
    %p42 = scmp.ne.s32.totalorder %s25, %s41
    %p43 = scmp.eq.s32.totalorder %s17, 0
    %p44 = por %p42, %p43
    %s46 = sadd.s32 %s45, 1
    %p49 = scmp.eq.s32.totalorder %s11, 2
    %p50 = scmp.ne.s32.totalorder %s45, %s47
    %p51 = scmp.eq.s32.totalorder %s11, 0
    %p52 = por %p50, %p51
    %p53 = scmp.ne.s32.totalorder %s45, %s47
    %p54 = scmp.eq.s32.totalorder %s16, 2
    %p55 = por %p53, %p54
    %p56 = scmp.ne.s32.totalorder %s47, %s48
    %p57 = scmp.eq.s32.totalorder %s16, 0
    %p58 = por %p56, %p57
    %p59 = scmp.ne.s32.totalorder %s47, %s48
    %p60 = scmp.eq.s32.totalorder %s17, 2
    %p61 = por %p59, %p60
    %p63 = scmp.ne.s32.totalorder %s48, %s62
    %p64 = scmp.eq.s32.totalorder %s17, 0
    %p65 = por %p63, %p64
    %s67 = sadd.s32 %s66, 1
    %p70 = scmp.eq.s32.totalorder %s11, 2
    %p71 = scmp.ne.s32.totalorder %s66, %s68
    %p72 = scmp.eq.s32.totalorder %s11, 0
    %p73 = por %p71, %p72
    %p74 = scmp.ne.s32.totalorder %s66, %s68
    %p75 = scmp.eq.s32.totalorder %s16, 2
    %p76 = por %p74, %p75
    %p77 = scmp.ne.s32.totalorder %s68, %s69
    %p78 = scmp.eq.s32.totalorder %s16, 0
    %p79 = por %p77, %p78
    %p80 = scmp.ne.s32.totalorder %s68, %s69
    %p81 = scmp.eq.s32.totalorder %s17, 2
    %p82 = por %p80, %p81
    %p84 = scmp.ne.s32.totalorder %s69, %s83
    %p85 = scmp.eq.s32.totalorder %s17, 0
    %p86 = por %p84, %p85
    %s87 = ssub.s32 %s11, %s18
    %p88 = scmp.eq.s32.totalorder %s87, 0
    %s90 = sadd.s32 %s89, 1
    %s91 = scalar_select %p88, %s89, %s90
    %p94 = pneg %p88
    %p95 = scmp.eq.s32.totalorder %s11, 2
    %p96 = por %p94, %p95
    %p97 = scmp.ne.s32.totalorder %s89, %s92
    %p98 = scmp.eq.s32.totalorder %s11, 0
    %p99 = por %p97, %p98
    %p100 = scmp.ne.s32.totalorder %s89, %s92
    %p101 = scmp.eq.s32.totalorder %s16, 2
    %p102 = por %p100, %p101
    %p103 = scmp.ne.s32.totalorder %s92, %s93
    %p104 = scmp.eq.s32.totalorder %s16, 0
    %p105 = por %p103, %p104
    %p106 = scmp.ne.s32.totalorder %s92, %s93
    %p107 = scmp.eq.s32.totalorder %s17, 2
    %p108 = por %p106, %p107
    %p110 = scmp.ne.s32.totalorder %s93, %s109
    %p111 = scmp.eq.s32.totalorder %s17, 0
    %p112 = por %p110, %p111
    %s113 = ssub.s32 %s11, %s18
    %p114 = scmp.eq.s32.totalorder %s113, 0
    %s116 = sadd.s32 %s115, 1
    %s117 = scalar_select %p114, %s115, %s116
    %p120 = pneg %p114
    %p121 = scmp.eq.s32.totalorder %s11, 2
    %p122 = por %p120, %p121
    %p123 = scmp.ne.s32.totalorder %s115, %s118
    %p124 = scmp.eq.s32.totalorder %s11, 0
    %p125 = por %p123, %p124
    %p126 = scmp.ne.s32.totalorder %s115, %s118
    %p127 = scmp.eq.s32.totalorder %s16, 2
    %p128 = por %p126, %p127
    %p129 = scmp.ne.s32.totalorder %s118, %s119
    %p130 = scmp.eq.s32.totalorder %s16, 0
    %p131 = por %p129, %p130
    %p132 = scmp.ne.s32.totalorder %s118, %s119
    %p133 = scmp.eq.s32.totalorder %s17, 2
    %p134 = por %p132, %p133
    %p136 = scmp.ne.s32.totalorder %s119, %s135
    %p137 = scmp.eq.s32.totalorder %s17, 0
    %p138 = por %p136, %p137
    %p139 = scmp.le.s32.totalorder 1, %s11
    %p140 = scmp.lt.s32.totalorder %s11, 4
    %p141 = pnand %p139, %p140
    %p142 = pneg %p141
    // Predicated region
    $region9: #{gat_forward.2} parent=5 // pred_check
      _
    $region10: #{gat_forward.2} parent=5 // pred_check_branch
      %144 = sbr.rel (%p141) target = $region12
    $region11: #{gat_forward.2} parent=5 // pred_region
      %s145 = ssub.s32 %s11, 1
      // Predicated region
      $region13: #{gat_forward.2} parent=11 // pred_check
        %p146 = pneg %p58
      $region14: #{gat_forward.2} parent=11 // pred_check_branch
        %148 = sbr.rel (%p146) target = $region16
      $region15: #{gat_forward.2} parent=11 // pred_region
        _
      $region16: #{gat_forward.2} parent=11 // pred_fallthru
        _
      // Predicated region
      $region17: #{gat_forward.2} parent=11 // pred_check
        %p149 = pneg %p79
      $region18: #{gat_forward.2} parent=11 // pred_check_branch
        %151 = sbr.rel (%p149) target = $region20
      $region19: #{gat_forward.2} parent=11 // pred_region
        _
      $region20: #{gat_forward.2} parent=11 // pred_fallthru
        _
    $region12: #{gat_forward.2} parent=5 // pred_fallthru
      _
    %p152 = scmp.lt.s32.totalorder %s11, 3
    // Predicated region
    $region21: #{gat_forward.2} parent=5 // pred_check
      %p153 = pneg %p152
    $region22: #{gat_forward.2} parent=5 // pred_check_branch
      %155 = sbr.rel (%p153) target = $region24
    $region23: #{gat_forward.2} parent=5 // pred_region
      // Predicated region
      $region25: #{gat_forward.2} parent=23 // pred_check
        %p156 = pneg %p31
      $region26: #{gat_forward.2} parent=23 // pred_check_branch
        %158 = sbr.rel (%p156) target = $region28
      $region27: #{gat_forward.2} parent=23 // pred_region
        %s159 = smul.u32 32, %s11
        %p160 = scmp.lt.s32.totalorder %s159, 95
        %s161 = scalar_select %p160, %s159, 95
        %s162 = smul.addr %s161, 4
        %s163 = scalar_lea.vmem %s0, %s162
        %s164 = smul.u32 32, %s11
      $region28: #{gat_forward.2} parent=23 // pred_fallthru
        _
    $region24: #{gat_forward.2} parent=5 // pred_fallthru
      _
    %p165 = scmp.le.s32.totalorder 1, %s11
    %p166 = scmp.lt.s32.totalorder %s11, 4
    %p167 = pnand %p165, %p166
    %p168 = pneg %p167
    // Predicated region
    $region29: #{gat_forward.2} parent=5 // pred_check
      _
    $region30: #{gat_forward.2} parent=5 // pred_check_branch
      %170 = sbr.rel (%p167) target = $region32
    $region31: #{gat_forward.2} parent=5 // pred_region
      %s171 = ssub.s32 %s11, 1
      %s172 = smul.u32 32, %s16
      %p173 = scmp.lt.s32.totalorder %s172, 95
      %s174 = scalar_select %p173, %s172, 95
      %s175 = smul.addr %s174, 4
      %s176 = scalar_lea.vmem %s0, %s175
      %p177 = pneg %p37
      %p178 = pneg %p34
      %p179 = pneg %p58
      %p180 = pneg %p55
      %p181 = pneg %p79
      %p182 = pneg %p76
      %p183 = pneg %p105
      %p184 = pneg %p102
      %s185 = smul.u32 32, %s16
      %p186 = scmp.lt.s32.totalorder %s185, 95
      %s187 = scalar_select %p186, %s185, 95
      %s188 = smul.addr %s187, 4
      %s189 = scalar_lea.vmem %s3, %s188
      %p190 = pneg %p131
      %p191 = pneg %p128
      %s192 = smul.u32 32, %s16
      %p193 = scmp.lt.s32.totalorder %s192, 95
      %s194 = scalar_select %p193, %s192, 95
      %s195 = smul.addr %s194, 8
      %s196 = scalar_lea.vmem %s4, %s195
      %s197 = smul.u32 32, %s16
      %p198 = scmp.lt.s32.totalorder %s197, 95
      %s199 = scalar_select %p198, %s197, 95
      %s200 = smul.addr %s199, 4
      %s201 = scalar_lea.vmem %s0, %s200
      %s202 = smul.u32 32, %s16
      %s203 = smul.u32 32, %s16
      %p204 = scmp.lt.s32.totalorder %s203, 95
      %s205 = scalar_select %p204, %s203, 95
      %s206 = smul.addr %s205, 4
      %s207 = scalar_lea.vmem %s3, %s206
      %s208 = smul.u32 32, %s16
      %s209 = smul.u32 32, %s16
      %p210 = scmp.lt.s32.totalorder %s209, 95
      %s211 = scalar_select %p210, %s209, 95
      %s212 = smul.addr %s211, 8
      %s213 = scalar_lea.vmem %s4, %s212
      %s214 = smul.u32 32, %s16
      %v216 = vld [vmem:[%s201] sm:$0xf]
      %v217 = vld [vmem:[%s201 + $0x4] sm:$0xf]
      %v218 = vld [vmem:[%s201 + $0x8] sm:$0xf]
      %v219 = vld [vmem:[%s201 + $0xc] sm:$0xf]
      %v220 = vld [vmem:[%s201 + $0x10] sm:$0xf]
      %v221 = vld [vmem:[%s201 + $0x14] sm:$0xf]
      %v222 = vld [vmem:[%s201 + $0x18] sm:$0xf]
      %v223 = vld [vmem:[%s201 + $0x1c] sm:$0xf]
      %v224 = vld [vmem:[%s201 + $0x20] sm:$0xf]
      %v225 = vld [vmem:[%s201 + $0x24] sm:$0xf]
      %v226 = vld [vmem:[%s201 + $0x28] sm:$0xf]
      %v227 = vld [vmem:[%s201 + $0x2c] sm:$0xf]
      %v228 = vld [vmem:[%s201 + $0x30] sm:$0xf]
      %v229 = vld [vmem:[%s201 + $0x34] sm:$0xf]
      %v230 = vld [vmem:[%s201 + $0x38] sm:$0xf]
      %v231 = vld [vmem:[%s201 + $0x3c] sm:$0xf]
      %v232 = vld [vmem:[%s201 + $0x40] sm:$0xf]
      %v233 = vld [vmem:[%s201 + $0x44] sm:$0xf]
      %v234 = vld [vmem:[%s201 + $0x48] sm:$0xf]
      %v235 = vld [vmem:[%s201 + $0x4c] sm:$0xf]
      %v236 = vld [vmem:[%s201 + $0x50] sm:$0xf]
      %v237 = vld [vmem:[%s201 + $0x54] sm:$0xf]
      %v238 = vld [vmem:[%s201 + $0x58] sm:$0xf]
      %v239 = vld [vmem:[%s201 + $0x5c] sm:$0xf]
      %v240 = vld [vmem:[%s201 + $0x60] sm:$0xf]
      %v241 = vld [vmem:[%s201 + $0x64] sm:$0xf]
      %v242 = vld [vmem:[%s201 + $0x68] sm:$0xf]
      %v243 = vld [vmem:[%s201 + $0x6c] sm:$0xf]
      %v244 = vld [vmem:[%s201 + $0x70] sm:$0xf]
      %v245 = vld [vmem:[%s201 + $0x74] sm:$0xf]
      %v246 = vld [vmem:[%s201 + $0x78] sm:$0xf]
      %v247 = vld [vmem:[%s201 + $0x7c] sm:$0xf]
      %v248 = vld [vmem:[%s1] sm:$0xf]
      %v249 = vld [vmem:[%s1 + $0x4] sm:$0xf]
      %v250 = vld [vmem:[%s1 + $0x8] sm:$0xf]
      %v251 = vld [vmem:[%s1 + $0xc] sm:$0xf]
      %v252 = vld [vmem:[%s1 + $0x10] sm:$0xf]
      %v253 = vld [vmem:[%s1 + $0x14] sm:$0xf]
      %v254 = vld [vmem:[%s1 + $0x18] sm:$0xf]
      %v255 = vld [vmem:[%s1 + $0x1c] sm:$0xf]
      %v256 = vld [vmem:[%s1 + $0x20] sm:$0xf]
      %v257 = vld [vmem:[%s1 + $0x24] sm:$0xf]
      %v258 = vld [vmem:[%s1 + $0x28] sm:$0xf]
      %v259 = vld [vmem:[%s1 + $0x2c] sm:$0xf]
      %v260 = vld [vmem:[%s1 + $0x30] sm:$0xf]
      %v261 = vld [vmem:[%s1 + $0x34] sm:$0xf]
      %v262 = vld [vmem:[%s1 + $0x38] sm:$0xf]
      %v263 = vld [vmem:[%s1 + $0x3c] sm:$0xf]
      %v296 = vunpack.c.l.b16 %v216
      %v297 = vunpack.c.l.b16 %v217
      %v298 = vunpack.c.l.b16 %v218
      %v299 = vunpack.c.l.b16 %v219
      %v300 = vunpack.c.l.b16 %v220
      %v301 = vunpack.c.l.b16 %v221
      %v302 = vunpack.c.l.b16 %v222
      %v303 = vunpack.c.l.b16 %v223
      %v304 = vunpack.c.l.b16 %v224
      %v305 = vunpack.c.l.b16 %v225
      %v306 = vunpack.c.l.b16 %v226
      %v307 = vunpack.c.l.b16 %v227
      %v308 = vunpack.c.l.b16 %v228
      %v309 = vunpack.c.l.b16 %v229
      %v310 = vunpack.c.l.b16 %v230
      %v311 = vunpack.c.l.b16 %v231
      %v312 = vunpack.c.l.b16 %v232
      %v313 = vunpack.c.l.b16 %v233
      %v314 = vunpack.c.l.b16 %v234
      %v315 = vunpack.c.l.b16 %v235
      %v316 = vunpack.c.l.b16 %v236
      %v317 = vunpack.c.l.b16 %v237
      %v318 = vunpack.c.l.b16 %v238
      %v319 = vunpack.c.l.b16 %v239
      %v320 = vunpack.c.l.b16 %v240
      %v321 = vunpack.c.l.b16 %v241
      %v322 = vunpack.c.l.b16 %v242
      %v323 = vunpack.c.l.b16 %v243
      %v324 = vunpack.c.l.b16 %v244
      %v325 = vunpack.c.l.b16 %v245
      %v326 = vunpack.c.l.b16 %v246
      %v327 = vunpack.c.l.b16 %v247
      %v328 = vpack.c.b16 %v297, %v296
      %v329 = vpack.c.b16 %v299, %v298
      %v330 = vpack.c.b16 %v301, %v300
      %v331 = vpack.c.b16 %v303, %v302
      %v332 = vpack.c.b16 %v305, %v304
      %v333 = vpack.c.b16 %v307, %v306
      %v334 = vpack.c.b16 %v309, %v308
      %v335 = vpack.c.b16 %v311, %v310
      %v336 = vpack.c.b16 %v313, %v312
      %v337 = vpack.c.b16 %v315, %v314
      %v338 = vpack.c.b16 %v317, %v316
      %v339 = vpack.c.b16 %v319, %v318
      %v340 = vpack.c.b16 %v321, %v320
      %v341 = vpack.c.b16 %v323, %v322
      %v342 = vpack.c.b16 %v325, %v324
      %v343 = vpack.c.b16 %v327, %v326
      %v376 = vunpack.c.l.b16 %v248
      %v377 = vunpack.c.l.b16 %v249
      %v378 = vunpack.c.l.b16 %v250
      %v379 = vunpack.c.l.b16 %v251
      %v380 = vunpack.c.l.b16 %v252
      %v381 = vunpack.c.l.b16 %v253
      %v382 = vunpack.c.l.b16 %v254
      %v383 = vunpack.c.l.b16 %v255
      %v384 = vunpack.c.l.b16 %v256
      %v385 = vunpack.c.l.b16 %v257
      %v386 = vunpack.c.l.b16 %v258
      %v387 = vunpack.c.l.b16 %v259
      %v388 = vunpack.c.l.b16 %v260
      %v389 = vunpack.c.l.b16 %v261
      %v390 = vunpack.c.l.b16 %v262
      %v391 = vunpack.c.l.b16 %v263
      %v392 = vpack.c.b16 %v377, %v376
      %v393 = vpack.c.b16 %v379, %v378
      %v394 = vpack.c.b16 %v381, %v380
      %v395 = vpack.c.b16 %v383, %v382
      %v396 = vpack.c.b16 %v385, %v384
      %v397 = vpack.c.b16 %v387, %v386
      %v398 = vpack.c.b16 %v389, %v388
      %v399 = vpack.c.b16 %v391, %v390
      %408 = vmatprep.subr.bf16.mxu0 0
      %409 = vmatpush1.bf16.msra.mxu0 %v399
      %410 = vmatprep.subr.bf16.mxu0 0
      %411 = vmatpush1.bf16.msra.mxu0 %v398
      %412 = vmatprep.subr.bf16.mxu0 0
      %413 = vmatpush1.bf16.msra.mxu0 %v397
      %414 = vmatprep.subr.bf16.mxu0 0
      %415 = vmatpush1.bf16.msra.mxu0 %v396
      %416 = vmatprep.subr.bf16.mxu0 0
      %417 = vmatpush1.bf16.msra.mxu0 %v395
      %418 = vmatprep.subr.bf16.mxu0 0
      %419 = vmatpush1.bf16.msra.mxu0 %v394
      %420 = vmatprep.subr.bf16.mxu0 0
      %421 = vmatpush1.bf16.msra.mxu0 %v393
      %422 = vmatprep.subr.bf16.mxu0 0
      %423 = vmatpush1.bf16.msra.mxu0 %v392
      %424 = vmatprep.subr.bf16.mxu0 0
      %425 = vmatpush2.bf16.msra.mxu0 0
      %426 = vmatprep.subr.bf16.mxu0 0
      %427 = vmatpush2.bf16.msra.mxu0 0
      %428 = vmatprep.subr.bf16.mxu0 0
      %429 = vmatpush2.bf16.msra.mxu0 0
      %430 = vmatprep.subr.bf16.mxu0 0
      %431 = vmatpush2.bf16.msra.mxu0 0
      %432 = vmatprep.subr.bf16.mxu0 0
      %433 = vmatpush2.bf16.msra.mxu0 0
      %434 = vmatprep.subr.bf16.mxu0 0
      %435 = vmatpush2.bf16.msra.mxu0 0
      %436 = vmatprep.subr.bf16.mxu0 0
      %437 = vmatpush2.bf16.msra.mxu0 0
      %438 = vmatprep.subr.bf16.mxu0 0
      %439 = vmatpush2.bf16.msra.mxu0 0
      %440 = vmatprep.mubr.bf16.mxu0 0
      %441 = vmatmul.mubr.bf16.gmra.mxu0 %v328
      %v442 = vpop.f32.mrf.mxu0
      %v443 = vadd.f32 0.0, %v442
      %v444 = vpop.f32.mrf.mxu0
      %v445 = vpop.f32.mrf.mxu0
      %v446 = vadd.f32 0.0, %v445
      %v447 = vpop.f32.mrf.mxu0
      %448 = vmatprep.mubr.bf16.mxu0 0
      %449 = vmatmul.mubr.bf16.gmra.mxu0 %v329
      %v450 = vpop.f32.mrf.mxu0
      %v451 = vadd.f32 0.0, %v450
      %v452 = vpop.f32.mrf.mxu0
      %v453 = vpop.f32.mrf.mxu0
      %v454 = vadd.f32 0.0, %v453
      %v455 = vpop.f32.mrf.mxu0
      %456 = vmatprep.mubr.bf16.mxu0 0
      %457 = vmatmul.mubr.bf16.gmra.mxu0 %v330
      %v458 = vpop.f32.mrf.mxu0
      %v459 = vadd.f32 0.0, %v458
      %v460 = vpop.f32.mrf.mxu0
      %v461 = vpop.f32.mrf.mxu0
      %v462 = vadd.f32 0.0, %v461
      %v463 = vpop.f32.mrf.mxu0
      %464 = vmatprep.mubr.bf16.mxu0 0
      %465 = vmatmul.mubr.bf16.gmra.mxu0 %v331
      %v466 = vpop.f32.mrf.mxu0
      %v467 = vadd.f32 0.0, %v466
      %v468 = vpop.f32.mrf.mxu0
      %v469 = vpop.f32.mrf.mxu0
      %v470 = vadd.f32 0.0, %v469
      %v471 = vpop.f32.mrf.mxu0
      %472 = vmatprep.mubr.bf16.mxu0 0
      %473 = vmatmul.mubr.bf16.gmra.mxu0 %v332
      %v474 = vpop.f32.mrf.mxu0
      %v475 = vadd.f32 0.0, %v474
      %v476 = vpop.f32.mrf.mxu0
      %v477 = vpop.f32.mrf.mxu0
      %v478 = vadd.f32 0.0, %v477
      %v479 = vpop.f32.mrf.mxu0
      %480 = vmatprep.mubr.bf16.mxu0 0
      %481 = vmatmul.mubr.bf16.gmra.mxu0 %v333
      %v482 = vpop.f32.mrf.mxu0
      %v483 = vadd.f32 0.0, %v482
      %v484 = vpop.f32.mrf.mxu0
      %v485 = vpop.f32.mrf.mxu0
      %v486 = vadd.f32 0.0, %v485
      %v487 = vpop.f32.mrf.mxu0
      %488 = vmatprep.mubr.bf16.mxu0 0
      %489 = vmatmul.mubr.bf16.gmra.mxu0 %v334
      %v490 = vpop.f32.mrf.mxu0
      %v491 = vadd.f32 0.0, %v490
      %v492 = vpop.f32.mrf.mxu0
      %v493 = vpop.f32.mrf.mxu0
      %v494 = vadd.f32 0.0, %v493
      %v495 = vpop.f32.mrf.mxu0
      %496 = vmatprep.mubr.bf16.mxu0 0
      %497 = vmatmul.mubr.bf16.gmra.mxu0 %v335
      %v498 = vpop.f32.mrf.mxu0
      %v499 = vadd.f32 0.0, %v498
      %v500 = vpop.f32.mrf.mxu0
      %v501 = vpop.f32.mrf.mxu0
      %v502 = vadd.f32 0.0, %v501
      %v503 = vpop.f32.mrf.mxu0
      %504 = vmatprep.mubr.bf16.mxu0 0
      %505 = vmatmul.mubr.bf16.gmra.mxu0 %v336
      %v506 = vpop.f32.mrf.mxu0
      %v507 = vadd.f32 0.0, %v506
      %v508 = vpop.f32.mrf.mxu0
      %v509 = vpop.f32.mrf.mxu0
      %v510 = vadd.f32 0.0, %v509
      %v511 = vpop.f32.mrf.mxu0
      %512 = vmatprep.mubr.bf16.mxu0 0
      %513 = vmatmul.mubr.bf16.gmra.mxu0 %v337
      %v514 = vpop.f32.mrf.mxu0
      %v515 = vadd.f32 0.0, %v514
      %v516 = vpop.f32.mrf.mxu0
      %v517 = vpop.f32.mrf.mxu0
      %v518 = vadd.f32 0.0, %v517
      %v519 = vpop.f32.mrf.mxu0
      %520 = vmatprep.mubr.bf16.mxu0 0
      %521 = vmatmul.mubr.bf16.gmra.mxu0 %v338
      %v522 = vpop.f32.mrf.mxu0
      %v523 = vadd.f32 0.0, %v522
      %v524 = vpop.f32.mrf.mxu0
      %v525 = vpop.f32.mrf.mxu0
      %v526 = vadd.f32 0.0, %v525
      %v527 = vpop.f32.mrf.mxu0
      %528 = vmatprep.mubr.bf16.mxu0 0
      %529 = vmatmul.mubr.bf16.gmra.mxu0 %v339
      %v530 = vpop.f32.mrf.mxu0
      %v531 = vadd.f32 0.0, %v530
      %v532 = vpop.f32.mrf.mxu0
      %v533 = vpop.f32.mrf.mxu0
      %v534 = vadd.f32 0.0, %v533
      %v535 = vpop.f32.mrf.mxu0
      %536 = vmatprep.mubr.bf16.mxu0 0
      %537 = vmatmul.mubr.bf16.gmra.mxu0 %v340
      %v538 = vpop.f32.mrf.mxu0
      %v539 = vadd.f32 0.0, %v538
      %v540 = vpop.f32.mrf.mxu0
      %v541 = vpop.f32.mrf.mxu0
      %v542 = vadd.f32 0.0, %v541
      %v543 = vpop.f32.mrf.mxu0
      %544 = vmatprep.mubr.bf16.mxu0 0
      %545 = vmatmul.mubr.bf16.gmra.mxu0 %v341
      %v546 = vpop.f32.mrf.mxu0
      %v547 = vadd.f32 0.0, %v546
      %v548 = vpop.f32.mrf.mxu0
      %v549 = vpop.f32.mrf.mxu0
      %v550 = vadd.f32 0.0, %v549
      %v551 = vpop.f32.mrf.mxu0
      %552 = vmatprep.mubr.bf16.mxu0 0
      %553 = vmatmul.mubr.bf16.gmra.mxu0 %v342
      %v554 = vpop.f32.mrf.mxu0
      %v555 = vadd.f32 0.0, %v554
      %v556 = vpop.f32.mrf.mxu0
      %v557 = vpop.f32.mrf.mxu0
      %v558 = vadd.f32 0.0, %v557
      %v559 = vpop.f32.mrf.mxu0
      %560 = vmatprep.mubr.bf16.mxu0 0
      %561 = vmatmul.mubr.bf16.gmra.mxu0 %v343
      %v562 = vpop.f32.mrf.mxu0
      %v563 = vadd.f32 0.0, %v562
      %v564 = vpop.f32.mrf.mxu0
      %v565 = vpop.f32.mrf.mxu0
      %v566 = vadd.f32 0.0, %v565
      %v567 = vpop.f32.mrf.mxu0
      %568 = vdwg.mxu0
      %v569 = vpack.c.bf16 %v446, %v443
      %v570 = vpack.c.bf16 %v454, %v451
      %v571 = vpack.c.bf16 %v462, %v459
      %v572 = vpack.c.bf16 %v470, %v467
      %v573 = vpack.c.bf16 %v478, %v475
      %v574 = vpack.c.bf16 %v486, %v483
      %v575 = vpack.c.bf16 %v494, %v491
      %v576 = vpack.c.bf16 %v502, %v499
      %v577 = vpack.c.bf16 %v510, %v507
      %v578 = vpack.c.bf16 %v518, %v515
      %v579 = vpack.c.bf16 %v526, %v523
      %v580 = vpack.c.bf16 %v534, %v531
      %v581 = vpack.c.bf16 %v542, %v539
      %v582 = vpack.c.bf16 %v550, %v547
      %v583 = vpack.c.bf16 %v558, %v555
      %v584 = vpack.c.bf16 %v566, %v563
      %v585 = vld [vmem:[%s2] sm:$0xf]
      %v586 = vld [vmem:[%s2 + $0x4] sm:$0xf]
      %v587 = vld [vmem:[%s2 + $0x8] sm:$0xf]
      %v588 = vld [vmem:[%s2 + $0xc] sm:$0xf]
      %v589 = vld [vmem:[%s2 + $0x10] sm:$0xf]
      %v590 = vld [vmem:[%s2 + $0x14] sm:$0xf]
      %v591 = vld [vmem:[%s2 + $0x18] sm:$0xf]
      %v592 = vld [vmem:[%s2 + $0x1c] sm:$0xf]
      %v593 = vld [vmem:[%s2 + $0x20] sm:$0xf]
      %v594 = vld [vmem:[%s2 + $0x24] sm:$0xf]
      %v595 = vld [vmem:[%s2 + $0x28] sm:$0xf]
      %v596 = vld [vmem:[%s2 + $0x2c] sm:$0xf]
      %v597 = vld [vmem:[%s2 + $0x30] sm:$0xf]
      %v598 = vld [vmem:[%s2 + $0x34] sm:$0xf]
      %v599 = vld [vmem:[%s2 + $0x38] sm:$0xf]
      %v600 = vld [vmem:[%s2 + $0x3c] sm:$0xf]
      %v617 = vunpack.c.l.b16 %v585
      %v618 = vunpack.c.l.b16 %v586
      %v619 = vunpack.c.l.b16 %v587
      %v620 = vunpack.c.l.b16 %v588
      %v621 = vunpack.c.l.b16 %v589
      %v622 = vunpack.c.l.b16 %v590
      %v623 = vunpack.c.l.b16 %v591
      %v624 = vunpack.c.l.b16 %v592
      %v625 = vunpack.c.l.b16 %v593
      %v626 = vunpack.c.l.b16 %v594
      %v627 = vunpack.c.l.b16 %v595
      %v628 = vunpack.c.l.b16 %v596
      %v629 = vunpack.c.l.b16 %v597
      %v630 = vunpack.c.l.b16 %v598
      %v631 = vunpack.c.l.b16 %v599
      %v632 = vunpack.c.l.b16 %v600
      %v633 = vpack.c.b16 %v618, %v617
      %v634 = vpack.c.b16 %v620, %v619
      %v635 = vpack.c.b16 %v622, %v621
      %v636 = vpack.c.b16 %v624, %v623
      %v637 = vpack.c.b16 %v626, %v625
      %v638 = vpack.c.b16 %v628, %v627
      %v639 = vpack.c.b16 %v630, %v629
      %v640 = vpack.c.b16 %v632, %v631
      %649 = vmatprep.subr.bf16.mxu0 0
      %650 = vmatpush1.bf16.msra.mxu0 %v640
      %651 = vmatprep.subr.bf16.mxu0 0
      %652 = vmatpush1.bf16.msra.mxu0 %v639
      %653 = vmatprep.subr.bf16.mxu0 0
      %654 = vmatpush1.bf16.msra.mxu0 %v638
      %655 = vmatprep.subr.bf16.mxu0 0
      %656 = vmatpush1.bf16.msra.mxu0 %v637
      %657 = vmatprep.subr.bf16.mxu0 0
      %658 = vmatpush1.bf16.msra.mxu0 %v636
      %659 = vmatprep.subr.bf16.mxu0 0
      %660 = vmatpush1.bf16.msra.mxu0 %v635
      %661 = vmatprep.subr.bf16.mxu0 0
      %662 = vmatpush1.bf16.msra.mxu0 %v634
      %663 = vmatprep.subr.bf16.mxu0 0
      %664 = vmatpush1.bf16.msra.mxu0 %v633
      %665 = vmatprep.subr.bf16.mxu0 0
      %666 = vmatpush2.bf16.msra.mxu0 0
      %667 = vmatprep.subr.bf16.mxu0 0
      %668 = vmatpush2.bf16.msra.mxu0 0
      %669 = vmatprep.subr.bf16.mxu0 0
      %670 = vmatpush2.bf16.msra.mxu0 0
      %671 = vmatprep.subr.bf16.mxu0 0
      %672 = vmatpush2.bf16.msra.mxu0 0
      %673 = vmatprep.subr.bf16.mxu0 0
      %674 = vmatpush2.bf16.msra.mxu0 0
      %675 = vmatprep.subr.bf16.mxu0 0
      %676 = vmatpush2.bf16.msra.mxu0 0
      %677 = vmatprep.subr.bf16.mxu0 0
      %678 = vmatpush2.bf16.msra.mxu0 0
      %679 = vmatprep.subr.bf16.mxu0 0
      %680 = vmatpush2.bf16.msra.mxu0 0
      %681 = vmatprep.mubr.bf16.mxu0 0
      %682 = vmatmul.mubr.bf16.gmra.mxu0 %v569
      %v683 = vpop.f32.mrf.mxu0
      %v684 = vadd.f32 0.0, %v683
      %v685 = vpop.f32.mrf.mxu0
      %v686 = vpop.f32.mrf.mxu0
      %v687 = vadd.f32 0.0, %v686
      %v688 = vpop.f32.mrf.mxu0
      %689 = vmatprep.mubr.bf16.mxu0 0
      %690 = vmatmul.mubr.bf16.gmra.mxu0 %v570
      %v691 = vpop.f32.mrf.mxu0
      %v692 = vadd.f32 0.0, %v691
      %v693 = vpop.f32.mrf.mxu0
      %v694 = vpop.f32.mrf.mxu0
      %v695 = vadd.f32 0.0, %v694
      %v696 = vpop.f32.mrf.mxu0
      %697 = vmatprep.mubr.bf16.mxu0 0
      %698 = vmatmul.mubr.bf16.gmra.mxu0 %v571
      %v699 = vpop.f32.mrf.mxu0
      %v700 = vadd.f32 0.0, %v699
      %v701 = vpop.f32.mrf.mxu0
      %v702 = vpop.f32.mrf.mxu0
      %v703 = vadd.f32 0.0, %v702
      %v704 = vpop.f32.mrf.mxu0
      %705 = vmatprep.mubr.bf16.mxu0 0
      %706 = vmatmul.mubr.bf16.gmra.mxu0 %v572
      %v707 = vpop.f32.mrf.mxu0
      %v708 = vadd.f32 0.0, %v707
      %v709 = vpop.f32.mrf.mxu0
      %v710 = vpop.f32.mrf.mxu0
      %v711 = vadd.f32 0.0, %v710
      %v712 = vpop.f32.mrf.mxu0
      %713 = vmatprep.mubr.bf16.mxu0 0
      %714 = vmatmul.mubr.bf16.gmra.mxu0 %v573
      %v715 = vpop.f32.mrf.mxu0
      %v716 = vadd.f32 0.0, %v715
      %v717 = vpop.f32.mrf.mxu0
      %v718 = vpop.f32.mrf.mxu0
      %v719 = vadd.f32 0.0, %v718
      %v720 = vpop.f32.mrf.mxu0
      %721 = vmatprep.mubr.bf16.mxu0 0
      %722 = vmatmul.mubr.bf16.gmra.mxu0 %v574
      %v723 = vpop.f32.mrf.mxu0
      %v724 = vadd.f32 0.0, %v723
      %v725 = vpop.f32.mrf.mxu0
      %v726 = vpop.f32.mrf.mxu0
      %v727 = vadd.f32 0.0, %v726
      %v728 = vpop.f32.mrf.mxu0
      %729 = vmatprep.mubr.bf16.mxu0 0
      %730 = vmatmul.mubr.bf16.gmra.mxu0 %v575
      %v731 = vpop.f32.mrf.mxu0
      %v732 = vadd.f32 0.0, %v731
      %v733 = vpop.f32.mrf.mxu0
      %v734 = vpop.f32.mrf.mxu0
      %v735 = vadd.f32 0.0, %v734
      %v736 = vpop.f32.mrf.mxu0
      %737 = vmatprep.mubr.bf16.mxu0 0
      %738 = vmatmul.mubr.bf16.gmra.mxu0 %v576
      %v739 = vpop.f32.mrf.mxu0
      %v740 = vadd.f32 0.0, %v739
      %v741 = vpop.f32.mrf.mxu0
      %v742 = vpop.f32.mrf.mxu0
      %v743 = vadd.f32 0.0, %v742
      %v744 = vpop.f32.mrf.mxu0
      %745 = vmatprep.mubr.bf16.mxu0 0
      %746 = vmatmul.mubr.bf16.gmra.mxu0 %v577
      %v747 = vpop.f32.mrf.mxu0
      %v748 = vadd.f32 0.0, %v747
      %v749 = vpop.f32.mrf.mxu0
      %v750 = vpop.f32.mrf.mxu0
      %v751 = vadd.f32 0.0, %v750
      %v752 = vpop.f32.mrf.mxu0
      %753 = vmatprep.mubr.bf16.mxu0 0
      %754 = vmatmul.mubr.bf16.gmra.mxu0 %v578
      %v755 = vpop.f32.mrf.mxu0
      %v756 = vadd.f32 0.0, %v755
      %v757 = vpop.f32.mrf.mxu0
      %v758 = vpop.f32.mrf.mxu0
      %v759 = vadd.f32 0.0, %v758
      %v760 = vpop.f32.mrf.mxu0
      %761 = vmatprep.mubr.bf16.mxu0 0
      %762 = vmatmul.mubr.bf16.gmra.mxu0 %v579
      %v763 = vpop.f32.mrf.mxu0
      %v764 = vadd.f32 0.0, %v763
      %v765 = vpop.f32.mrf.mxu0
      %v766 = vpop.f32.mrf.mxu0
      %v767 = vadd.f32 0.0, %v766
      %v768 = vpop.f32.mrf.mxu0
      %769 = vmatprep.mubr.bf16.mxu0 0
      %770 = vmatmul.mubr.bf16.gmra.mxu0 %v580
      %v771 = vpop.f32.mrf.mxu0
      %v772 = vadd.f32 0.0, %v771
      %v773 = vpop.f32.mrf.mxu0
      %v774 = vpop.f32.mrf.mxu0
      %v775 = vadd.f32 0.0, %v774
      %v776 = vpop.f32.mrf.mxu0
      %777 = vmatprep.mubr.bf16.mxu0 0
      %778 = vmatmul.mubr.bf16.gmra.mxu0 %v581
      %v779 = vpop.f32.mrf.mxu0
      %v780 = vadd.f32 0.0, %v779
      %v781 = vpop.f32.mrf.mxu0
      %v782 = vpop.f32.mrf.mxu0
      %v783 = vadd.f32 0.0, %v782
      %v784 = vpop.f32.mrf.mxu0
      %785 = vmatprep.mubr.bf16.mxu0 0
      %786 = vmatmul.mubr.bf16.gmra.mxu0 %v582
      %v787 = vpop.f32.mrf.mxu0
      %v788 = vadd.f32 0.0, %v787
      %v789 = vpop.f32.mrf.mxu0
      %v790 = vpop.f32.mrf.mxu0
      %v791 = vadd.f32 0.0, %v790
      %v792 = vpop.f32.mrf.mxu0
      %793 = vmatprep.mubr.bf16.mxu0 0
      %794 = vmatmul.mubr.bf16.gmra.mxu0 %v583
      %v795 = vpop.f32.mrf.mxu0
      %v796 = vadd.f32 0.0, %v795
      %v797 = vpop.f32.mrf.mxu0
      %v798 = vpop.f32.mrf.mxu0
      %v799 = vadd.f32 0.0, %v798
      %v800 = vpop.f32.mrf.mxu0
      %801 = vmatprep.mubr.bf16.mxu0 0
      %802 = vmatmul.mubr.bf16.gmra.mxu0 %v584
      %v803 = vpop.f32.mrf.mxu0
      %v804 = vadd.f32 0.0, %v803
      %v805 = vpop.f32.mrf.mxu0
      %v806 = vpop.f32.mrf.mxu0
      %v807 = vadd.f32 0.0, %v806
      %v808 = vpop.f32.mrf.mxu0
      %809 = vdwg.mxu0
      %810 = vst [vmem:[%s213] sm:$0xff] %v684
      %811 = vst [vmem:[%s213 + $0x8] sm:$0xff] %v687
      %812 = vst [vmem:[%s213 + $0x10] sm:$0xff] %v692
      %813 = vst [vmem:[%s213 + $0x18] sm:$0xff] %v695
      %814 = vst [vmem:[%s213 + $0x20] sm:$0xff] %v700
      %815 = vst [vmem:[%s213 + $0x28] sm:$0xff] %v703
      %816 = vst [vmem:[%s213 + $0x30] sm:$0xff] %v708
      %817 = vst [vmem:[%s213 + $0x38] sm:$0xff] %v711
      %818 = vst [vmem:[%s213 + $0x40] sm:$0xff] %v716
      %819 = vst [vmem:[%s213 + $0x48] sm:$0xff] %v719
      %820 = vst [vmem:[%s213 + $0x50] sm:$0xff] %v724
      %821 = vst [vmem:[%s213 + $0x58] sm:$0xff] %v727
      %822 = vst [vmem:[%s213 + $0x60] sm:$0xff] %v732
      %823 = vst [vmem:[%s213 + $0x68] sm:$0xff] %v735
      %824 = vst [vmem:[%s213 + $0x70] sm:$0xff] %v740
      %825 = vst [vmem:[%s213 + $0x78] sm:$0xff] %v743
      %826 = vst [vmem:[%s213 + $0x80] sm:$0xff] %v748
      %827 = vst [vmem:[%s213 + $0x88] sm:$0xff] %v751
      %828 = vst [vmem:[%s213 + $0x90] sm:$0xff] %v756
      %829 = vst [vmem:[%s213 + $0x98] sm:$0xff] %v759
      %830 = vst [vmem:[%s213 + $0xa0] sm:$0xff] %v764
      %831 = vst [vmem:[%s213 + $0xa8] sm:$0xff] %v767
      %832 = vst [vmem:[%s213 + $0xb0] sm:$0xff] %v772
      %833 = vst [vmem:[%s213 + $0xb8] sm:$0xff] %v775
      %834 = vst [vmem:[%s213 + $0xc0] sm:$0xff] %v780
      %835 = vst [vmem:[%s213 + $0xc8] sm:$0xff] %v783
      %836 = vst [vmem:[%s213 + $0xd0] sm:$0xff] %v788
      %837 = vst [vmem:[%s213 + $0xd8] sm:$0xff] %v791
      %838 = vst [vmem:[%s213 + $0xe0] sm:$0xff] %v796
      %839 = vst [vmem:[%s213 + $0xe8] sm:$0xff] %v799
      %840 = vst [vmem:[%s213 + $0xf0] sm:$0xff] %v804
      %841 = vst [vmem:[%s213 + $0xf8] sm:$0xff] %v807
      %v858 = vunpack.c.l.b16 %v569
      %v859 = vunpack.c.h.b16 %v569
      %v860 = vunpack.c.l.b16 %v570
      %v861 = vunpack.c.h.b16 %v570
      %v862 = vunpack.c.l.b16 %v571
      %v863 = vunpack.c.h.b16 %v571
      %v864 = vunpack.c.l.b16 %v572
      %v865 = vunpack.c.h.b16 %v572
      %v866 = vunpack.c.l.b16 %v573
      %v867 = vunpack.c.h.b16 %v573
      %v868 = vunpack.c.l.b16 %v574
      %v869 = vunpack.c.h.b16 %v574
      %v870 = vunpack.c.l.b16 %v575
      %v871 = vunpack.c.h.b16 %v575
      %v872 = vunpack.c.l.b16 %v576
      %v873 = vunpack.c.h.b16 %v576
      %v874 = vunpack.c.l.b16 %v577
      %v875 = vunpack.c.h.b16 %v577
      %v876 = vunpack.c.l.b16 %v578
      %v877 = vunpack.c.h.b16 %v578
      %v878 = vunpack.c.l.b16 %v579
      %v879 = vunpack.c.h.b16 %v579
      %v880 = vunpack.c.l.b16 %v580
      %v881 = vunpack.c.h.b16 %v580
      %v882 = vunpack.c.l.b16 %v581
      %v883 = vunpack.c.h.b16 %v581
      %v884 = vunpack.c.l.b16 %v582
      %v885 = vunpack.c.h.b16 %v582
      %v886 = vunpack.c.l.b16 %v583
      %v887 = vunpack.c.h.b16 %v583
      %v888 = vunpack.c.l.b16 %v584
      %v889 = vunpack.c.h.b16 %v584
      %v890 = vpack.c.b16 %v858, %v858
      %v891 = vpack.c.b16 %v859, %v859
      %v892 = vpack.c.b16 %v860, %v860
      %v893 = vpack.c.b16 %v861, %v861
      %v894 = vpack.c.b16 %v862, %v862
      %v895 = vpack.c.b16 %v863, %v863
      %v896 = vpack.c.b16 %v864, %v864
      %v897 = vpack.c.b16 %v865, %v865
      %v898 = vpack.c.b16 %v866, %v866
      %v899 = vpack.c.b16 %v867, %v867
      %v900 = vpack.c.b16 %v868, %v868
      %v901 = vpack.c.b16 %v869, %v869
      %v902 = vpack.c.b16 %v870, %v870
      %v903 = vpack.c.b16 %v871, %v871
      %v904 = vpack.c.b16 %v872, %v872
      %v905 = vpack.c.b16 %v873, %v873
      %v906 = vpack.c.b16 %v874, %v874
      %v907 = vpack.c.b16 %v875, %v875
      %v908 = vpack.c.b16 %v876, %v876
      %v909 = vpack.c.b16 %v877, %v877
      %v910 = vpack.c.b16 %v878, %v878
      %v911 = vpack.c.b16 %v879, %v879
      %v912 = vpack.c.b16 %v880, %v880
      %v913 = vpack.c.b16 %v881, %v881
      %v914 = vpack.c.b16 %v882, %v882
      %v915 = vpack.c.b16 %v883, %v883
      %v916 = vpack.c.b16 %v884, %v884
      %v917 = vpack.c.b16 %v885, %v885
      %v918 = vpack.c.b16 %v886, %v886
      %v919 = vpack.c.b16 %v887, %v887
      %v920 = vpack.c.b16 %v888, %v888
      %v921 = vpack.c.b16 %v889, %v889
      %954 = vst [vmem:[%s207] sm:$0xf] %v890
      %955 = vst [vmem:[%s207 + $0x4] sm:$0xf] %v891
      %956 = vst [vmem:[%s207 + $0x8] sm:$0xf] %v892
      %957 = vst [vmem:[%s207 + $0xc] sm:$0xf] %v893
      %958 = vst [vmem:[%s207 + $0x10] sm:$0xf] %v894
      %959 = vst [vmem:[%s207 + $0x14] sm:$0xf] %v895
      %960 = vst [vmem:[%s207 + $0x18] sm:$0xf] %v896
      %961 = vst [vmem:[%s207 + $0x1c] sm:$0xf] %v897
      %962 = vst [vmem:[%s207 + $0x20] sm:$0xf] %v898
      %963 = vst [vmem:[%s207 + $0x24] sm:$0xf] %v899
      %964 = vst [vmem:[%s207 + $0x28] sm:$0xf] %v900
      %965 = vst [vmem:[%s207 + $0x2c] sm:$0xf] %v901
      %966 = vst [vmem:[%s207 + $0x30] sm:$0xf] %v902
      %967 = vst [vmem:[%s207 + $0x34] sm:$0xf] %v903
      %968 = vst [vmem:[%s207 + $0x38] sm:$0xf] %v904
      %969 = vst [vmem:[%s207 + $0x3c] sm:$0xf] %v905
      %970 = vst [vmem:[%s207 + $0x40] sm:$0xf] %v906
      %971 = vst [vmem:[%s207 + $0x44] sm:$0xf] %v907
      %972 = vst [vmem:[%s207 + $0x48] sm:$0xf] %v908
      %973 = vst [vmem:[%s207 + $0x4c] sm:$0xf] %v909
      %974 = vst [vmem:[%s207 + $0x50] sm:$0xf] %v910
      %975 = vst [vmem:[%s207 + $0x54] sm:$0xf] %v911
      %976 = vst [vmem:[%s207 + $0x58] sm:$0xf] %v912
      %977 = vst [vmem:[%s207 + $0x5c] sm:$0xf] %v913
      %978 = vst [vmem:[%s207 + $0x60] sm:$0xf] %v914
      %979 = vst [vmem:[%s207 + $0x64] sm:$0xf] %v915
      %980 = vst [vmem:[%s207 + $0x68] sm:$0xf] %v916
      %981 = vst [vmem:[%s207 + $0x6c] sm:$0xf] %v917
      %982 = vst [vmem:[%s207 + $0x70] sm:$0xf] %v918
      %983 = vst [vmem:[%s207 + $0x74] sm:$0xf] %v919
      %984 = vst [vmem:[%s207 + $0x78] sm:$0xf] %v920
      %985 = vst [vmem:[%s207 + $0x7c] sm:$0xf] %v921
      %s986 = smul.u32 32, %s16
      %p987 = scmp.lt.s32.totalorder %s986, 95
      %s988 = scalar_select %p987, %s986, 95
      %s989 = smul.addr %s988, 4
      %s990 = scalar_lea.vmem %s3, %s989
      %s991 = smul.u32 32, %s16
      %p992 = scmp.lt.s32.totalorder %s991, 95
      %s993 = scalar_select %p992, %s991, 95
      %s994 = smul.addr %s993, 8
      %s995 = scalar_lea.vmem %s4, %s994
      // Predicated region
      $region33: #{gat_forward.2} parent=31 // pred_check
        %p996 = pneg %p102
      $region34: #{gat_forward.2} parent=31 // pred_check_branch
        %998 = sbr.rel (%p996) target = $region36
      $region35: #{gat_forward.2} parent=31 // pred_region
        %s999 = smul.u32 32, %s16
      $region36: #{gat_forward.2} parent=31 // pred_fallthru
        _
      // Predicated region
      $region37: #{gat_forward.2} parent=31 // pred_check
        %p1000 = pneg %p128
      $region38: #{gat_forward.2} parent=31 // pred_check_branch
        %1002 = sbr.rel (%p1000) target = $region40
      $region39: #{gat_forward.2} parent=31 // pred_region
        %s1003 = smul.u32 32, %s16
      $region40: #{gat_forward.2} parent=31 // pred_fallthru
        _
    $region32: #{gat_forward.2} parent=5 // pred_fallthru
      _
    %p1004 = scmp.le.s32.totalorder 2, %s11
    // Predicated region
    $region41: #{gat_forward.2} parent=5 // pred_check
      %p1005 = pneg %p1004
    $region42: #{gat_forward.2} parent=5 // pred_check_branch
      %1007 = sbr.rel (%p1005) target = $region44
    $region43: #{gat_forward.2} parent=5 // pred_region
      %s1008 = ssub.s32 %s11, 2
      // Predicated region
      $region45: #{gat_forward.2} parent=43 // pred_check
        %p1009 = pneg %p108
      $region46: #{gat_forward.2} parent=43 // pred_check_branch
        %1011 = sbr.rel (%p1009) target = $region48
      $region47: #{gat_forward.2} parent=43 // pred_region
        %s1012 = smul.u32 32, %s17
        %p1013 = scmp.lt.s32.totalorder %s1012, 95
        %s1014 = scalar_select %p1013, %s1012, 95
        %s1015 = smul.addr %s1014, 4
        %s1016 = scalar_lea.vmem %s3, %s1015
      $region48: #{gat_forward.2} parent=43 // pred_fallthru
        _
      // Predicated region
      $region49: #{gat_forward.2} parent=43 // pred_check
        %p1017 = pneg %p134
      $region50: #{gat_forward.2} parent=43 // pred_check_branch
        %1019 = sbr.rel (%p1017) target = $region52
      $region51: #{gat_forward.2} parent=43 // pred_region
        %s1020 = smul.u32 32, %s17
        %p1021 = scmp.lt.s32.totalorder %s1020, 95
        %s1022 = scalar_select %p1021, %s1020, 95
        %s1023 = smul.addr %s1022, 8
        %s1024 = scalar_lea.vmem %s4, %s1023
      $region52: #{gat_forward.2} parent=43 // pred_fallthru
        _
    $region44: #{gat_forward.2} parent=5 // pred_fallthru
      _
  $region6: #{gat_forward.2} parent=0 // loop_footer
    %s15 = sadd.s32 1, %s11
  $region7: #{gat_forward.2} parent=0 // loop_footer_branch
    %10 = sbr.rel target = $region3
  $region8: #{gat_forward.2} parent=0 // loop_exit
    _

// kernel: gat_forward.3
$region0: #{gat_forward.3}
  #allocation0 [shape = 'u32[]', space=smem, size = 0x4, offset = 0x4, fixed_abs, tag = 'smem constant byte address 0x4 - core index']
  #allocation1 [shape = 'u32[144,128]{1,0:T(1,128)}', space=vmem, size = 0x12000, scoped, tag = 'internal scratch']
  #allocation2 [shape = 'f32[256,1]{1,0:T(8,128)}', space=vmem, size = 0x20000, scoped, tag = 'scratch operand']
  #allocation3 [shape = 'f32[256,1]{1,0:T(8,128)}', space=vmem, size = 0x20000, scoped, tag = 'scratch operand']
  #allocation4 [shape = 's32[1]{0}', space=sflag, size = 0x4, scoped, tag = 'scoped memory for gat_forward.3']
  #allocation5 [shape = 'u8[512]{0}', space=smem, size = 0x200, scoped, tag = 'prefetched SMEM operand 0']
  %s0 = inlined_call_operand.vmem [shape: s32[9], index: 0, kind: input, shape index: {}]
  %s1 = inlined_call_operand.vmem [shape: f32[768,1], index: 1, kind: input, shape index: {}]
  %s2 = inlined_call_operand.vmem [shape: f32[3,1,256], index: 2, kind: input, shape index: {}]
  %s3 = inlined_call_operand.vmem [shape: s8[768,768], index: 3, kind: input, shape index: {}]
  %s4 = inlined_call_operand.vmem [shape: bf16[3,256,128], index: 4, kind: input, shape index: {}]
  %s5 = inlined_call_operand.vmem [shape: f32[1,128], index: 5, kind: input, shape index: {}]
  %s6 = inlined_call_operand.vmem [shape: bf16[128,128], index: 6, kind: input, shape index: {}]
  %s7 = inlined_call_operand.vmem [shape: f32[1,128], index: 7, kind: input, shape index: {}]
  %s8 = inlined_call_operand.vmem [shape: f32[768,128], index: 8, kind: output, shape index: {0}]
  %s9 = inlined_call_operand.vmem [shape: f32[768,128], index: 9, kind: output, shape index: {1}]
  %10 = xla_tuple %s8, %s9
  %s11 = sld [smem:[#allocation0]]
  $region122: #{gat_forward.3} parent=0
    _
  %s13 = ssub.s32 1, %s11
  %s14 = scalar_select 0, %s13, %s11
  %s15 = sshll.u32 %s0, 4
  %s16 = int_to_ptr.vmem [resolvable:$true] %s15
  %18 = dma.vmem_to_smem %s16, 16, [#allocation5], [#allocation4]
  %19 = dma.done [#allocation4], 16
  %20 = sfence
  $region1: #{gat_forward.3} parent=0
    #allocation6 [shape = 'u8[131072]{0}', space=vmem, size = 0x20000, scoped, tag = 'input window, operand 3']
    loop: start=0, step=1, limit=11
    $region2: #{gat_forward.3} parent=1 // loop_pre_header
      _
    $region3: #{gat_forward.3} parent=1 // loop_header
      %s22 = sphi 0, %s26
      %p23 = scmp.ge.s32.totalorder %s22, 11
      %s29 = sphi 0, %s41
      %s30 = sphi 0, %s37
      %s31 = sphi 0, %s29
      %s32 = sphi 0, %s30
      %s33 = sphi 0, %s31
      %s34 = sphi 0, %s32
      %s44 = sphi 0, %s46
      %s47 = sphi 0, %s44
      %s48 = sphi 0, %s47
      %s64 = sphi 0, %s48
      %s68 = sphi 0, %s68
      %s70 = sphi 0, %s68
      %s71 = sphi 0, %s70
      %s85 = sphi 0, %s71
      %s93 = sphi 0, %s95
      %s96 = sphi 0, %s93
      %s97 = sphi 0, %s96
      %s113 = sphi 0, %s97
      %s117 = sphi 0, %s117
      %s119 = sphi 0, %s117
      %s120 = sphi 0, %s119
      %s134 = sphi 0, %s120
      %s138 = sphi 0, %s138
      %s140 = sphi 0, %s138
      %s141 = sphi 0, %s140
      %s155 = sphi 0, %s141
      %s159 = sphi 0, %s159
      %s161 = sphi 0, %s159
      %s162 = sphi 0, %s161
      %s176 = sphi 0, %s162
      %s180 = sphi 0, %s180
      %s182 = sphi 0, %s180
      %s183 = sphi 0, %s182
      %s197 = sphi 0, %s183
      %s203 = sphi 0, %s205
      %s206 = sphi 0, %s203
      %s207 = sphi 0, %s206
      %s223 = sphi 0, %s207
      %s229 = sphi 0, %s231
      %s232 = sphi 0, %s229
      %s233 = sphi 0, %s232
      %s249 = sphi 0, %s233
    $region4: #{gat_forward.3} parent=1 // loop_header_branch
      %25 = sbr.rel (%p23) target = $region8
    $region5: #{gat_forward.3} parent=1 // loop_body
      %s27 = ssub.s32 %s22, 1
      %s28 = ssub.s32 %s22, 2
      %s35 = sadd.s32 1, %s30
      %p36 = scmp.ge.s32.totalorder %s35, 3
      %s37 = scalar_select %p36, 0, %s35
      %s38 = sadd.s32 1, %s29
      %s39 = scalar_select %p36, %s38, %s29
      %p40 = scmp.ge.s32.totalorder %s39, 3
      %s41 = scalar_select %p40, 0, %s39
      %s42 = ssub.s32 %s29, %s41
      %p43 = scmp.eq.s32.totalorder %s42, 0
      %s45 = sadd.s32 %s44, 1
      %s46 = scalar_select %p43, %s44, %s45
      %p49 = pneg %p43
      %p50 = scmp.eq.s32.totalorder %s22, 8
      %p51 = por %p49, %p50
      %p52 = scmp.ne.s32.totalorder %s44, %s47
      %p53 = scmp.eq.s32.totalorder %s22, 0
      %p54 = por %p52, %p53
      %p55 = scmp.ne.s32.totalorder %s44, %s47
      %p56 = scmp.eq.s32.totalorder %s27, 8
      %p57 = por %p55, %p56
      %p58 = scmp.ne.s32.totalorder %s47, %s48
      %p59 = scmp.eq.s32.totalorder %s27, 0
      %p60 = por %p58, %p59
      %p61 = scmp.ne.s32.totalorder %s47, %s48
      %p62 = scmp.eq.s32.totalorder %s28, 8
      %p63 = por %p61, %p62
      %p65 = scmp.ne.s32.totalorder %s48, %s64
      %p66 = scmp.eq.s32.totalorder %s28, 0
      %p67 = por %p65, %p66
      %s69 = sadd.s32 %s68, 1
      %p72 = scmp.eq.s32.totalorder %s22, 8
      %p73 = scmp.ne.s32.totalorder %s68, %s70
      %p74 = scmp.eq.s32.totalorder %s22, 0
      %p75 = por %p73, %p74
      %p76 = scmp.ne.s32.totalorder %s68, %s70
      %p77 = scmp.eq.s32.totalorder %s27, 8
      %p78 = por %p76, %p77
      %p79 = scmp.ne.s32.totalorder %s70, %s71
      %p80 = scmp.eq.s32.totalorder %s27, 0
      %p81 = por %p79, %p80
      %p82 = scmp.ne.s32.totalorder %s70, %s71
      %p83 = scmp.eq.s32.totalorder %s28, 8
      %p84 = por %p82, %p83
      %p86 = scmp.ne.s32.totalorder %s71, %s85
      %p87 = scmp.eq.s32.totalorder %s28, 0
      %p88 = por %p86, %p87
      %s89 = ssub.s32 %s29, %s41
      %s90 = ssub.s32 %s30, %s37
      %s91 = sor.u32 %s89, %s90
      %p92 = scmp.eq.s32.totalorder %s91, 0
      %s94 = sadd.s32 %s93, 1
      %s95 = scalar_select %p92, %s93, %s94
      %p98 = pneg %p92
      %p99 = scmp.eq.s32.totalorder %s22, 8
      %p100 = por %p98, %p99
      %p101 = scmp.ne.s32.totalorder %s93, %s96
      %p102 = scmp.eq.s32.totalorder %s22, 0
      %p103 = por %p101, %p102
      %p104 = scmp.ne.s32.totalorder %s93, %s96
      %p105 = scmp.eq.s32.totalorder %s27, 8
      %p106 = por %p104, %p105
      %p107 = scmp.ne.s32.totalorder %s96, %s97
      %p108 = scmp.eq.s32.totalorder %s27, 0
      %p109 = por %p107, %p108
      %p110 = scmp.ne.s32.totalorder %s96, %s97
      %p111 = scmp.eq.s32.totalorder %s28, 8
      %p112 = por %p110, %p111
      %p114 = scmp.ne.s32.totalorder %s97, %s113
      %p115 = scmp.eq.s32.totalorder %s28, 0
      %p116 = por %p114, %p115
      %s118 = sadd.s32 %s117, 1
      %p121 = scmp.eq.s32.totalorder %s22, 8
      %p122 = scmp.ne.s32.totalorder %s117, %s119
      %p123 = scmp.eq.s32.totalorder %s22, 0
      %p124 = por %p122, %p123
      %p125 = scmp.ne.s32.totalorder %s117, %s119
      %p126 = scmp.eq.s32.totalorder %s27, 8
      %p127 = por %p125, %p126
      %p128 = scmp.ne.s32.totalorder %s119, %s120
      %p129 = scmp.eq.s32.totalorder %s27, 0
      %p130 = por %p128, %p129
      %p131 = scmp.ne.s32.totalorder %s119, %s120
      %p132 = scmp.eq.s32.totalorder %s28, 8
      %p133 = por %p131, %p132
      %p135 = scmp.ne.s32.totalorder %s120, %s134
      %p136 = scmp.eq.s32.totalorder %s28, 0
      %p137 = por %p135, %p136
      %s139 = sadd.s32 %s138, 1
      %p142 = scmp.eq.s32.totalorder %s22, 8
      %p143 = scmp.ne.s32.totalorder %s138, %s140
      %p144 = scmp.eq.s32.totalorder %s22, 0
      %p145 = por %p143, %p144
      %p146 = scmp.ne.s32.totalorder %s138, %s140
      %p147 = scmp.eq.s32.totalorder %s27, 8
      %p148 = por %p146, %p147
      %p149 = scmp.ne.s32.totalorder %s140, %s141
      %p150 = scmp.eq.s32.totalorder %s27, 0
      %p151 = por %p149, %p150
      %p152 = scmp.ne.s32.totalorder %s140, %s141
      %p153 = scmp.eq.s32.totalorder %s28, 8
      %p154 = por %p152, %p153
      %p156 = scmp.ne.s32.totalorder %s141, %s155
      %p157 = scmp.eq.s32.totalorder %s28, 0
      %p158 = por %p156, %p157
      %s160 = sadd.s32 %s159, 1
      %p163 = scmp.eq.s32.totalorder %s22, 8
      %p164 = scmp.ne.s32.totalorder %s159, %s161
      %p165 = scmp.eq.s32.totalorder %s22, 0
      %p166 = por %p164, %p165
      %p167 = scmp.ne.s32.totalorder %s159, %s161
      %p168 = scmp.eq.s32.totalorder %s27, 8
      %p169 = por %p167, %p168
      %p170 = scmp.ne.s32.totalorder %s161, %s162
      %p171 = scmp.eq.s32.totalorder %s27, 0
      %p172 = por %p170, %p171
      %p173 = scmp.ne.s32.totalorder %s161, %s162
      %p174 = scmp.eq.s32.totalorder %s28, 8
      %p175 = por %p173, %p174
      %p177 = scmp.ne.s32.totalorder %s162, %s176
      %p178 = scmp.eq.s32.totalorder %s28, 0
      %p179 = por %p177, %p178
      %s181 = sadd.s32 %s180, 1
      %p184 = scmp.eq.s32.totalorder %s22, 8
      %p185 = scmp.ne.s32.totalorder %s180, %s182
      %p186 = scmp.eq.s32.totalorder %s22, 0
      %p187 = por %p185, %p186
      %p188 = scmp.ne.s32.totalorder %s180, %s182
      %p189 = scmp.eq.s32.totalorder %s27, 8
      %p190 = por %p188, %p189
      %p191 = scmp.ne.s32.totalorder %s182, %s183
      %p192 = scmp.eq.s32.totalorder %s27, 0
      %p193 = por %p191, %p192
      %p194 = scmp.ne.s32.totalorder %s182, %s183
      %p195 = scmp.eq.s32.totalorder %s28, 8
      %p196 = por %p194, %p195
      %p198 = scmp.ne.s32.totalorder %s183, %s197
      %p199 = scmp.eq.s32.totalorder %s28, 0
      %p200 = por %p198, %p199
      %s201 = ssub.s32 %s29, %s41
      %p202 = scmp.eq.s32.totalorder %s201, 0
      %s204 = sadd.s32 %s203, 1
      %s205 = scalar_select %p202, %s203, %s204
      %p208 = pneg %p202
      %p209 = scmp.eq.s32.totalorder %s22, 8
      %p210 = por %p208, %p209
      %p211 = scmp.ne.s32.totalorder %s203, %s206
      %p212 = scmp.eq.s32.totalorder %s22, 0
      %p213 = por %p211, %p212
      %p214 = scmp.ne.s32.totalorder %s203, %s206
      %p215 = scmp.eq.s32.totalorder %s27, 8
      %p216 = por %p214, %p215
      %p217 = scmp.ne.s32.totalorder %s206, %s207
      %p218 = scmp.eq.s32.totalorder %s27, 0
      %p219 = por %p217, %p218
      %p220 = scmp.ne.s32.totalorder %s206, %s207
      %p221 = scmp.eq.s32.totalorder %s28, 8
      %p222 = por %p220, %p221
      %p224 = scmp.ne.s32.totalorder %s207, %s223
      %p225 = scmp.eq.s32.totalorder %s28, 0
      %p226 = por %p224, %p225
      %s227 = ssub.s32 %s29, %s41
      %p228 = scmp.eq.s32.totalorder %s227, 0
      %s230 = sadd.s32 %s229, 1
      %s231 = scalar_select %p228, %s229, %s230
      %p234 = pneg %p228
      %p235 = scmp.eq.s32.totalorder %s22, 8
      %p236 = por %p234, %p235
      %p237 = scmp.ne.s32.totalorder %s229, %s232
      %p238 = scmp.eq.s32.totalorder %s22, 0
      %p239 = por %p237, %p238
      %p240 = scmp.ne.s32.totalorder %s229, %s232
      %p241 = scmp.eq.s32.totalorder %s27, 8
      %p242 = por %p240, %p241
      %p243 = scmp.ne.s32.totalorder %s232, %s233
      %p244 = scmp.eq.s32.totalorder %s27, 0
      %p245 = por %p243, %p244
      %p246 = scmp.ne.s32.totalorder %s232, %s233
      %p247 = scmp.eq.s32.totalorder %s28, 8
      %p248 = por %p246, %p247
      %p250 = scmp.ne.s32.totalorder %s233, %s249
      %p251 = scmp.eq.s32.totalorder %s28, 0
      %p252 = por %p250, %p251
      %p253 = scmp.le.s32.totalorder 1, %s22
      %p254 = scmp.lt.s32.totalorder %s22, 10
      %p255 = pnand %p253, %p254
      %p256 = pneg %p255
      // Predicated region
      $region9: #{gat_forward.3} parent=5 // pred_check
        _
      $region10: #{gat_forward.3} parent=5 // pred_check_branch
        %258 = sbr.rel (%p255) target = $region12
      $region11: #{gat_forward.3} parent=5 // pred_region
        %s259 = ssub.s32 %s22, 1
        // Predicated region
        $region13: #{gat_forward.3} parent=11 // pred_check
          %p260 = pneg %p81
        $region14: #{gat_forward.3} parent=11 // pred_check_branch
          %262 = sbr.rel (%p260) target = $region16
        $region15: #{gat_forward.3} parent=11 // pred_region
          _
        $region16: #{gat_forward.3} parent=11 // pred_fallthru
          _
        // Predicated region
        $region17: #{gat_forward.3} parent=11 // pred_check
          %p263 = pneg %p130
        $region18: #{gat_forward.3} parent=11 // pred_check_branch
          %265 = sbr.rel (%p263) target = $region20
        $region19: #{gat_forward.3} parent=11 // pred_region
          _
        $region20: #{gat_forward.3} parent=11 // pred_fallthru
          _
        // Predicated region
        $region21: #{gat_forward.3} parent=11 // pred_check
          %p266 = pneg %p151
        $region22: #{gat_forward.3} parent=11 // pred_check_branch
          %268 = sbr.rel (%p266) target = $region24
        $region23: #{gat_forward.3} parent=11 // pred_region
          _
        $region24: #{gat_forward.3} parent=11 // pred_fallthru
          _
        // Predicated region
        $region25: #{gat_forward.3} parent=11 // pred_check
          %p269 = pneg %p172
        $region26: #{gat_forward.3} parent=11 // pred_check_branch
          %271 = sbr.rel (%p269) target = $region28
        $region27: #{gat_forward.3} parent=11 // pred_region
          _
        $region28: #{gat_forward.3} parent=11 // pred_fallthru
          _
        // Predicated region
        $region29: #{gat_forward.3} parent=11 // pred_check
          %p272 = pneg %p193
        $region30: #{gat_forward.3} parent=11 // pred_check_branch
          %274 = sbr.rel (%p272) target = $region32
        $region31: #{gat_forward.3} parent=11 // pred_region
          _
        $region32: #{gat_forward.3} parent=11 // pred_fallthru
          _
      $region12: #{gat_forward.3} parent=5 // pred_fallthru
        _
      %p275 = scmp.lt.s32.totalorder %s22, 9
      // Predicated region
      $region33: #{gat_forward.3} parent=5 // pred_check
        %p276 = pneg %p275
      $region34: #{gat_forward.3} parent=5 // pred_check_branch
        %278 = sbr.rel (%p276) target = $region36
      $region35: #{gat_forward.3} parent=5 // pred_region
        // Predicated region
        $region37: #{gat_forward.3} parent=35 // pred_check
          %p279 = pneg %p54
        $region38: #{gat_forward.3} parent=35 // pred_check_branch
          %281 = sbr.rel (%p279) target = $region40
        $region39: #{gat_forward.3} parent=35 // pred_region
          %s282 = smul.u32 32, %s29
          %p283 = scmp.lt.s32.totalorder %s282, 95
          %s284 = scalar_select %p283, %s282, 95
          %s285 = smul.addr %s284, 8
          %s286 = scalar_lea.vmem %s1, %s285
          %s287 = smul.u32 32, %s29
        $region40: #{gat_forward.3} parent=35 // pred_fallthru
          _
        // Predicated region
        $region41: #{gat_forward.3} parent=35 // pred_check
          %p288 = pneg %p103
        $region42: #{gat_forward.3} parent=35 // pred_check_branch
          %290 = sbr.rel (%p288) target = $region44
        $region43: #{gat_forward.3} parent=35 // pred_region
          %s291 = sand.u32 %s93, 1
          %s292 = sand.u32 %s93, 1
          %s293 = smul.addr %s292, 128
          %s294 = scalar_lea.vmem [#allocation6], %s293
          %s295 = smul.u32 32, %s29
          %s296 = smul.u32 2, %s30
          %s297 = smul.addr %s295, 6
          %s298 = sadd.s32 %s296, %s297
          %s299 = smul.addr %s298, 2
          %s300 = scalar_lea.vmem %s3, %s299
          // Predicated region
          $region45: #{gat_forward.3} parent=43 // pred_check
            _
          $region46: #{gat_forward.3} parent=43 // pred_check_branch
            %302 = sbr.rel (0) target = $region48
          $region47: #{gat_forward.3} parent=43 // pred_region
            // Predicated region
            $region49: #{gat_forward.3} parent=47 // pred_check
              _
            $region50: #{gat_forward.3} parent=47 // pred_check_branch
              %304 = sbr.rel target = $region52
            $region51: #{gat_forward.3} parent=47 // pred_region
              // Predicated region
              $region64: #{gat_forward.3} parent=51 // pred_check
                _
              $region65: #{gat_forward.3} parent=51 // pred_check_branch
                %382 = sbr.rel (0) target = $region67
              $region66: #{gat_forward.3} parent=51 // pred_region
                loop: start=0, step=1, limit=1
                $region68: #{gat_forward.3} parent=66 // loop_pre_header
                  _
                $region69: #{gat_forward.3} parent=66 // loop_header
                  %s384 = sphi 0, %s388
                  %p385 = scmp.ge.s32.totalorder %s384, 1
                  %s389 = sphi %s300, %s300
                  %s390 = sphi %s294, %s294
                $region70: #{gat_forward.3} parent=66 // loop_header_branch
                  %387 = sbr.rel (%p385) target = $region74
                $region71: #{gat_forward.3} parent=66 // loop_body
                  _
                $region72: #{gat_forward.3} parent=66 // loop_footer
                  %s388 = sadd.s32 1, %s384
                $region73: #{gat_forward.3} parent=66 // loop_footer_branch
                  %383 = sbr.rel target = $region69
                $region74: #{gat_forward.3} parent=66 // loop_exit
                  _
                %s392 = ssub.s32 16, 1
                loop: start=0, step=1, limit=1
                $region75: #{gat_forward.3} parent=66 // loop_pre_header
                  _
                $region76: #{gat_forward.3} parent=66 // loop_header
                  %s394 = sphi 0, %s398
                  %p395 = scmp.ge.s32.totalorder %s394, 1
                  %s399 = sphi %s300, %s300
                  %s400 = sphi %s294, %s294
                $region77: #{gat_forward.3} parent=66 // loop_header_branch
                  %397 = sbr.rel (%p395) target = $region81
                $region78: #{gat_forward.3} parent=66 // loop_body
                  %v401 = vld [vmem:[%s399] sm:%s392]
                  %402 = vst [vmem:[%s400] sm:%s392] %v401
                  %v403 = vld [vmem:[%s399 + $0xc] sm:%s392]
                  %404 = vst [vmem:[%s400 + $0x4] sm:%s392] %v403
                  %v405 = vld [vmem:[%s399 + $0x18] sm:%s392]
                  %406 = vst [vmem:[%s400 + $0x8] sm:%s392] %v405
                  %v407 = vld [vmem:[%s399 + $0x24] sm:%s392]
                  %408 = vst [vmem:[%s400 + $0xc] sm:%s392] %v407
                  %v409 = vld [vmem:[%s399 + $0x30] sm:%s392]
                  %410 = vst [vmem:[%s400 + $0x10] sm:%s392] %v409
                  %v411 = vld [vmem:[%s399 + $0x3c] sm:%s392]
                  %412 = vst [vmem:[%s400 + $0x14] sm:%s392] %v411
                  %v413 = vld [vmem:[%s399 + $0x48] sm:%s392]
                  %414 = vst [vmem:[%s400 + $0x18] sm:%s392] %v413
                  %v415 = vld [vmem:[%s399 + $0x54] sm:%s392]
                  %416 = vst [vmem:[%s400 + $0x1c] sm:%s392] %v415
                  %v417 = vld [vmem:[%s399 + $0x60] sm:%s392]
                  %418 = vst [vmem:[%s400 + $0x20] sm:%s392] %v417
                  %v419 = vld [vmem:[%s399 + $0x6c] sm:%s392]
                  %420 = vst [vmem:[%s400 + $0x24] sm:%s392] %v419
                  %v421 = vld [vmem:[%s399 + $0x78] sm:%s392]
                  %422 = vst [vmem:[%s400 + $0x28] sm:%s392] %v421
                  %v423 = vld [vmem:[%s399 + $0x84] sm:%s392]
                  %424 = vst [vmem:[%s400 + $0x2c] sm:%s392] %v423
                  %v425 = vld [vmem:[%s399 + $0x90] sm:%s392]
                  %426 = vst [vmem:[%s400 + $0x30] sm:%s392] %v425
                  %v427 = vld [vmem:[%s399 + $0x9c] sm:%s392]
                  %428 = vst [vmem:[%s400 + $0x34] sm:%s392] %v427
                  %v429 = vld [vmem:[%s399 + $0xa8] sm:%s392]
                  %430 = vst [vmem:[%s400 + $0x38] sm:%s392] %v429
                  %v431 = vld [vmem:[%s399 + $0xb4] sm:%s392]
                  %432 = vst [vmem:[%s400 + $0x3c] sm:%s392] %v431
                  %v433 = vld [vmem:[%s399 + $0xc0] sm:%s392]
                  %434 = vst [vmem:[%s400 + $0x40] sm:%s392] %v433
                  %v435 = vld [vmem:[%s399 + $0xcc] sm:%s392]
                  %436 = vst [vmem:[%s400 + $0x44] sm:%s392] %v435
                  %v437 = vld [vmem:[%s399 + $0xd8] sm:%s392]
                  %438 = vst [vmem:[%s400 + $0x48] sm:%s392] %v437
                  %v439 = vld [vmem:[%s399 + $0xe4] sm:%s392]
                  %440 = vst [vmem:[%s400 + $0x4c] sm:%s392] %v439
                  %v441 = vld [vmem:[%s399 + $0xf0] sm:%s392]
                  %442 = vst [vmem:[%s400 + $0x50] sm:%s392] %v441
                  %v443 = vld [vmem:[%s399 + $0xfc] sm:%s392]
                  %444 = vst [vmem:[%s400 + $0x54] sm:%s392] %v443
                  %v445 = vld [vmem:[%s399 + $0x108] sm:%s392]
                  %446 = vst [vmem:[%s400 + $0x58] sm:%s392] %v445
                  %v447 = vld [vmem:[%s399 + $0x114] sm:%s392]
                  %448 = vst [vmem:[%s400 + $0x5c] sm:%s392] %v447
                  %v449 = vld [vmem:[%s399 + $0x120] sm:%s392]
                  %450 = vst [vmem:[%s400 + $0x60] sm:%s392] %v449
                  %v451 = vld [vmem:[%s399 + $0x12c] sm:%s392]
                  %452 = vst [vmem:[%s400 + $0x64] sm:%s392] %v451
                  %v453 = vld [vmem:[%s399 + $0x138] sm:%s392]
                  %454 = vst [vmem:[%s400 + $0x68] sm:%s392] %v453
                  %v455 = vld [vmem:[%s399 + $0x144] sm:%s392]
                  %456 = vst [vmem:[%s400 + $0x6c] sm:%s392] %v455
                  %v457 = vld [vmem:[%s399 + $0x150] sm:%s392]
                  %458 = vst [vmem:[%s400 + $0x70] sm:%s392] %v457
                  %v459 = vld [vmem:[%s399 + $0x15c] sm:%s392]
                  %460 = vst [vmem:[%s400 + $0x74] sm:%s392] %v459
                  %v461 = vld [vmem:[%s399 + $0x168] sm:%s392]
                  %462 = vst [vmem:[%s400 + $0x78] sm:%s392] %v461
                  %v463 = vld [vmem:[%s399 + $0x174] sm:%s392]
                  %464 = vst [vmem:[%s400 + $0x7c] sm:%s392] %v463
                $region79: #{gat_forward.3} parent=66 // loop_footer
                  %s398 = sadd.s32 1, %s394
                $region80: #{gat_forward.3} parent=66 // loop_footer_branch
                  %393 = sbr.rel target = $region76
                $region81: #{gat_forward.3} parent=66 // loop_exit
                  _
              $region67: #{gat_forward.3} parent=51 // pred_fallthru
                _
            $region52: #{gat_forward.3} parent=47 // pred_fallthru
              _
            // Predicated region
            $region53: #{gat_forward.3} parent=47 // pred_check
              _
            $region54: #{gat_forward.3} parent=47 // pred_check_branch
              %306 = sbr.rel (0) target = $region56
            $region55: #{gat_forward.3} parent=47 // pred_region
              %s308 = ssub.s32 16, 1
              loop: start=0, step=1, limit=1
              $region57: #{gat_forward.3} parent=55 // loop_pre_header
                _
              $region58: #{gat_forward.3} parent=55 // loop_header
                %s310 = sphi 0, %s314
                %p311 = scmp.ge.s32.totalorder %s310, 1
                %s315 = sphi %s300, %s300
                %s316 = sphi %s294, %s294
              $region59: #{gat_forward.3} parent=55 // loop_header_branch
                %313 = sbr.rel (%p311) target = $region63
              $region60: #{gat_forward.3} parent=55 // loop_body
                %v317 = vld [vmem:[%s315] sm:%s308]
                %318 = vst [vmem:[%s316] sm:%s308] %v317
                %v319 = vld [vmem:[%s315 + $0xc] sm:%s308]
                %320 = vst [vmem:[%s316 + $0x4] sm:%s308] %v319
                %v321 = vld [vmem:[%s315 + $0x18] sm:%s308]
                %322 = vst [vmem:[%s316 + $0x8] sm:%s308] %v321
                %v323 = vld [vmem:[%s315 + $0x24] sm:%s308]
                %324 = vst [vmem:[%s316 + $0xc] sm:%s308] %v323
                %v325 = vld [vmem:[%s315 + $0x30] sm:%s308]
                %326 = vst [vmem:[%s316 + $0x10] sm:%s308] %v325
                %v327 = vld [vmem:[%s315 + $0x3c] sm:%s308]
                %328 = vst [vmem:[%s316 + $0x14] sm:%s308] %v327
                %v329 = vld [vmem:[%s315 + $0x48] sm:%s308]
                %330 = vst [vmem:[%s316 + $0x18] sm:%s308] %v329
                %v331 = vld [vmem:[%s315 + $0x54] sm:%s308]
                %332 = vst [vmem:[%s316 + $0x1c] sm:%s308] %v331
                %v333 = vld [vmem:[%s315 + $0x60] sm:%s308]
                %334 = vst [vmem:[%s316 + $0x20] sm:%s308] %v333
                %v335 = vld [vmem:[%s315 + $0x6c] sm:%s308]
                %336 = vst [vmem:[%s316 + $0x24] sm:%s308] %v335
                %v337 = vld [vmem:[%s315 + $0x78] sm:%s308]
                %338 = vst [vmem:[%s316 + $0x28] sm:%s308] %v337
                %v339 = vld [vmem:[%s315 + $0x84] sm:%s308]
                %340 = vst [vmem:[%s316 + $0x2c] sm:%s308] %v339
                %v341 = vld [vmem:[%s315 + $0x90] sm:%s308]
                %342 = vst [vmem:[%s316 + $0x30] sm:%s308] %v341
                %v343 = vld [vmem:[%s315 + $0x9c] sm:%s308]
                %344 = vst [vmem:[%s316 + $0x34] sm:%s308] %v343
                %v345 = vld [vmem:[%s315 + $0xa8] sm:%s308]
                %346 = vst [vmem:[%s316 + $0x38] sm:%s308] %v345
                %v347 = vld [vmem:[%s315 + $0xb4] sm:%s308]
                %348 = vst [vmem:[%s316 + $0x3c] sm:%s308] %v347
                %v349 = vld [vmem:[%s315 + $0xc0] sm:%s308]
                %350 = vst [vmem:[%s316 + $0x40] sm:%s308] %v349
                %v351 = vld [vmem:[%s315 + $0xcc] sm:%s308]
                %352 = vst [vmem:[%s316 + $0x44] sm:%s308] %v351
                %v353 = vld [vmem:[%s315 + $0xd8] sm:%s308]
                %354 = vst [vmem:[%s316 + $0x48] sm:%s308] %v353
                %v355 = vld [vmem:[%s315 + $0xe4] sm:%s308]
                %356 = vst [vmem:[%s316 + $0x4c] sm:%s308] %v355
                %v357 = vld [vmem:[%s315 + $0xf0] sm:%s308]
                %358 = vst [vmem:[%s316 + $0x50] sm:%s308] %v357
                %v359 = vld [vmem:[%s315 + $0xfc] sm:%s308]
                %360 = vst [vmem:[%s316 + $0x54] sm:%s308] %v359
                %v361 = vld [vmem:[%s315 + $0x108] sm:%s308]
                %362 = vst [vmem:[%s316 + $0x58] sm:%s308] %v361
                %v363 = vld [vmem:[%s315 + $0x114] sm:%s308]
                %364 = vst [vmem:[%s316 + $0x5c] sm:%s308] %v363
                %v365 = vld [vmem:[%s315 + $0x120] sm:%s308]
                %366 = vst [vmem:[%s316 + $0x60] sm:%s308] %v365
                %v367 = vld [vmem:[%s315 + $0x12c] sm:%s308]
                %368 = vst [vmem:[%s316 + $0x64] sm:%s308] %v367
                %v369 = vld [vmem:[%s315 + $0x138] sm:%s308]
                %370 = vst [vmem:[%s316 + $0x68] sm:%s308] %v369
                %v371 = vld [vmem:[%s315 + $0x144] sm:%s308]
                %372 = vst [vmem:[%s316 + $0x6c] sm:%s308] %v371
                %v373 = vld [vmem:[%s315 + $0x150] sm:%s308]
                %374 = vst [vmem:[%s316 + $0x70] sm:%s308] %v373
                %v375 = vld [vmem:[%s315 + $0x15c] sm:%s308]
                %376 = vst [vmem:[%s316 + $0x74] sm:%s308] %v375
                %v377 = vld [vmem:[%s315 + $0x168] sm:%s308]
                %378 = vst [vmem:[%s316 + $0x78] sm:%s308] %v377
                %v379 = vld [vmem:[%s315 + $0x174] sm:%s308]
                %380 = vst [vmem:[%s316 + $0x7c] sm:%s308] %v379
              $region61: #{gat_forward.3} parent=55 // loop_footer
                %s314 = sadd.s32 1, %s310
              $region62: #{gat_forward.3} parent=55 // loop_footer_branch
                %309 = sbr.rel target = $region58
              $region63: #{gat_forward.3} parent=55 // loop_exit
                _
            $region56: #{gat_forward.3} parent=47 // pred_fallthru
              _
          $region48: #{gat_forward.3} parent=43 // pred_fallthru
            _
          %465 = vnop
        $region44: #{gat_forward.3} parent=35 // pred_fallthru
          _
      $region36: #{gat_forward.3} parent=5 // pred_fallthru
        _
      %p466 = scmp.le.s32.totalorder 1, %s22
      %p467 = scmp.lt.s32.totalorder %s22, 10
      %p468 = pnand %p466, %p467
      %p469 = pneg %p468
      // Predicated region
      $region82: #{gat_forward.3} parent=5 // pred_check
        _
      $region83: #{gat_forward.3} parent=5 // pred_check_branch
        %471 = sbr.rel (%p468) target = $region85
      $region84: #{gat_forward.3} parent=5 // pred_region
        %s472 = ssub.s32 %s22, 1
        %s473 = sand.u32 %s96, 1
        %s474 = sand.u32 %s96, 1
        %s475 = smul.addr %s474, 128
        %s476 = scalar_lea.vmem [#allocation6], %s475
        // Predicated region
        $region86: #{gat_forward.3} parent=84 // pred_check
          %p477 = pneg %p109
        $region87: #{gat_forward.3} parent=84 // pred_check_branch
          %479 = sbr.rel (%p477) target = $region89
        $region88: #{gat_forward.3} parent=84 // pred_region
          _
        $region89: #{gat_forward.3} parent=84 // pred_fallthru
          _
        %s480 = smul.u32 32, %s31
        %p481 = scmp.lt.s32.totalorder %s480, 95
        %s482 = scalar_select %p481, %s480, 95
        %s483 = smul.addr %s482, 8
        %s484 = scalar_lea.vmem %s1, %s483
        %p485 = pneg %p60
        %p486 = pneg %p57
        %p487 = pneg %p81
        %p488 = pneg %p78
        %s489 = sand.u32 %s96, 1
        %s490 = sand.u32 %s96, 1
        %s491 = smul.addr %s490, 128
        %s492 = scalar_lea.vmem [#allocation6], %s491
        %p493 = pneg %p109
        %p494 = pneg %p106
        %p495 = pneg %p130
        %p496 = pneg %p127
        %p497 = pneg %p151
        %p498 = pneg %p148
        %p499 = pneg %p172
        %p500 = pneg %p169
        %p501 = pneg %p193
        %p502 = pneg %p190
        %p503 = pneg %p219
        %p504 = pneg %p216
        %s505 = smul.u32 32, %s31
        %p506 = scmp.lt.s32.totalorder %s505, 95
        %s507 = scalar_select %p506, %s505, 95
        %s508 = smul.addr %s507, 8
        %s509 = scalar_lea.vmem %s8, %s508
        %p510 = pneg %p245
        %p511 = pneg %p242
        %s512 = smul.u32 32, %s31
        %p513 = scmp.lt.s32.totalorder %s512, 95
        %s514 = scalar_select %p513, %s512, 95
        %s515 = smul.addr %s514, 8
        %s516 = scalar_lea.vmem %s9, %s515
        %s517 = smul.u32 32, %s31
        %p518 = scmp.lt.s32.totalorder %s517, 95
        %s519 = scalar_select %p518, %s517, 95
        %s520 = smul.addr %s519, 8
        %s521 = scalar_lea.vmem %s1, %s520
        %s522 = smul.u32 32, %s31
        %s523 = smul.u32 32, %s31
        %s524 = smul.u32 2, %s32
        %s525 = smul.u32 32, %s31
        %p526 = scmp.lt.s32.totalorder %s525, 95
        %s527 = scalar_select %p526, %s525, 95
        %s528 = smul.addr %s527, 8
        %s529 = scalar_lea.vmem %s8, %s528
        %s530 = smul.u32 32, %s31
        %s531 = smul.u32 32, %s31
        %p532 = scmp.lt.s32.totalorder %s531, 95
        %s533 = scalar_select %p532, %s531, 95
        %s534 = smul.addr %s533, 8
        %s535 = scalar_lea.vmem %s9, %s534
        %s536 = smul.u32 32, %s31
        %p540 = scmp.eq.s32.totalorder %s32, 0
        // Predicated region
        $region90: #{gat_forward.3} parent=84 // pred_check
          %p541 = pneg %p540
        $region91: #{gat_forward.3} parent=84 // pred_check_branch
          %543 = sbr.rel (%p541) target = $region93
        $region92: #{gat_forward.3} parent=84 // pred_region
          %vm544 = vcmask 7168
          %545 = vst.msk [vmem:[#allocation2] sm:$0xff] %vm544, -1e+30
          %546 = vst.msk [vmem:[#allocation2 + $0x8] sm:$0xff] %vm544, -1e+30
          %547 = vst.msk [vmem:[#allocation2 + $0x10] sm:$0xff] %vm544, -1e+30
          %548 = vst.msk [vmem:[#allocation2 + $0x18] sm:$0xff] %vm544, -1e+30
          %549 = vst.msk [vmem:[#allocation2 + $0x20] sm:$0xff] %vm544, -1e+30
          %550 = vst.msk [vmem:[#allocation2 + $0x28] sm:$0xff] %vm544, -1e+30
          %551 = vst.msk [vmem:[#allocation2 + $0x30] sm:$0xff] %vm544, -1e+30
          %552 = vst.msk [vmem:[#allocation2 + $0x38] sm:$0xff] %vm544, -1e+30
          %553 = vst.msk [vmem:[#allocation2 + $0x40] sm:$0xff] %vm544, -1e+30
          %554 = vst.msk [vmem:[#allocation2 + $0x48] sm:$0xff] %vm544, -1e+30
          %555 = vst.msk [vmem:[#allocation2 + $0x50] sm:$0xff] %vm544, -1e+30
          %556 = vst.msk [vmem:[#allocation2 + $0x58] sm:$0xff] %vm544, -1e+30
          %557 = vst.msk [vmem:[#allocation2 + $0x60] sm:$0xff] %vm544, -1e+30
          %558 = vst.msk [vmem:[#allocation2 + $0x68] sm:$0xff] %vm544, -1e+30
          %559 = vst.msk [vmem:[#allocation2 + $0x70] sm:$0xff] %vm544, -1e+30
          %560 = vst.msk [vmem:[#allocation2 + $0x78] sm:$0xff] %vm544, -1e+30
          %561 = vst.msk [vmem:[#allocation2 + $0x80] sm:$0xff] %vm544, -1e+30
          %562 = vst.msk [vmem:[#allocation2 + $0x88] sm:$0xff] %vm544, -1e+30
          %563 = vst.msk [vmem:[#allocation2 + $0x90] sm:$0xff] %vm544, -1e+30
          %564 = vst.msk [vmem:[#allocation2 + $0x98] sm:$0xff] %vm544, -1e+30
          %565 = vst.msk [vmem:[#allocation2 + $0xa0] sm:$0xff] %vm544, -1e+30
          %566 = vst.msk [vmem:[#allocation2 + $0xa8] sm:$0xff] %vm544, -1e+30
          %567 = vst.msk [vmem:[#allocation2 + $0xb0] sm:$0xff] %vm544, -1e+30
          %568 = vst.msk [vmem:[#allocation2 + $0xb8] sm:$0xff] %vm544, -1e+30
          %569 = vst.msk [vmem:[#allocation2 + $0xc0] sm:$0xff] %vm544, -1e+30
          %570 = vst.msk [vmem:[#allocation2 + $0xc8] sm:$0xff] %vm544, -1e+30
          %571 = vst.msk [vmem:[#allocation2 + $0xd0] sm:$0xff] %vm544, -1e+30
          %572 = vst.msk [vmem:[#allocation2 + $0xd8] sm:$0xff] %vm544, -1e+30
          %573 = vst.msk [vmem:[#allocation2 + $0xe0] sm:$0xff] %vm544, -1e+30
          %574 = vst.msk [vmem:[#allocation2 + $0xe8] sm:$0xff] %vm544, -1e+30
          %575 = vst.msk [vmem:[#allocation2 + $0xf0] sm:$0xff] %vm544, -1e+30
          %576 = vst.msk [vmem:[#allocation2 + $0xf8] sm:$0xff] %vm544, -1e+30
          %577 = vst.msk [vmem:[#allocation3] sm:$0xff] %vm544, 0.0
          %578 = vst.msk [vmem:[#allocation3 + $0x8] sm:$0xff] %vm544, 0.0
          %579 = vst.msk [vmem:[#allocation3 + $0x10] sm:$0xff] %vm544, 0.0
          %580 = vst.msk [vmem:[#allocation3 + $0x18] sm:$0xff] %vm544, 0.0
          %581 = vst.msk [vmem:[#allocation3 + $0x20] sm:$0xff] %vm544, 0.0
          %582 = vst.msk [vmem:[#allocation3 + $0x28] sm:$0xff] %vm544, 0.0
          %583 = vst.msk [vmem:[#allocation3 + $0x30] sm:$0xff] %vm544, 0.0
          %584 = vst.msk [vmem:[#allocation3 + $0x38] sm:$0xff] %vm544, 0.0
          %585 = vst.msk [vmem:[#allocation3 + $0x40] sm:$0xff] %vm544, 0.0
          %586 = vst.msk [vmem:[#allocation3 + $0x48] sm:$0xff] %vm544, 0.0
          %587 = vst.msk [vmem:[#allocation3 + $0x50] sm:$0xff] %vm544, 0.0
          %588 = vst.msk [vmem:[#allocation3 + $0x58] sm:$0xff] %vm544, 0.0
          %589 = vst.msk [vmem:[#allocation3 + $0x60] sm:$0xff] %vm544, 0.0
          %590 = vst.msk [vmem:[#allocation3 + $0x68] sm:$0xff] %vm544, 0.0
          %591 = vst.msk [vmem:[#allocation3 + $0x70] sm:$0xff] %vm544, 0.0
          %592 = vst.msk [vmem:[#allocation3 + $0x78] sm:$0xff] %vm544, 0.0
          %593 = vst.msk [vmem:[#allocation3 + $0x80] sm:$0xff] %vm544, 0.0
          %594 = vst.msk [vmem:[#allocation3 + $0x88] sm:$0xff] %vm544, 0.0
          %595 = vst.msk [vmem:[#allocation3 + $0x90] sm:$0xff] %vm544, 0.0
          %596 = vst.msk [vmem:[#allocation3 + $0x98] sm:$0xff] %vm544, 0.0
          %597 = vst.msk [vmem:[#allocation3 + $0xa0] sm:$0xff] %vm544, 0.0
          %598 = vst.msk [vmem:[#allocation3 + $0xa8] sm:$0xff] %vm544, 0.0
          %599 = vst.msk [vmem:[#allocation3 + $0xb0] sm:$0xff] %vm544, 0.0
          %600 = vst.msk [vmem:[#allocation3 + $0xb8] sm:$0xff] %vm544, 0.0
          %601 = vst.msk [vmem:[#allocation3 + $0xc0] sm:$0xff] %vm544, 0.0
          %602 = vst.msk [vmem:[#allocation3 + $0xc8] sm:$0xff] %vm544, 0.0
          %603 = vst.msk [vmem:[#allocation3 + $0xd0] sm:$0xff] %vm544, 0.0
          %604 = vst.msk [vmem:[#allocation3 + $0xd8] sm:$0xff] %vm544, 0.0
          %605 = vst.msk [vmem:[#allocation3 + $0xe0] sm:$0xff] %vm544, 0.0
          %606 = vst.msk [vmem:[#allocation3 + $0xe8] sm:$0xff] %vm544, 0.0
          %607 = vst.msk [vmem:[#allocation3 + $0xf0] sm:$0xff] %vm544, 0.0
          %608 = vst.msk [vmem:[#allocation3 + $0xf8] sm:$0xff] %vm544, 0.0
          %609 = vst [vmem:[%s529] sm:$0xff] 0.0
          %610 = vst [vmem:[%s529 + $0x8] sm:$0xff] 0.0
          %611 = vst [vmem:[%s529 + $0x10] sm:$0xff] 0.0
          %612 = vst [vmem:[%s529 + $0x18] sm:$0xff] 0.0
          %613 = vst [vmem:[%s529 + $0x20] sm:$0xff] 0.0
          %614 = vst [vmem:[%s529 + $0x28] sm:$0xff] 0.0
          %615 = vst [vmem:[%s529 + $0x30] sm:$0xff] 0.0
          %616 = vst [vmem:[%s529 + $0x38] sm:$0xff] 0.0
          %617 = vst [vmem:[%s529 + $0x40] sm:$0xff] 0.0
          %618 = vst [vmem:[%s529 + $0x48] sm:$0xff] 0.0
          %619 = vst [vmem:[%s529 + $0x50] sm:$0xff] 0.0
          %620 = vst [vmem:[%s529 + $0x58] sm:$0xff] 0.0
          %621 = vst [vmem:[%s529 + $0x60] sm:$0xff] 0.0
          %622 = vst [vmem:[%s529 + $0x68] sm:$0xff] 0.0
          %623 = vst [vmem:[%s529 + $0x70] sm:$0xff] 0.0
          %624 = vst [vmem:[%s529 + $0x78] sm:$0xff] 0.0
          %625 = vst [vmem:[%s529 + $0x80] sm:$0xff] 0.0
          %626 = vst [vmem:[%s529 + $0x88] sm:$0xff] 0.0
          %627 = vst [vmem:[%s529 + $0x90] sm:$0xff] 0.0
          %628 = vst [vmem:[%s529 + $0x98] sm:$0xff] 0.0
          %629 = vst [vmem:[%s529 + $0xa0] sm:$0xff] 0.0
          %630 = vst [vmem:[%s529 + $0xa8] sm:$0xff] 0.0
          %631 = vst [vmem:[%s529 + $0xb0] sm:$0xff] 0.0
          %632 = vst [vmem:[%s529 + $0xb8] sm:$0xff] 0.0
          %633 = vst [vmem:[%s529 + $0xc0] sm:$0xff] 0.0
          %634 = vst [vmem:[%s529 + $0xc8] sm:$0xff] 0.0
          %635 = vst [vmem:[%s529 + $0xd0] sm:$0xff] 0.0
          %636 = vst [vmem:[%s529 + $0xd8] sm:$0xff] 0.0
          %637 = vst [vmem:[%s529 + $0xe0] sm:$0xff] 0.0
          %638 = vst [vmem:[%s529 + $0xe8] sm:$0xff] 0.0
          %639 = vst [vmem:[%s529 + $0xf0] sm:$0xff] 0.0
          %640 = vst [vmem:[%s529 + $0xf8] sm:$0xff] 0.0
        $region93: #{gat_forward.3} parent=84 // pred_fallthru
          _
        %s641 = smul.u32 %s31, 3
        %s642 = sadd.s32 %s641, %s32
        %s643 = sld [smem:[#allocation5 + %s642]]
        %p644 = scmp.ne.s32.totalorder %s643, 0
        // Predicated region
        $region94: #{gat_forward.3} parent=84 // pred_check
          %p645 = pneg %p644
        $region95: #{gat_forward.3} parent=84 // pred_check_branch
          %647 = sbr.rel (%p645) target = $region97
        $region96: #{gat_forward.3} parent=84 // pred_region
          %v648 = vld [vmem:[%s476] sm:$0xf]
          %v649 = vld [vmem:[%s476 + $0x4] sm:$0xf]
          %v650 = vld [vmem:[%s476 + $0x8] sm:$0xf]
          %v651 = vld [vmem:[%s476 + $0xc] sm:$0xf]
          %v652 = vld [vmem:[%s476 + $0x10] sm:$0xf]
          %v653 = vld [vmem:[%s476 + $0x14] sm:$0xf]
          %v654 = vld [vmem:[%s476 + $0x18] sm:$0xf]
          %v655 = vld [vmem:[%s476 + $0x1c] sm:$0xf]
          %v656 = vld [vmem:[%s476 + $0x20] sm:$0xf]
          %v657 = vld [vmem:[%s476 + $0x24] sm:$0xf]
          %v658 = vld [vmem:[%s476 + $0x28] sm:$0xf]
          %v659 = vld [vmem:[%s476 + $0x2c] sm:$0xf]
          %v660 = vld [vmem:[%s476 + $0x30] sm:$0xf]
          %v661 = vld [vmem:[%s476 + $0x34] sm:$0xf]
          %v662 = vld [vmem:[%s476 + $0x38] sm:$0xf]
          %v663 = vld [vmem:[%s476 + $0x3c] sm:$0xf]
          %v664 = vld [vmem:[%s476 + $0x40] sm:$0xf]
          %v665 = vld [vmem:[%s476 + $0x44] sm:$0xf]
          %v666 = vld [vmem:[%s476 + $0x48] sm:$0xf]
          %v667 = vld [vmem:[%s476 + $0x4c] sm:$0xf]
          %v668 = vld [vmem:[%s476 + $0x50] sm:$0xf]
          %v669 = vld [vmem:[%s476 + $0x54] sm:$0xf]
          %v670 = vld [vmem:[%s476 + $0x58] sm:$0xf]
          %v671 = vld [vmem:[%s476 + $0x5c] sm:$0xf]
          %v672 = vld [vmem:[%s476 + $0x60] sm:$0xf]
          %v673 = vld [vmem:[%s476 + $0x64] sm:$0xf]
          %v674 = vld [vmem:[%s476 + $0x68] sm:$0xf]
          %v675 = vld [vmem:[%s476 + $0x6c] sm:$0xf]
          %v676 = vld [vmem:[%s476 + $0x70] sm:$0xf]
          %v677 = vld [vmem:[%s476 + $0x74] sm:$0xf]
          %v678 = vld [vmem:[%s476 + $0x78] sm:$0xf]
          %v679 = vld [vmem:[%s476 + $0x7c] sm:$0xf]
          %vm680 = vnez %v648
          %vm681 = vnez %v649
          %vm682 = vnez %v650
          %vm683 = vnez %v651
          %vm684 = vnez %v652
          %vm685 = vnez %v653
          %vm686 = vnez %v654
          %vm687 = vnez %v655
          %vm688 = vnez %v656
          %vm689 = vnez %v657
          %vm690 = vnez %v658
          %vm691 = vnez %v659
          %vm692 = vnez %v660
          %vm693 = vnez %v661
          %vm694 = vnez %v662
          %vm695 = vnez %v663
          %vm696 = vnez %v664
          %vm697 = vnez %v665
          %vm698 = vnez %v666
          %vm699 = vnez %v667
          %vm700 = vnez %v668
          %vm701 = vnez %v669
          %vm702 = vnez %v670
          %vm703 = vnez %v671
          %vm704 = vnez %v672
          %vm705 = vnez %v673
          %vm706 = vnez %v674
          %vm707 = vnez %v675
          %vm708 = vnez %v676
          %vm709 = vnez %v677
          %vm710 = vnez %v678
          %vm711 = vnez %v679
          %s712 = smul.u32 %s32, 2
          %s713 = scalar_lea.vmem %s2, %s712
          %v714 = vld [vmem:[%s713] sm:$0x3]
          %v715 = vld [vmem:[%s521] sm:$0xff]
          %v716 = vld [vmem:[%s521 + $0x8] sm:$0xff]
          %v717 = vld [vmem:[%s521 + $0x10] sm:$0xff]
          %v718 = vld [vmem:[%s521 + $0x18] sm:$0xff]
          %v719 = vld [vmem:[%s521 + $0x20] sm:$0xff]
          %v720 = vld [vmem:[%s521 + $0x28] sm:$0xff]
          %v721 = vld [vmem:[%s521 + $0x30] sm:$0xff]
          %v722 = vld [vmem:[%s521 + $0x38] sm:$0xff]
          %v723 = vld [vmem:[%s521 + $0x40] sm:$0xff]
          %v724 = vld [vmem:[%s521 + $0x48] sm:$0xff]
          %v725 = vld [vmem:[%s521 + $0x50] sm:$0xff]
          %v726 = vld [vmem:[%s521 + $0x58] sm:$0xff]
          %v727 = vld [vmem:[%s521 + $0x60] sm:$0xff]
          %v728 = vld [vmem:[%s521 + $0x68] sm:$0xff]
          %v729 = vld [vmem:[%s521 + $0x70] sm:$0xff]
          %v730 = vld [vmem:[%s521 + $0x78] sm:$0xff]
          %v731 = vld [vmem:[%s521 + $0x80] sm:$0xff]
          %v732 = vld [vmem:[%s521 + $0x88] sm:$0xff]
          %v733 = vld [vmem:[%s521 + $0x90] sm:$0xff]
          %v734 = vld [vmem:[%s521 + $0x98] sm:$0xff]
          %v735 = vld [vmem:[%s521 + $0xa0] sm:$0xff]
          %v736 = vld [vmem:[%s521 + $0xa8] sm:$0xff]
          %v737 = vld [vmem:[%s521 + $0xb0] sm:$0xff]
          %v738 = vld [vmem:[%s521 + $0xb8] sm:$0xff]
          %v739 = vld [vmem:[%s521 + $0xc0] sm:$0xff]
          %v740 = vld [vmem:[%s521 + $0xc8] sm:$0xff]
          %v741 = vld [vmem:[%s521 + $0xd0] sm:$0xff]
          %v742 = vld [vmem:[%s521 + $0xd8] sm:$0xff]
          %v743 = vld [vmem:[%s521 + $0xe0] sm:$0xff]
          %v744 = vld [vmem:[%s521 + $0xe8] sm:$0xff]
          %v745 = vld [vmem:[%s521 + $0xf0] sm:$0xff]
          %v746 = vld [vmem:[%s521 + $0xf8] sm:$0xff]
          %748 = vset.pattern.permute.xlu0 0
          %749 = vperm.xlu0 %748, %v715
          %v750 = vpop.permute.xlu0 %749
          %753 = vset.pattern.permute.xlu0 0
          %754 = vperm.xlu0 %753, %v716
          %v755 = vpop.permute.xlu0 %754
          %758 = vset.pattern.permute.xlu0 0
          %759 = vperm.xlu0 %758, %v717
          %v760 = vpop.permute.xlu0 %759
          %763 = vset.pattern.permute.xlu0 0
          %764 = vperm.xlu0 %763, %v718
          %v765 = vpop.permute.xlu0 %764
          %768 = vset.pattern.permute.xlu0 0
          %769 = vperm.xlu0 %768, %v719
          %v770 = vpop.permute.xlu0 %769
          %773 = vset.pattern.permute.xlu0 0
          %774 = vperm.xlu0 %773, %v720
          %v775 = vpop.permute.xlu0 %774
          %778 = vset.pattern.permute.xlu0 0
          %779 = vperm.xlu0 %778, %v721
          %v780 = vpop.permute.xlu0 %779
          %783 = vset.pattern.permute.xlu0 0
          %784 = vperm.xlu0 %783, %v722
          %v785 = vpop.permute.xlu0 %784
          %788 = vset.pattern.permute.xlu0 0
          %789 = vperm.xlu0 %788, %v723
          %v790 = vpop.permute.xlu0 %789
          %793 = vset.pattern.permute.xlu0 0
          %794 = vperm.xlu0 %793, %v724
          %v795 = vpop.permute.xlu0 %794
          %798 = vset.pattern.permute.xlu0 0
          %799 = vperm.xlu0 %798, %v725
          %v800 = vpop.permute.xlu0 %799
          %803 = vset.pattern.permute.xlu0 0
          %804 = vperm.xlu0 %803, %v726
          %v805 = vpop.permute.xlu0 %804
          %808 = vset.pattern.permute.xlu0 0
          %809 = vperm.xlu0 %808, %v727
          %v810 = vpop.permute.xlu0 %809
          %813 = vset.pattern.permute.xlu0 0
          %814 = vperm.xlu0 %813, %v728
          %v815 = vpop.permute.xlu0 %814
          %818 = vset.pattern.permute.xlu0 0
          %819 = vperm.xlu0 %818, %v729
          %v820 = vpop.permute.xlu0 %819
          %823 = vset.pattern.permute.xlu0 0
          %824 = vperm.xlu0 %823, %v730
          %v825 = vpop.permute.xlu0 %824
          %828 = vset.pattern.permute.xlu0 0
          %829 = vperm.xlu0 %828, %v731
          %v830 = vpop.permute.xlu0 %829
          %833 = vset.pattern.permute.xlu0 0
          %834 = vperm.xlu0 %833, %v732
          %v835 = vpop.permute.xlu0 %834
          %838 = vset.pattern.permute.xlu0 0
          %839 = vperm.xlu0 %838, %v733
          %v840 = vpop.permute.xlu0 %839
          %843 = vset.pattern.permute.xlu0 0
          %844 = vperm.xlu0 %843, %v734
          %v845 = vpop.permute.xlu0 %844
          %848 = vset.pattern.permute.xlu0 0
          %849 = vperm.xlu0 %848, %v735
          %v850 = vpop.permute.xlu0 %849
          %853 = vset.pattern.permute.xlu0 0
          %854 = vperm.xlu0 %853, %v736
          %v855 = vpop.permute.xlu0 %854
          %858 = vset.pattern.permute.xlu0 0
          %859 = vperm.xlu0 %858, %v737
          %v860 = vpop.permute.xlu0 %859
          %863 = vset.pattern.permute.xlu0 0
          %864 = vperm.xlu0 %863, %v738
          %v865 = vpop.permute.xlu0 %864
          %868 = vset.pattern.permute.xlu0 0
          %869 = vperm.xlu0 %868, %v739
          %v870 = vpop.permute.xlu0 %869
          %873 = vset.pattern.permute.xlu0 0
          %874 = vperm.xlu0 %873, %v740
          %v875 = vpop.permute.xlu0 %874
          %878 = vset.pattern.permute.xlu0 0
          %879 = vperm.xlu0 %878, %v741
          %v880 = vpop.permute.xlu0 %879
          %883 = vset.pattern.permute.xlu0 0
          %884 = vperm.xlu0 %883, %v742
          %v885 = vpop.permute.xlu0 %884
          %888 = vset.pattern.permute.xlu0 0
          %889 = vperm.xlu0 %888, %v743
          %v890 = vpop.permute.xlu0 %889
          %893 = vset.pattern.permute.xlu0 0
          %894 = vperm.xlu0 %893, %v744
          %v895 = vpop.permute.xlu0 %894
          %898 = vset.pattern.permute.xlu0 0
          %899 = vperm.xlu0 %898, %v745
          %v900 = vpop.permute.xlu0 %899
          %903 = vset.pattern.permute.xlu0 0
          %904 = vperm.xlu0 %903, %v746
          %v905 = vpop.permute.xlu0 %904
          %v908 = vlaneseq
          %v909 = vshrl.u32 %v908, 7
          %v910 = vsub.s32 0, %v909
          %v911 = vrot.slane %v714, %v910
          %v912 = vlaneseq
          %v913 = vshrl.u32 %v912, 7
          %v914 = vsub.s32 1, %v913
          %v915 = vrot.slane %v714, %v914
          %v918 = vadd.f32 %v750, %v911
          %v919 = vadd.f32 %v750, %v915
          %v920 = vadd.f32 %v755, %v911
          %v921 = vadd.f32 %v755, %v915
          %v922 = vadd.f32 %v760, %v911
          %v923 = vadd.f32 %v760, %v915
          %v924 = vadd.f32 %v765, %v911
          %v925 = vadd.f32 %v765, %v915
          %v926 = vadd.f32 %v770, %v911
          %v927 = vadd.f32 %v770, %v915
          %v928 = vadd.f32 %v775, %v911
          %v929 = vadd.f32 %v775, %v915
          %v930 = vadd.f32 %v780, %v911
          %v931 = vadd.f32 %v780, %v915
          %v932 = vadd.f32 %v785, %v911
          %v933 = vadd.f32 %v785, %v915
          %v934 = vadd.f32 %v790, %v911
          %v935 = vadd.f32 %v790, %v915
          %v936 = vadd.f32 %v795, %v911
          %v937 = vadd.f32 %v795, %v915
          %v938 = vadd.f32 %v800, %v911
          %v939 = vadd.f32 %v800, %v915
          %v940 = vadd.f32 %v805, %v911
          %v941 = vadd.f32 %v805, %v915
          %v942 = vadd.f32 %v810, %v911
          %v943 = vadd.f32 %v810, %v915
          %v944 = vadd.f32 %v815, %v911
          %v945 = vadd.f32 %v815, %v915
          %v946 = vadd.f32 %v820, %v911
          %v947 = vadd.f32 %v820, %v915
          %v948 = vadd.f32 %v825, %v911
          %v949 = vadd.f32 %v825, %v915
          %v950 = vadd.f32 %v830, %v911
          %v951 = vadd.f32 %v830, %v915
          %v952 = vadd.f32 %v835, %v911
          %v953 = vadd.f32 %v835, %v915
          %v954 = vadd.f32 %v840, %v911
          %v955 = vadd.f32 %v840, %v915
          %v956 = vadd.f32 %v845, %v911
          %v957 = vadd.f32 %v845, %v915
          %v958 = vadd.f32 %v850, %v911
          %v959 = vadd.f32 %v850, %v915
          %v960 = vadd.f32 %v855, %v911
          %v961 = vadd.f32 %v855, %v915
          %v962 = vadd.f32 %v860, %v911
          %v963 = vadd.f32 %v860, %v915
          %v964 = vadd.f32 %v865, %v911
          %v965 = vadd.f32 %v865, %v915
          %v966 = vadd.f32 %v870, %v911
          %v967 = vadd.f32 %v870, %v915
          %v968 = vadd.f32 %v875, %v911
          %v969 = vadd.f32 %v875, %v915
          %v970 = vadd.f32 %v880, %v911
          %v971 = vadd.f32 %v880, %v915
          %v972 = vadd.f32 %v885, %v911
          %v973 = vadd.f32 %v885, %v915
          %v974 = vadd.f32 %v890, %v911
          %v975 = vadd.f32 %v890, %v915
          %v976 = vadd.f32 %v895, %v911
          %v977 = vadd.f32 %v895, %v915
          %v978 = vadd.f32 %v900, %v911
          %v979 = vadd.f32 %v900, %v915
          %v980 = vadd.f32 %v905, %v911
          %v981 = vadd.f32 %v905, %v915
          %vm982 = vcmp.ge.f32.partialorder %v918, 0.0
          %vm983 = vcmp.ge.f32.partialorder %v919, 0.0
          %vm984 = vcmp.ge.f32.partialorder %v920, 0.0
          %vm985 = vcmp.ge.f32.partialorder %v921, 0.0
          %vm986 = vcmp.ge.f32.partialorder %v922, 0.0
          %vm987 = vcmp.ge.f32.partialorder %v923, 0.0
          %vm988 = vcmp.ge.f32.partialorder %v924, 0.0
          %vm989 = vcmp.ge.f32.partialorder %v925, 0.0
          %vm990 = vcmp.ge.f32.partialorder %v926, 0.0
          %vm991 = vcmp.ge.f32.partialorder %v927, 0.0
          %vm992 = vcmp.ge.f32.partialorder %v928, 0.0
          %vm993 = vcmp.ge.f32.partialorder %v929, 0.0
          %vm994 = vcmp.ge.f32.partialorder %v930, 0.0
          %vm995 = vcmp.ge.f32.partialorder %v931, 0.0
          %vm996 = vcmp.ge.f32.partialorder %v932, 0.0
          %vm997 = vcmp.ge.f32.partialorder %v933, 0.0
          %vm998 = vcmp.ge.f32.partialorder %v934, 0.0
          %vm999 = vcmp.ge.f32.partialorder %v935, 0.0
          %vm1000 = vcmp.ge.f32.partialorder %v936, 0.0
          %vm1001 = vcmp.ge.f32.partialorder %v937, 0.0
          %vm1002 = vcmp.ge.f32.partialorder %v938, 0.0
          %vm1003 = vcmp.ge.f32.partialorder %v939, 0.0
          %vm1004 = vcmp.ge.f32.partialorder %v940, 0.0
          %vm1005 = vcmp.ge.f32.partialorder %v941, 0.0
          %vm1006 = vcmp.ge.f32.partialorder %v942, 0.0
          %vm1007 = vcmp.ge.f32.partialorder %v943, 0.0
          %vm1008 = vcmp.ge.f32.partialorder %v944, 0.0
          %vm1009 = vcmp.ge.f32.partialorder %v945, 0.0
          %vm1010 = vcmp.ge.f32.partialorder %v946, 0.0
          %vm1011 = vcmp.ge.f32.partialorder %v947, 0.0
          %vm1012 = vcmp.ge.f32.partialorder %v948, 0.0
          %vm1013 = vcmp.ge.f32.partialorder %v949, 0.0
          %vm1014 = vcmp.ge.f32.partialorder %v950, 0.0
          %vm1015 = vcmp.ge.f32.partialorder %v951, 0.0
          %vm1016 = vcmp.ge.f32.partialorder %v952, 0.0
          %vm1017 = vcmp.ge.f32.partialorder %v953, 0.0
          %vm1018 = vcmp.ge.f32.partialorder %v954, 0.0
          %vm1019 = vcmp.ge.f32.partialorder %v955, 0.0
          %vm1020 = vcmp.ge.f32.partialorder %v956, 0.0
          %vm1021 = vcmp.ge.f32.partialorder %v957, 0.0
          %vm1022 = vcmp.ge.f32.partialorder %v958, 0.0
          %vm1023 = vcmp.ge.f32.partialorder %v959, 0.0
          %vm1024 = vcmp.ge.f32.partialorder %v960, 0.0
          %vm1025 = vcmp.ge.f32.partialorder %v961, 0.0
          %vm1026 = vcmp.ge.f32.partialorder %v962, 0.0
          %vm1027 = vcmp.ge.f32.partialorder %v963, 0.0
          %vm1028 = vcmp.ge.f32.partialorder %v964, 0.0
          %vm1029 = vcmp.ge.f32.partialorder %v965, 0.0
          %vm1030 = vcmp.ge.f32.partialorder %v966, 0.0
          %vm1031 = vcmp.ge.f32.partialorder %v967, 0.0
          %vm1032 = vcmp.ge.f32.partialorder %v968, 0.0
          %vm1033 = vcmp.ge.f32.partialorder %v969, 0.0
          %vm1034 = vcmp.ge.f32.partialorder %v970, 0.0
          %vm1035 = vcmp.ge.f32.partialorder %v971, 0.0
          %vm1036 = vcmp.ge.f32.partialorder %v972, 0.0
          %vm1037 = vcmp.ge.f32.partialorder %v973, 0.0
          %vm1038 = vcmp.ge.f32.partialorder %v974, 0.0
          %vm1039 = vcmp.ge.f32.partialorder %v975, 0.0
          %vm1040 = vcmp.ge.f32.partialorder %v976, 0.0
          %vm1041 = vcmp.ge.f32.partialorder %v977, 0.0
          %vm1042 = vcmp.ge.f32.partialorder %v978, 0.0
          %vm1043 = vcmp.ge.f32.partialorder %v979, 0.0
          %vm1044 = vcmp.ge.f32.partialorder %v980, 0.0
          %vm1045 = vcmp.ge.f32.partialorder %v981, 0.0
          %v1046 = vmul.f32 %v918, 0.2
          %v1047 = vmul.f32 %v919, 0.2
          %v1048 = vmul.f32 %v920, 0.2
          %v1049 = vmul.f32 %v921, 0.2
          %v1050 = vmul.f32 %v922, 0.2
          %v1051 = vmul.f32 %v923, 0.2
          %v1052 = vmul.f32 %v924, 0.2
          %v1053 = vmul.f32 %v925, 0.2
          %v1054 = vmul.f32 %v926, 0.2
          %v1055 = vmul.f32 %v927, 0.2
          %v1056 = vmul.f32 %v928, 0.2
          %v1057 = vmul.f32 %v929, 0.2
          %v1058 = vmul.f32 %v930, 0.2
          %v1059 = vmul.f32 %v931, 0.2
          %v1060 = vmul.f32 %v932, 0.2
          %v1061 = vmul.f32 %v933, 0.2
          %v1062 = vmul.f32 %v934, 0.2
          %v1063 = vmul.f32 %v935, 0.2
          %v1064 = vmul.f32 %v936, 0.2
          %v1065 = vmul.f32 %v937, 0.2
          %v1066 = vmul.f32 %v938, 0.2
          %v1067 = vmul.f32 %v939, 0.2
          %v1068 = vmul.f32 %v940, 0.2
          %v1069 = vmul.f32 %v941, 0.2
          %v1070 = vmul.f32 %v942, 0.2
          %v1071 = vmul.f32 %v943, 0.2
          %v1072 = vmul.f32 %v944, 0.2
          %v1073 = vmul.f32 %v945, 0.2
          %v1074 = vmul.f32 %v946, 0.2
          %v1075 = vmul.f32 %v947, 0.2
          %v1076 = vmul.f32 %v948, 0.2
          %v1077 = vmul.f32 %v949, 0.2
          %v1078 = vmul.f32 %v950, 0.2
          %v1079 = vmul.f32 %v951, 0.2
          %v1080 = vmul.f32 %v952, 0.2
          %v1081 = vmul.f32 %v953, 0.2
          %v1082 = vmul.f32 %v954, 0.2
          %v1083 = vmul.f32 %v955, 0.2
          %v1084 = vmul.f32 %v956, 0.2
          %v1085 = vmul.f32 %v957, 0.2
          %v1086 = vmul.f32 %v958, 0.2
          %v1087 = vmul.f32 %v959, 0.2
          %v1088 = vmul.f32 %v960, 0.2
          %v1089 = vmul.f32 %v961, 0.2
          %v1090 = vmul.f32 %v962, 0.2
          %v1091 = vmul.f32 %v963, 0.2
          %v1092 = vmul.f32 %v964, 0.2
          %v1093 = vmul.f32 %v965, 0.2
          %v1094 = vmul.f32 %v966, 0.2
          %v1095 = vmul.f32 %v967, 0.2
          %v1096 = vmul.f32 %v968, 0.2
          %v1097 = vmul.f32 %v969, 0.2
          %v1098 = vmul.f32 %v970, 0.2
          %v1099 = vmul.f32 %v971, 0.2
          %v1100 = vmul.f32 %v972, 0.2
          %v1101 = vmul.f32 %v973, 0.2
          %v1102 = vmul.f32 %v974, 0.2
          %v1103 = vmul.f32 %v975, 0.2
          %v1104 = vmul.f32 %v976, 0.2
          %v1105 = vmul.f32 %v977, 0.2
          %v1106 = vmul.f32 %v978, 0.2
          %v1107 = vmul.f32 %v979, 0.2
          %v1108 = vmul.f32 %v980, 0.2
          %v1109 = vmul.f32 %v981, 0.2
          %v1110 = vsel %vm982, %v918, %v1046
          %v1111 = vsel %vm983, %v919, %v1047
          %v1112 = vsel %vm984, %v920, %v1048
          %v1113 = vsel %vm985, %v921, %v1049
          %v1114 = vsel %vm986, %v922, %v1050
          %v1115 = vsel %vm987, %v923, %v1051
          %v1116 = vsel %vm988, %v924, %v1052
          %v1117 = vsel %vm989, %v925, %v1053
          %v1118 = vsel %vm990, %v926, %v1054
          %v1119 = vsel %vm991, %v927, %v1055
          %v1120 = vsel %vm992, %v928, %v1056
          %v1121 = vsel %vm993, %v929, %v1057
          %v1122 = vsel %vm994, %v930, %v1058
          %v1123 = vsel %vm995, %v931, %v1059
          %v1124 = vsel %vm996, %v932, %v1060
          %v1125 = vsel %vm997, %v933, %v1061
          %v1126 = vsel %vm998, %v934, %v1062
          %v1127 = vsel %vm999, %v935, %v1063
          %v1128 = vsel %vm1000, %v936, %v1064
          %v1129 = vsel %vm1001, %v937, %v1065
          %v1130 = vsel %vm1002, %v938, %v1066
          %v1131 = vsel %vm1003, %v939, %v1067
          %v1132 = vsel %vm1004, %v940, %v1068
          %v1133 = vsel %vm1005, %v941, %v1069
          %v1134 = vsel %vm1006, %v942, %v1070
          %v1135 = vsel %vm1007, %v943, %v1071
          %v1136 = vsel %vm1008, %v944, %v1072
          %v1137 = vsel %vm1009, %v945, %v1073
          %v1138 = vsel %vm1010, %v946, %v1074
          %v1139 = vsel %vm1011, %v947, %v1075
          %v1140 = vsel %vm1012, %v948, %v1076
          %v1141 = vsel %vm1013, %v949, %v1077
          %v1142 = vsel %vm1014, %v950, %v1078
          %v1143 = vsel %vm1015, %v951, %v1079
          %v1144 = vsel %vm1016, %v952, %v1080
          %v1145 = vsel %vm1017, %v953, %v1081
          %v1146 = vsel %vm1018, %v954, %v1082
          %v1147 = vsel %vm1019, %v955, %v1083
          %v1148 = vsel %vm1020, %v956, %v1084
          %v1149 = vsel %vm1021, %v957, %v1085
          %v1150 = vsel %vm1022, %v958, %v1086
          %v1151 = vsel %vm1023, %v959, %v1087
          %v1152 = vsel %vm1024, %v960, %v1088
          %v1153 = vsel %vm1025, %v961, %v1089
          %v1154 = vsel %vm1026, %v962, %v1090
          %v1155 = vsel %vm1027, %v963, %v1091
          %v1156 = vsel %vm1028, %v964, %v1092
          %v1157 = vsel %vm1029, %v965, %v1093
          %v1158 = vsel %vm1030, %v966, %v1094
          %v1159 = vsel %vm1031, %v967, %v1095
          %v1160 = vsel %vm1032, %v968, %v1096
          %v1161 = vsel %vm1033, %v969, %v1097
          %v1162 = vsel %vm1034, %v970, %v1098
          %v1163 = vsel %vm1035, %v971, %v1099
          %v1164 = vsel %vm1036, %v972, %v1100
          %v1165 = vsel %vm1037, %v973, %v1101
          %v1166 = vsel %vm1038, %v974, %v1102
          %v1167 = vsel %vm1039, %v975, %v1103
          %v1168 = vsel %vm1040, %v976, %v1104
          %v1169 = vsel %vm1041, %v977, %v1105
          %v1170 = vsel %vm1042, %v978, %v1106
          %v1171 = vsel %vm1043, %v979, %v1107
          %v1172 = vsel %vm1044, %v980, %v1108
          %v1173 = vsel %vm1045, %v981, %v1109
          %v1174 = vsel %vm680, 16843009, 0
          %v1175 = vsel %vm681, 16843009, 0
          %v1176 = vsel %vm682, 16843009, 0
          %v1177 = vsel %vm683, 16843009, 0
          %v1178 = vsel %vm684, 16843009, 0
          %v1179 = vsel %vm685, 16843009, 0
          %v1180 = vsel %vm686, 16843009, 0
          %v1181 = vsel %vm687, 16843009, 0
          %v1182 = vsel %vm688, 16843009, 0
          %v1183 = vsel %vm689, 16843009, 0
          %v1184 = vsel %vm690, 16843009, 0
          %v1185 = vsel %vm691, 16843009, 0
          %v1186 = vsel %vm692, 16843009, 0
          %v1187 = vsel %vm693, 16843009, 0
          %v1188 = vsel %vm694, 16843009, 0
          %v1189 = vsel %vm695, 16843009, 0
          %v1190 = vsel %vm696, 16843009, 0
          %v1191 = vsel %vm697, 16843009, 0
          %v1192 = vsel %vm698, 16843009, 0
          %v1193 = vsel %vm699, 16843009, 0
          %v1194 = vsel %vm700, 16843009, 0
          %v1195 = vsel %vm701, 16843009, 0
          %v1196 = vsel %vm702, 16843009, 0
          %v1197 = vsel %vm703, 16843009, 0
          %v1198 = vsel %vm704, 16843009, 0
          %v1199 = vsel %vm705, 16843009, 0
          %v1200 = vsel %vm706, 16843009, 0
          %v1201 = vsel %vm707, 16843009, 0
          %v1202 = vsel %vm708, 16843009, 0
          %v1203 = vsel %vm709, 16843009, 0
          %v1204 = vsel %vm710, 16843009, 0
          %v1205 = vsel %vm711, 16843009, 0
          %v1206 = vunpack.c.0.s8 %v1174
          %v1207 = vunpack.c.1.s8 %v1174
          %v1208 = vunpack.c.0.s8 %v1175
          %v1209 = vunpack.c.1.s8 %v1175
          %v1210 = vunpack.c.0.s8 %v1176
          %v1211 = vunpack.c.1.s8 %v1176
          %v1212 = vunpack.c.0.s8 %v1177
          %v1213 = vunpack.c.1.s8 %v1177
          %v1214 = vunpack.c.0.s8 %v1178
          %v1215 = vunpack.c.1.s8 %v1178
          %v1216 = vunpack.c.0.s8 %v1179
          %v1217 = vunpack.c.1.s8 %v1179
          %v1218 = vunpack.c.0.s8 %v1180
          %v1219 = vunpack.c.1.s8 %v1180
          %v1220 = vunpack.c.0.s8 %v1181
          %v1221 = vunpack.c.1.s8 %v1181
          %v1222 = vunpack.c.0.s8 %v1182
          %v1223 = vunpack.c.1.s8 %v1182
          %v1224 = vunpack.c.0.s8 %v1183
          %v1225 = vunpack.c.1.s8 %v1183
          %v1226 = vunpack.c.0.s8 %v1184
          %v1227 = vunpack.c.1.s8 %v1184
          %v1228 = vunpack.c.0.s8 %v1185
          %v1229 = vunpack.c.1.s8 %v1185
          %v1230 = vunpack.c.0.s8 %v1186
          %v1231 = vunpack.c.1.s8 %v1186
          %v1232 = vunpack.c.0.s8 %v1187
          %v1233 = vunpack.c.1.s8 %v1187
          %v1234 = vunpack.c.0.s8 %v1188
          %v1235 = vunpack.c.1.s8 %v1188
          %v1236 = vunpack.c.0.s8 %v1189
          %v1237 = vunpack.c.1.s8 %v1189
          %v1238 = vunpack.c.0.s8 %v1190
          %v1239 = vunpack.c.1.s8 %v1190
          %v1240 = vunpack.c.0.s8 %v1191
          %v1241 = vunpack.c.1.s8 %v1191
          %v1242 = vunpack.c.0.s8 %v1192
          %v1243 = vunpack.c.1.s8 %v1192
          %v1244 = vunpack.c.0.s8 %v1193
          %v1245 = vunpack.c.1.s8 %v1193
          %v1246 = vunpack.c.0.s8 %v1194
          %v1247 = vunpack.c.1.s8 %v1194
          %v1248 = vunpack.c.0.s8 %v1195
          %v1249 = vunpack.c.1.s8 %v1195
          %v1250 = vunpack.c.0.s8 %v1196
          %v1251 = vunpack.c.1.s8 %v1196
          %v1252 = vunpack.c.0.s8 %v1197
          %v1253 = vunpack.c.1.s8 %v1197
          %v1254 = vunpack.c.0.s8 %v1198
          %v1255 = vunpack.c.1.s8 %v1198
          %v1256 = vunpack.c.0.s8 %v1199
          %v1257 = vunpack.c.1.s8 %v1199
          %v1258 = vunpack.c.0.s8 %v1200
          %v1259 = vunpack.c.1.s8 %v1200
          %v1260 = vunpack.c.0.s8 %v1201
          %v1261 = vunpack.c.1.s8 %v1201
          %v1262 = vunpack.c.0.s8 %v1202
          %v1263 = vunpack.c.1.s8 %v1202
          %v1264 = vunpack.c.0.s8 %v1203
          %v1265 = vunpack.c.1.s8 %v1203
          %v1266 = vunpack.c.0.s8 %v1204
          %v1267 = vunpack.c.1.s8 %v1204
          %v1268 = vunpack.c.0.s8 %v1205
          %v1269 = vunpack.c.1.s8 %v1205
          %vm1270 = vcmp.ne.s32.totalorder %v1206, 0
          %vm1271 = vcmp.ne.s32.totalorder %v1207, 0
          %vm1272 = vcmp.ne.s32.totalorder %v1208, 0
          %vm1273 = vcmp.ne.s32.totalorder %v1209, 0
          %vm1274 = vcmp.ne.s32.totalorder %v1210, 0
          %vm1275 = vcmp.ne.s32.totalorder %v1211, 0
          %vm1276 = vcmp.ne.s32.totalorder %v1212, 0
          %vm1277 = vcmp.ne.s32.totalorder %v1213, 0
          %vm1278 = vcmp.ne.s32.totalorder %v1214, 0
          %vm1279 = vcmp.ne.s32.totalorder %v1215, 0
          %vm1280 = vcmp.ne.s32.totalorder %v1216, 0
          %vm1281 = vcmp.ne.s32.totalorder %v1217, 0
          %vm1282 = vcmp.ne.s32.totalorder %v1218, 0
          %vm1283 = vcmp.ne.s32.totalorder %v1219, 0
          %vm1284 = vcmp.ne.s32.totalorder %v1220, 0
          %vm1285 = vcmp.ne.s32.totalorder %v1221, 0
          %vm1286 = vcmp.ne.s32.totalorder %v1222, 0
          %vm1287 = vcmp.ne.s32.totalorder %v1223, 0
          %vm1288 = vcmp.ne.s32.totalorder %v1224, 0
          %vm1289 = vcmp.ne.s32.totalorder %v1225, 0
          %vm1290 = vcmp.ne.s32.totalorder %v1226, 0
          %vm1291 = vcmp.ne.s32.totalorder %v1227, 0
          %vm1292 = vcmp.ne.s32.totalorder %v1228, 0
          %vm1293 = vcmp.ne.s32.totalorder %v1229, 0
          %vm1294 = vcmp.ne.s32.totalorder %v1230, 0
          %vm1295 = vcmp.ne.s32.totalorder %v1231, 0
          %vm1296 = vcmp.ne.s32.totalorder %v1232, 0
          %vm1297 = vcmp.ne.s32.totalorder %v1233, 0
          %vm1298 = vcmp.ne.s32.totalorder %v1234, 0
          %vm1299 = vcmp.ne.s32.totalorder %v1235, 0
          %vm1300 = vcmp.ne.s32.totalorder %v1236, 0
          %vm1301 = vcmp.ne.s32.totalorder %v1237, 0
          %vm1302 = vcmp.ne.s32.totalorder %v1238, 0
          %vm1303 = vcmp.ne.s32.totalorder %v1239, 0
          %vm1304 = vcmp.ne.s32.totalorder %v1240, 0
          %vm1305 = vcmp.ne.s32.totalorder %v1241, 0
          %vm1306 = vcmp.ne.s32.totalorder %v1242, 0
          %vm1307 = vcmp.ne.s32.totalorder %v1243, 0
          %vm1308 = vcmp.ne.s32.totalorder %v1244, 0
          %vm1309 = vcmp.ne.s32.totalorder %v1245, 0
          %vm1310 = vcmp.ne.s32.totalorder %v1246, 0
          %vm1311 = vcmp.ne.s32.totalorder %v1247, 0
          %vm1312 = vcmp.ne.s32.totalorder %v1248, 0
          %vm1313 = vcmp.ne.s32.totalorder %v1249, 0
          %vm1314 = vcmp.ne.s32.totalorder %v1250, 0
          %vm1315 = vcmp.ne.s32.totalorder %v1251, 0
          %vm1316 = vcmp.ne.s32.totalorder %v1252, 0
          %vm1317 = vcmp.ne.s32.totalorder %v1253, 0
          %vm1318 = vcmp.ne.s32.totalorder %v1254, 0
          %vm1319 = vcmp.ne.s32.totalorder %v1255, 0
          %vm1320 = vcmp.ne.s32.totalorder %v1256, 0
          %vm1321 = vcmp.ne.s32.totalorder %v1257, 0
          %vm1322 = vcmp.ne.s32.totalorder %v1258, 0
          %vm1323 = vcmp.ne.s32.totalorder %v1259, 0
          %vm1324 = vcmp.ne.s32.totalorder %v1260, 0
          %vm1325 = vcmp.ne.s32.totalorder %v1261, 0
          %vm1326 = vcmp.ne.s32.totalorder %v1262, 0
          %vm1327 = vcmp.ne.s32.totalorder %v1263, 0
          %vm1328 = vcmp.ne.s32.totalorder %v1264, 0
          %vm1329 = vcmp.ne.s32.totalorder %v1265, 0
          %vm1330 = vcmp.ne.s32.totalorder %v1266, 0
          %vm1331 = vcmp.ne.s32.totalorder %v1267, 0
          %vm1332 = vcmp.ne.s32.totalorder %v1268, 0
          %vm1333 = vcmp.ne.s32.totalorder %v1269, 0
          %v1334 = vsel %vm1270, %v1110, -1e+30
          %v1335 = vsel %vm1271, %v1111, -1e+30
          %v1336 = vsel %vm1272, %v1112, -1e+30
          %v1337 = vsel %vm1273, %v1113, -1e+30
          %v1338 = vsel %vm1274, %v1114, -1e+30
          %v1339 = vsel %vm1275, %v1115, -1e+30
          %v1340 = vsel %vm1276, %v1116, -1e+30
          %v1341 = vsel %vm1277, %v1117, -1e+30
          %v1342 = vsel %vm1278, %v1118, -1e+30
          %v1343 = vsel %vm1279, %v1119, -1e+30
          %v1344 = vsel %vm1280, %v1120, -1e+30
          %v1345 = vsel %vm1281, %v1121, -1e+30
          %v1346 = vsel %vm1282, %v1122, -1e+30
          %v1347 = vsel %vm1283, %v1123, -1e+30
          %v1348 = vsel %vm1284, %v1124, -1e+30
          %v1349 = vsel %vm1285, %v1125, -1e+30
          %v1350 = vsel %vm1286, %v1126, -1e+30
          %v1351 = vsel %vm1287, %v1127, -1e+30
          %v1352 = vsel %vm1288, %v1128, -1e+30
          %v1353 = vsel %vm1289, %v1129, -1e+30
          %v1354 = vsel %vm1290, %v1130, -1e+30
          %v1355 = vsel %vm1291, %v1131, -1e+30
          %v1356 = vsel %vm1292, %v1132, -1e+30
          %v1357 = vsel %vm1293, %v1133, -1e+30
          %v1358 = vsel %vm1294, %v1134, -1e+30
          %v1359 = vsel %vm1295, %v1135, -1e+30
          %v1360 = vsel %vm1296, %v1136, -1e+30
          %v1361 = vsel %vm1297, %v1137, -1e+30
          %v1362 = vsel %vm1298, %v1138, -1e+30
          %v1363 = vsel %vm1299, %v1139, -1e+30
          %v1364 = vsel %vm1300, %v1140, -1e+30
          %v1365 = vsel %vm1301, %v1141, -1e+30
          %v1366 = vsel %vm1302, %v1142, -1e+30
          %v1367 = vsel %vm1303, %v1143, -1e+30
          %v1368 = vsel %vm1304, %v1144, -1e+30
          %v1369 = vsel %vm1305, %v1145, -1e+30
          %v1370 = vsel %vm1306, %v1146, -1e+30
          %v1371 = vsel %vm1307, %v1147, -1e+30
          %v1372 = vsel %vm1308, %v1148, -1e+30
          %v1373 = vsel %vm1309, %v1149, -1e+30
          %v1374 = vsel %vm1310, %v1150, -1e+30
          %v1375 = vsel %vm1311, %v1151, -1e+30
          %v1376 = vsel %vm1312, %v1152, -1e+30
          %v1377 = vsel %vm1313, %v1153, -1e+30
          %v1378 = vsel %vm1314, %v1154, -1e+30
          %v1379 = vsel %vm1315, %v1155, -1e+30
          %v1380 = vsel %vm1316, %v1156, -1e+30
          %v1381 = vsel %vm1317, %v1157, -1e+30
          %v1382 = vsel %vm1318, %v1158, -1e+30
          %v1383 = vsel %vm1319, %v1159, -1e+30
          %v1384 = vsel %vm1320, %v1160, -1e+30
          %v1385 = vsel %vm1321, %v1161, -1e+30
          %v1386 = vsel %vm1322, %v1162, -1e+30
          %v1387 = vsel %vm1323, %v1163, -1e+30
          %v1388 = vsel %vm1324, %v1164, -1e+30
          %v1389 = vsel %vm1325, %v1165, -1e+30
          %v1390 = vsel %vm1326, %v1166, -1e+30
          %v1391 = vsel %vm1327, %v1167, -1e+30
          %v1392 = vsel %vm1328, %v1168, -1e+30
          %v1393 = vsel %vm1329, %v1169, -1e+30
          %v1394 = vsel %vm1330, %v1170, -1e+30
          %v1395 = vsel %vm1331, %v1171, -1e+30
          %v1396 = vsel %vm1332, %v1172, -1e+30
          %v1397 = vsel %vm1333, %v1173, -1e+30
          %v1398 = vld [vmem:[#allocation2] sm:$0xff]
          %v1399 = vld [vmem:[#allocation2 + $0x8] sm:$0xff]
          %v1400 = vld [vmem:[#allocation2 + $0x10] sm:$0xff]
          %v1401 = vld [vmem:[#allocation2 + $0x18] sm:$0xff]
          %v1402 = vld [vmem:[#allocation2 + $0x20] sm:$0xff]
          %v1403 = vld [vmem:[#allocation2 + $0x28] sm:$0xff]
          %v1404 = vld [vmem:[#allocation2 + $0x30] sm:$0xff]
          %v1405 = vld [vmem:[#allocation2 + $0x38] sm:$0xff]
          %v1406 = vld [vmem:[#allocation2 + $0x40] sm:$0xff]
          %v1407 = vld [vmem:[#allocation2 + $0x48] sm:$0xff]
          %v1408 = vld [vmem:[#allocation2 + $0x50] sm:$0xff]
          %v1409 = vld [vmem:[#allocation2 + $0x58] sm:$0xff]
          %v1410 = vld [vmem:[#allocation2 + $0x60] sm:$0xff]
          %v1411 = vld [vmem:[#allocation2 + $0x68] sm:$0xff]
          %v1412 = vld [vmem:[#allocation2 + $0x70] sm:$0xff]
          %v1413 = vld [vmem:[#allocation2 + $0x78] sm:$0xff]
          %v1414 = vld [vmem:[#allocation2 + $0x80] sm:$0xff]
          %v1415 = vld [vmem:[#allocation2 + $0x88] sm:$0xff]
          %v1416 = vld [vmem:[#allocation2 + $0x90] sm:$0xff]
          %v1417 = vld [vmem:[#allocation2 + $0x98] sm:$0xff]
          %v1418 = vld [vmem:[#allocation2 + $0xa0] sm:$0xff]
          %v1419 = vld [vmem:[#allocation2 + $0xa8] sm:$0xff]
          %v1420 = vld [vmem:[#allocation2 + $0xb0] sm:$0xff]
          %v1421 = vld [vmem:[#allocation2 + $0xb8] sm:$0xff]
          %v1422 = vld [vmem:[#allocation2 + $0xc0] sm:$0xff]
          %v1423 = vld [vmem:[#allocation2 + $0xc8] sm:$0xff]
          %v1424 = vld [vmem:[#allocation2 + $0xd0] sm:$0xff]
          %v1425 = vld [vmem:[#allocation2 + $0xd8] sm:$0xff]
          %v1426 = vld [vmem:[#allocation2 + $0xe0] sm:$0xff]
          %v1427 = vld [vmem:[#allocation2 + $0xe8] sm:$0xff]
          %v1428 = vld [vmem:[#allocation2 + $0xf0] sm:$0xff]
          %v1429 = vld [vmem:[#allocation2 + $0xf8] sm:$0xff]
          %v1430 = vmax.f32 %v1334, %v1335
          %1431 = vmax.xlane.f32.xlu0 %v1430
          %v1432 = vpop.xlane.xlu0 %1431
          %v1433 = vmax.f32 %v1336, %v1337
          %1434 = vmax.xlane.f32.xlu0 %v1433
          %v1435 = vpop.xlane.xlu0 %1434
          %v1436 = vmax.f32 %v1338, %v1339
          %1437 = vmax.xlane.f32.xlu0 %v1436
          %v1438 = vpop.xlane.xlu0 %1437
          %v1439 = vmax.f32 %v1340, %v1341
          %1440 = vmax.xlane.f32.xlu0 %v1439
          %v1441 = vpop.xlane.xlu0 %1440
          %v1442 = vmax.f32 %v1342, %v1343
          %1443 = vmax.xlane.f32.xlu0 %v1442
          %v1444 = vpop.xlane.xlu0 %1443
          %v1445 = vmax.f32 %v1344, %v1345
          %1446 = vmax.xlane.f32.xlu0 %v1445
          %v1447 = vpop.xlane.xlu0 %1446
          %v1448 = vmax.f32 %v1346, %v1347
          %1449 = vmax.xlane.f32.xlu0 %v1448
          %v1450 = vpop.xlane.xlu0 %1449
          %v1451 = vmax.f32 %v1348, %v1349
          %1452 = vmax.xlane.f32.xlu0 %v1451
          %v1453 = vpop.xlane.xlu0 %1452
          %v1454 = vmax.f32 %v1350, %v1351
          %1455 = vmax.xlane.f32.xlu0 %v1454
          %v1456 = vpop.xlane.xlu0 %1455
          %v1457 = vmax.f32 %v1352, %v1353
          %1458 = vmax.xlane.f32.xlu0 %v1457
          %v1459 = vpop.xlane.xlu0 %1458
          %v1460 = vmax.f32 %v1354, %v1355
          %1461 = vmax.xlane.f32.xlu0 %v1460
          %v1462 = vpop.xlane.xlu0 %1461
          %v1463 = vmax.f32 %v1356, %v1357
          %1464 = vmax.xlane.f32.xlu0 %v1463
          %v1465 = vpop.xlane.xlu0 %1464
          %v1466 = vmax.f32 %v1358, %v1359
          %1467 = vmax.xlane.f32.xlu0 %v1466
          %v1468 = vpop.xlane.xlu0 %1467
          %v1469 = vmax.f32 %v1360, %v1361
          %1470 = vmax.xlane.f32.xlu0 %v1469
          %v1471 = vpop.xlane.xlu0 %1470
          %v1472 = vmax.f32 %v1362, %v1363
          %1473 = vmax.xlane.f32.xlu0 %v1472
          %v1474 = vpop.xlane.xlu0 %1473
          %v1475 = vmax.f32 %v1364, %v1365
          %1476 = vmax.xlane.f32.xlu0 %v1475
          %v1477 = vpop.xlane.xlu0 %1476
          %v1478 = vmax.f32 %v1366, %v1367
          %1479 = vmax.xlane.f32.xlu0 %v1478
          %v1480 = vpop.xlane.xlu0 %1479
          %v1481 = vmax.f32 %v1368, %v1369
          %1482 = vmax.xlane.f32.xlu0 %v1481
          %v1483 = vpop.xlane.xlu0 %1482
          %v1484 = vmax.f32 %v1370, %v1371
          %1485 = vmax.xlane.f32.xlu0 %v1484
          %v1486 = vpop.xlane.xlu0 %1485
          %v1487 = vmax.f32 %v1372, %v1373
          %1488 = vmax.xlane.f32.xlu0 %v1487
          %v1489 = vpop.xlane.xlu0 %1488
          %v1490 = vmax.f32 %v1374, %v1375
          %1491 = vmax.xlane.f32.xlu0 %v1490
          %v1492 = vpop.xlane.xlu0 %1491
          %v1493 = vmax.f32 %v1376, %v1377
          %1494 = vmax.xlane.f32.xlu0 %v1493
          %v1495 = vpop.xlane.xlu0 %1494
          %v1496 = vmax.f32 %v1378, %v1379
          %1497 = vmax.xlane.f32.xlu0 %v1496
          %v1498 = vpop.xlane.xlu0 %1497
          %v1499 = vmax.f32 %v1380, %v1381
          %1500 = vmax.xlane.f32.xlu0 %v1499
          %v1501 = vpop.xlane.xlu0 %1500
          %v1502 = vmax.f32 %v1382, %v1383
          %1503 = vmax.xlane.f32.xlu0 %v1502
          %v1504 = vpop.xlane.xlu0 %1503
          %v1505 = vmax.f32 %v1384, %v1385
          %1506 = vmax.xlane.f32.xlu0 %v1505
          %v1507 = vpop.xlane.xlu0 %1506
          %v1508 = vmax.f32 %v1386, %v1387
          %1509 = vmax.xlane.f32.xlu0 %v1508
          %v1510 = vpop.xlane.xlu0 %1509
          %v1511 = vmax.f32 %v1388, %v1389
          %1512 = vmax.xlane.f32.xlu0 %v1511
          %v1513 = vpop.xlane.xlu0 %1512
          %v1514 = vmax.f32 %v1390, %v1391
          %1515 = vmax.xlane.f32.xlu0 %v1514
          %v1516 = vpop.xlane.xlu0 %1515
          %v1517 = vmax.f32 %v1392, %v1393
          %1518 = vmax.xlane.f32.xlu0 %v1517
          %v1519 = vpop.xlane.xlu0 %1518
          %v1520 = vmax.f32 %v1394, %v1395
          %1521 = vmax.xlane.f32.xlu0 %v1520
          %v1522 = vpop.xlane.xlu0 %1521
          %v1523 = vmax.f32 %v1396, %v1397
          %1524 = vmax.xlane.f32.xlu0 %v1523
          %v1525 = vpop.xlane.xlu0 %1524
          %v1526 = vmax.f32 %v1398, %v1432
          %v1527 = vmax.f32 %v1399, %v1435
          %v1528 = vmax.f32 %v1400, %v1438
          %v1529 = vmax.f32 %v1401, %v1441
          %v1530 = vmax.f32 %v1402, %v1444
          %v1531 = vmax.f32 %v1403, %v1447
          %v1532 = vmax.f32 %v1404, %v1450
          %v1533 = vmax.f32 %v1405, %v1453
          %v1534 = vmax.f32 %v1406, %v1456
          %v1535 = vmax.f32 %v1407, %v1459
          %v1536 = vmax.f32 %v1408, %v1462
          %v1537 = vmax.f32 %v1409, %v1465
          %v1538 = vmax.f32 %v1410, %v1468
          %v1539 = vmax.f32 %v1411, %v1471
          %v1540 = vmax.f32 %v1412, %v1474
          %v1541 = vmax.f32 %v1413, %v1477
          %v1542 = vmax.f32 %v1414, %v1480
          %v1543 = vmax.f32 %v1415, %v1483
          %v1544 = vmax.f32 %v1416, %v1486
          %v1545 = vmax.f32 %v1417, %v1489
          %v1546 = vmax.f32 %v1418, %v1492
          %v1547 = vmax.f32 %v1419, %v1495
          %v1548 = vmax.f32 %v1420, %v1498
          %v1549 = vmax.f32 %v1421, %v1501
          %v1550 = vmax.f32 %v1422, %v1504
          %v1551 = vmax.f32 %v1423, %v1507
          %v1552 = vmax.f32 %v1424, %v1510
          %v1553 = vmax.f32 %v1425, %v1513
          %v1554 = vmax.f32 %v1426, %v1516
          %v1555 = vmax.f32 %v1427, %v1519
          %v1556 = vmax.f32 %v1428, %v1522
          %v1557 = vmax.f32 %v1429, %v1525
          %v1558 = vsub.f32 %v1398, %v1526
          %v1559 = vsub.f32 %v1399, %v1527
          %v1560 = vsub.f32 %v1400, %v1528
          %v1561 = vsub.f32 %v1401, %v1529
          %v1562 = vsub.f32 %v1402, %v1530
          %v1563 = vsub.f32 %v1403, %v1531
          %v1564 = vsub.f32 %v1404, %v1532
          %v1565 = vsub.f32 %v1405, %v1533
          %v1566 = vsub.f32 %v1406, %v1534
          %v1567 = vsub.f32 %v1407, %v1535
          %v1568 = vsub.f32 %v1408, %v1536
          %v1569 = vsub.f32 %v1409, %v1537
          %v1570 = vsub.f32 %v1410, %v1538
          %v1571 = vsub.f32 %v1411, %v1539
          %v1572 = vsub.f32 %v1412, %v1540
          %v1573 = vsub.f32 %v1413, %v1541
          %v1574 = vsub.f32 %v1414, %v1542
          %v1575 = vsub.f32 %v1415, %v1543
          %v1576 = vsub.f32 %v1416, %v1544
          %v1577 = vsub.f32 %v1417, %v1545
          %v1578 = vsub.f32 %v1418, %v1546
          %v1579 = vsub.f32 %v1419, %v1547
          %v1580 = vsub.f32 %v1420, %v1548
          %v1581 = vsub.f32 %v1421, %v1549
          %v1582 = vsub.f32 %v1422, %v1550
          %v1583 = vsub.f32 %v1423, %v1551
          %v1584 = vsub.f32 %v1424, %v1552
          %v1585 = vsub.f32 %v1425, %v1553
          %v1586 = vsub.f32 %v1426, %v1554
          %v1587 = vsub.f32 %v1427, %v1555
          %v1588 = vsub.f32 %v1428, %v1556
          %v1589 = vsub.f32 %v1429, %v1557
          %v1590 = vmul.f32 %v1558, 1.442695
          %v1591 = vpow.pop %v1590
          %v1592 = vmul.f32 %v1559, 1.442695
          %v1593 = vpow.pop %v1592
          %v1594 = vmul.f32 %v1560, 1.442695
          %v1595 = vpow.pop %v1594
          %v1596 = vmul.f32 %v1561, 1.442695
          %v1597 = vpow.pop %v1596
          %v1598 = vmul.f32 %v1562, 1.442695
          %v1599 = vpow.pop %v1598
          %v1600 = vmul.f32 %v1563, 1.442695
          %v1601 = vpow.pop %v1600
          %v1602 = vmul.f32 %v1564, 1.442695
          %v1603 = vpow.pop %v1602
          %v1604 = vmul.f32 %v1565, 1.442695
          %v1605 = vpow.pop %v1604
          %v1606 = vmul.f32 %v1566, 1.442695
          %v1607 = vpow.pop %v1606
          %v1608 = vmul.f32 %v1567, 1.442695
          %v1609 = vpow.pop %v1608
          %v1610 = vmul.f32 %v1568, 1.442695
          %v1611 = vpow.pop %v1610
          %v1612 = vmul.f32 %v1569, 1.442695
          %v1613 = vpow.pop %v1612
          %v1614 = vmul.f32 %v1570, 1.442695
          %v1615 = vpow.pop %v1614
          %v1616 = vmul.f32 %v1571, 1.442695
          %v1617 = vpow.pop %v1616
          %v1618 = vmul.f32 %v1572, 1.442695
          %v1619 = vpow.pop %v1618
          %v1620 = vmul.f32 %v1573, 1.442695
          %v1621 = vpow.pop %v1620
          %v1622 = vmul.f32 %v1574, 1.442695
          %v1623 = vpow.pop %v1622
          %v1624 = vmul.f32 %v1575, 1.442695
          %v1625 = vpow.pop %v1624
          %v1626 = vmul.f32 %v1576, 1.442695
          %v1627 = vpow.pop %v1626
          %v1628 = vmul.f32 %v1577, 1.442695
          %v1629 = vpow.pop %v1628
          %v1630 = vmul.f32 %v1578, 1.442695
          %v1631 = vpow.pop %v1630
          %v1632 = vmul.f32 %v1579, 1.442695
          %v1633 = vpow.pop %v1632
          %v1634 = vmul.f32 %v1580, 1.442695
          %v1635 = vpow.pop %v1634
          %v1636 = vmul.f32 %v1581, 1.442695
          %v1637 = vpow.pop %v1636
          %v1638 = vmul.f32 %v1582, 1.442695
          %v1639 = vpow.pop %v1638
          %v1640 = vmul.f32 %v1583, 1.442695
          %v1641 = vpow.pop %v1640
          %v1642 = vmul.f32 %v1584, 1.442695
          %v1643 = vpow.pop %v1642
          %v1644 = vmul.f32 %v1585, 1.442695
          %v1645 = vpow.pop %v1644
          %v1646 = vmul.f32 %v1586, 1.442695
          %v1647 = vpow.pop %v1646
          %v1648 = vmul.f32 %v1587, 1.442695
          %v1649 = vpow.pop %v1648
          %v1650 = vmul.f32 %v1588, 1.442695
          %v1651 = vpow.pop %v1650
          %v1652 = vmul.f32 %v1589, 1.442695
          %v1653 = vpow.pop %v1652
          %1655 = vset.pattern.permute.xlu0 0
          %1656 = vperm.xlu0 %1655, %v1526
          %v1657 = vpop.permute.xlu0 %1656
          %1660 = vset.pattern.permute.xlu0 0
          %1661 = vperm.xlu0 %1660, %v1527
          %v1662 = vpop.permute.xlu0 %1661
          %1665 = vset.pattern.permute.xlu0 0
          %1666 = vperm.xlu0 %1665, %v1528
          %v1667 = vpop.permute.xlu0 %1666
          %1670 = vset.pattern.permute.xlu0 0
          %1671 = vperm.xlu0 %1670, %v1529
          %v1672 = vpop.permute.xlu0 %1671
          %1675 = vset.pattern.permute.xlu0 0
          %1676 = vperm.xlu0 %1675, %v1530
          %v1677 = vpop.permute.xlu0 %1676
          %1680 = vset.pattern.permute.xlu0 0
          %1681 = vperm.xlu0 %1680, %v1531
          %v1682 = vpop.permute.xlu0 %1681
          %1685 = vset.pattern.permute.xlu0 0
          %1686 = vperm.xlu0 %1685, %v1532
          %v1687 = vpop.permute.xlu0 %1686
          %1690 = vset.pattern.permute.xlu0 0
          %1691 = vperm.xlu0 %1690, %v1533
          %v1692 = vpop.permute.xlu0 %1691
          %1695 = vset.pattern.permute.xlu0 0
          %1696 = vperm.xlu0 %1695, %v1534
          %v1697 = vpop.permute.xlu0 %1696
          %1700 = vset.pattern.permute.xlu0 0
          %1701 = vperm.xlu0 %1700, %v1535
          %v1702 = vpop.permute.xlu0 %1701
          %1705 = vset.pattern.permute.xlu0 0
          %1706 = vperm.xlu0 %1705, %v1536
          %v1707 = vpop.permute.xlu0 %1706
          %1710 = vset.pattern.permute.xlu0 0
          %1711 = vperm.xlu0 %1710, %v1537
          %v1712 = vpop.permute.xlu0 %1711
          %1715 = vset.pattern.permute.xlu0 0
          %1716 = vperm.xlu0 %1715, %v1538
          %v1717 = vpop.permute.xlu0 %1716
          %1720 = vset.pattern.permute.xlu0 0
          %1721 = vperm.xlu0 %1720, %v1539
          %v1722 = vpop.permute.xlu0 %1721
          %1725 = vset.pattern.permute.xlu0 0
          %1726 = vperm.xlu0 %1725, %v1540
          %v1727 = vpop.permute.xlu0 %1726
          %1730 = vset.pattern.permute.xlu0 0
          %1731 = vperm.xlu0 %1730, %v1541
          %v1732 = vpop.permute.xlu0 %1731
          %1735 = vset.pattern.permute.xlu0 0
          %1736 = vperm.xlu0 %1735, %v1542
          %v1737 = vpop.permute.xlu0 %1736
          %1740 = vset.pattern.permute.xlu0 0
          %1741 = vperm.xlu0 %1740, %v1543
          %v1742 = vpop.permute.xlu0 %1741
          %1745 = vset.pattern.permute.xlu0 0
          %1746 = vperm.xlu0 %1745, %v1544
          %v1747 = vpop.permute.xlu0 %1746
          %1750 = vset.pattern.permute.xlu0 0
          %1751 = vperm.xlu0 %1750, %v1545
          %v1752 = vpop.permute.xlu0 %1751
          %1755 = vset.pattern.permute.xlu0 0
          %1756 = vperm.xlu0 %1755, %v1546
          %v1757 = vpop.permute.xlu0 %1756
          %1760 = vset.pattern.permute.xlu0 0
          %1761 = vperm.xlu0 %1760, %v1547
          %v1762 = vpop.permute.xlu0 %1761
          %1765 = vset.pattern.permute.xlu0 0
          %1766 = vperm.xlu0 %1765, %v1548
          %v1767 = vpop.permute.xlu0 %1766
          %1770 = vset.pattern.permute.xlu0 0
          %1771 = vperm.xlu0 %1770, %v1549
          %v1772 = vpop.permute.xlu0 %1771
          %1775 = vset.pattern.permute.xlu0 0
          %1776 = vperm.xlu0 %1775, %v1550
          %v1777 = vpop.permute.xlu0 %1776
          %1780 = vset.pattern.permute.xlu0 0
          %1781 = vperm.xlu0 %1780, %v1551
          %v1782 = vpop.permute.xlu0 %1781
          %1785 = vset.pattern.permute.xlu0 0
          %1786 = vperm.xlu0 %1785, %v1552
          %v1787 = vpop.permute.xlu0 %1786
          %1790 = vset.pattern.permute.xlu0 0
          %1791 = vperm.xlu0 %1790, %v1553
          %v1792 = vpop.permute.xlu0 %1791
          %1795 = vset.pattern.permute.xlu0 0
          %1796 = vperm.xlu0 %1795, %v1554
          %v1797 = vpop.permute.xlu0 %1796
          %1800 = vset.pattern.permute.xlu0 0
          %1801 = vperm.xlu0 %1800, %v1555
          %v1802 = vpop.permute.xlu0 %1801
          %1805 = vset.pattern.permute.xlu0 0
          %1806 = vperm.xlu0 %1805, %v1556
          %v1807 = vpop.permute.xlu0 %1806
          %1810 = vset.pattern.permute.xlu0 0
          %1811 = vperm.xlu0 %1810, %v1557
          %v1812 = vpop.permute.xlu0 %1811
          %v1814 = vsub.f32 %v1334, %v1657
          %v1815 = vsub.f32 %v1335, %v1657
          %v1816 = vsub.f32 %v1336, %v1662
          %v1817 = vsub.f32 %v1337, %v1662
          %v1818 = vsub.f32 %v1338, %v1667
          %v1819 = vsub.f32 %v1339, %v1667
          %v1820 = vsub.f32 %v1340, %v1672
          %v1821 = vsub.f32 %v1341, %v1672
          %v1822 = vsub.f32 %v1342, %v1677
          %v1823 = vsub.f32 %v1343, %v1677
          %v1824 = vsub.f32 %v1344, %v1682
          %v1825 = vsub.f32 %v1345, %v1682
          %v1826 = vsub.f32 %v1346, %v1687
          %v1827 = vsub.f32 %v1347, %v1687
          %v1828 = vsub.f32 %v1348, %v1692
          %v1829 = vsub.f32 %v1349, %v1692
          %v1830 = vsub.f32 %v1350, %v1697
          %v1831 = vsub.f32 %v1351, %v1697
          %v1832 = vsub.f32 %v1352, %v1702
          %v1833 = vsub.f32 %v1353, %v1702
          %v1834 = vsub.f32 %v1354, %v1707
          %v1835 = vsub.f32 %v1355, %v1707
          %v1836 = vsub.f32 %v1356, %v1712
          %v1837 = vsub.f32 %v1357, %v1712
          %v1838 = vsub.f32 %v1358, %v1717
          %v1839 = vsub.f32 %v1359, %v1717
          %v1840 = vsub.f32 %v1360, %v1722
          %v1841 = vsub.f32 %v1361, %v1722
          %v1842 = vsub.f32 %v1362, %v1727
          %v1843 = vsub.f32 %v1363, %v1727
          %v1844 = vsub.f32 %v1364, %v1732
          %v1845 = vsub.f32 %v1365, %v1732
          %v1846 = vsub.f32 %v1366, %v1737
          %v1847 = vsub.f32 %v1367, %v1737
          %v1848 = vsub.f32 %v1368, %v1742
          %v1849 = vsub.f32 %v1369, %v1742
          %v1850 = vsub.f32 %v1370, %v1747
          %v1851 = vsub.f32 %v1371, %v1747
          %v1852 = vsub.f32 %v1372, %v1752
          %v1853 = vsub.f32 %v1373, %v1752
          %v1854 = vsub.f32 %v1374, %v1757
          %v1855 = vsub.f32 %v1375, %v1757
          %v1856 = vsub.f32 %v1376, %v1762
          %v1857 = vsub.f32 %v1377, %v1762
          %v1858 = vsub.f32 %v1378, %v1767
          %v1859 = vsub.f32 %v1379, %v1767
          %v1860 = vsub.f32 %v1380, %v1772
          %v1861 = vsub.f32 %v1381, %v1772
          %v1862 = vsub.f32 %v1382, %v1777
          %v1863 = vsub.f32 %v1383, %v1777
          %v1864 = vsub.f32 %v1384, %v1782
          %v1865 = vsub.f32 %v1385, %v1782
          %v1866 = vsub.f32 %v1386, %v1787
          %v1867 = vsub.f32 %v1387, %v1787
          %v1868 = vsub.f32 %v1388, %v1792
          %v1869 = vsub.f32 %v1389, %v1792
          %v1870 = vsub.f32 %v1390, %v1797
          %v1871 = vsub.f32 %v1391, %v1797
          %v1872 = vsub.f32 %v1392, %v1802
          %v1873 = vsub.f32 %v1393, %v1802
          %v1874 = vsub.f32 %v1394, %v1807
          %v1875 = vsub.f32 %v1395, %v1807
          %v1876 = vsub.f32 %v1396, %v1812
          %v1877 = vsub.f32 %v1397, %v1812
          %v1878 = vmul.f32 %v1814, 1.442695
          %v1879 = vpow.pop %v1878
          %v1880 = vmul.f32 %v1815, 1.442695
          %v1881 = vpow.pop %v1880
          %v1882 = vmul.f32 %v1816, 1.442695
          %v1883 = vpow.pop %v1882
          %v1884 = vmul.f32 %v1817, 1.442695
          %v1885 = vpow.pop %v1884
          %v1886 = vmul.f32 %v1818, 1.442695
          %v1887 = vpow.pop %v1886
          %v1888 = vmul.f32 %v1819, 1.442695
          %v1889 = vpow.pop %v1888
          %v1890 = vmul.f32 %v1820, 1.442695
          %v1891 = vpow.pop %v1890
          %v1892 = vmul.f32 %v1821, 1.442695
          %v1893 = vpow.pop %v1892
          %v1894 = vmul.f32 %v1822, 1.442695
          %v1895 = vpow.pop %v1894
          %v1896 = vmul.f32 %v1823, 1.442695
          %v1897 = vpow.pop %v1896
          %v1898 = vmul.f32 %v1824, 1.442695
          %v1899 = vpow.pop %v1898
          %v1900 = vmul.f32 %v1825, 1.442695
          %v1901 = vpow.pop %v1900
          %v1902 = vmul.f32 %v1826, 1.442695
          %v1903 = vpow.pop %v1902
          %v1904 = vmul.f32 %v1827, 1.442695
          %v1905 = vpow.pop %v1904
          %v1906 = vmul.f32 %v1828, 1.442695
          %v1907 = vpow.pop %v1906
          %v1908 = vmul.f32 %v1829, 1.442695
          %v1909 = vpow.pop %v1908
          %v1910 = vmul.f32 %v1830, 1.442695
          %v1911 = vpow.pop %v1910
          %v1912 = vmul.f32 %v1831, 1.442695
          %v1913 = vpow.pop %v1912
          %v1914 = vmul.f32 %v1832, 1.442695
          %v1915 = vpow.pop %v1914
          %v1916 = vmul.f32 %v1833, 1.442695
          %v1917 = vpow.pop %v1916
          %v1918 = vmul.f32 %v1834, 1.442695
          %v1919 = vpow.pop %v1918
          %v1920 = vmul.f32 %v1835, 1.442695
          %v1921 = vpow.pop %v1920
          %v1922 = vmul.f32 %v1836, 1.442695
          %v1923 = vpow.pop %v1922
          %v1924 = vmul.f32 %v1837, 1.442695
          %v1925 = vpow.pop %v1924
          %v1926 = vmul.f32 %v1838, 1.442695
          %v1927 = vpow.pop %v1926
          %v1928 = vmul.f32 %v1839, 1.442695
          %v1929 = vpow.pop %v1928
          %v1930 = vmul.f32 %v1840, 1.442695
          %v1931 = vpow.pop %v1930
          %v1932 = vmul.f32 %v1841, 1.442695
          %v1933 = vpow.pop %v1932
          %v1934 = vmul.f32 %v1842, 1.442695
          %v1935 = vpow.pop %v1934
          %v1936 = vmul.f32 %v1843, 1.442695
          %v1937 = vpow.pop %v1936
          %v1938 = vmul.f32 %v1844, 1.442695
          %v1939 = vpow.pop %v1938
          %v1940 = vmul.f32 %v1845, 1.442695
          %v1941 = vpow.pop %v1940
          %v1942 = vmul.f32 %v1846, 1.442695
          %v1943 = vpow.pop %v1942
          %v1944 = vmul.f32 %v1847, 1.442695
          %v1945 = vpow.pop %v1944
          %v1946 = vmul.f32 %v1848, 1.442695
          %v1947 = vpow.pop %v1946
          %v1948 = vmul.f32 %v1849, 1.442695
          %v1949 = vpow.pop %v1948
          %v1950 = vmul.f32 %v1850, 1.442695
          %v1951 = vpow.pop %v1950
          %v1952 = vmul.f32 %v1851, 1.442695
          %v1953 = vpow.pop %v1952
          %v1954 = vmul.f32 %v1852, 1.442695
          %v1955 = vpow.pop %v1954
          %v1956 = vmul.f32 %v1853, 1.442695
          %v1957 = vpow.pop %v1956
          %v1958 = vmul.f32 %v1854, 1.442695
          %v1959 = vpow.pop %v1958
          %v1960 = vmul.f32 %v1855, 1.442695
          %v1961 = vpow.pop %v1960
          %v1962 = vmul.f32 %v1856, 1.442695
          %v1963 = vpow.pop %v1962
          %v1964 = vmul.f32 %v1857, 1.442695
          %v1965 = vpow.pop %v1964
          %v1966 = vmul.f32 %v1858, 1.442695
          %v1967 = vpow.pop %v1966
          %v1968 = vmul.f32 %v1859, 1.442695
          %v1969 = vpow.pop %v1968
          %v1970 = vmul.f32 %v1860, 1.442695
          %v1971 = vpow.pop %v1970
          %v1972 = vmul.f32 %v1861, 1.442695
          %v1973 = vpow.pop %v1972
          %v1974 = vmul.f32 %v1862, 1.442695
          %v1975 = vpow.pop %v1974
          %v1976 = vmul.f32 %v1863, 1.442695
          %v1977 = vpow.pop %v1976
          %v1978 = vmul.f32 %v1864, 1.442695
          %v1979 = vpow.pop %v1978
          %v1980 = vmul.f32 %v1865, 1.442695
          %v1981 = vpow.pop %v1980
          %v1982 = vmul.f32 %v1866, 1.442695
          %v1983 = vpow.pop %v1982
          %v1984 = vmul.f32 %v1867, 1.442695
          %v1985 = vpow.pop %v1984
          %v1986 = vmul.f32 %v1868, 1.442695
          %v1987 = vpow.pop %v1986
          %v1988 = vmul.f32 %v1869, 1.442695
          %v1989 = vpow.pop %v1988
          %v1990 = vmul.f32 %v1870, 1.442695
          %v1991 = vpow.pop %v1990
          %v1992 = vmul.f32 %v1871, 1.442695
          %v1993 = vpow.pop %v1992
          %v1994 = vmul.f32 %v1872, 1.442695
          %v1995 = vpow.pop %v1994
          %v1996 = vmul.f32 %v1873, 1.442695
          %v1997 = vpow.pop %v1996
          %v1998 = vmul.f32 %v1874, 1.442695
          %v1999 = vpow.pop %v1998
          %v2000 = vmul.f32 %v1875, 1.442695
          %v2001 = vpow.pop %v2000
          %v2002 = vmul.f32 %v1876, 1.442695
          %v2003 = vpow.pop %v2002
          %v2004 = vmul.f32 %v1877, 1.442695
          %v2005 = vpow.pop %v2004
          %v2006 = vsel %vm1270, %v1879, 0.0
          %v2007 = vsel %vm1271, %v1881, 0.0
          %v2008 = vsel %vm1272, %v1883, 0.0
          %v2009 = vsel %vm1273, %v1885, 0.0
          %v2010 = vsel %vm1274, %v1887, 0.0
          %v2011 = vsel %vm1275, %v1889, 0.0
          %v2012 = vsel %vm1276, %v1891, 0.0
          %v2013 = vsel %vm1277, %v1893, 0.0
          %v2014 = vsel %vm1278, %v1895, 0.0
          %v2015 = vsel %vm1279, %v1897, 0.0
          %v2016 = vsel %vm1280, %v1899, 0.0
          %v2017 = vsel %vm1281, %v1901, 0.0
          %v2018 = vsel %vm1282, %v1903, 0.0
          %v2019 = vsel %vm1283, %v1905, 0.0
          %v2020 = vsel %vm1284, %v1907, 0.0
          %v2021 = vsel %vm1285, %v1909, 0.0
          %v2022 = vsel %vm1286, %v1911, 0.0
          %v2023 = vsel %vm1287, %v1913, 0.0
          %v2024 = vsel %vm1288, %v1915, 0.0
          %v2025 = vsel %vm1289, %v1917, 0.0
          %v2026 = vsel %vm1290, %v1919, 0.0
          %v2027 = vsel %vm1291, %v1921, 0.0
          %v2028 = vsel %vm1292, %v1923, 0.0
          %v2029 = vsel %vm1293, %v1925, 0.0
          %v2030 = vsel %vm1294, %v1927, 0.0
          %v2031 = vsel %vm1295, %v1929, 0.0
          %v2032 = vsel %vm1296, %v1931, 0.0
          %v2033 = vsel %vm1297, %v1933, 0.0
          %v2034 = vsel %vm1298, %v1935, 0.0
          %v2035 = vsel %vm1299, %v1937, 0.0
          %v2036 = vsel %vm1300, %v1939, 0.0
          %v2037 = vsel %vm1301, %v1941, 0.0
          %v2038 = vsel %vm1302, %v1943, 0.0
          %v2039 = vsel %vm1303, %v1945, 0.0
          %v2040 = vsel %vm1304, %v1947, 0.0
          %v2041 = vsel %vm1305, %v1949, 0.0
          %v2042 = vsel %vm1306, %v1951, 0.0
          %v2043 = vsel %vm1307, %v1953, 0.0
          %v2044 = vsel %vm1308, %v1955, 0.0
          %v2045 = vsel %vm1309, %v1957, 0.0
          %v2046 = vsel %vm1310, %v1959, 0.0
          %v2047 = vsel %vm1311, %v1961, 0.0
          %v2048 = vsel %vm1312, %v1963, 0.0
          %v2049 = vsel %vm1313, %v1965, 0.0
          %v2050 = vsel %vm1314, %v1967, 0.0
          %v2051 = vsel %vm1315, %v1969, 0.0
          %v2052 = vsel %vm1316, %v1971, 0.0
          %v2053 = vsel %vm1317, %v1973, 0.0
          %v2054 = vsel %vm1318, %v1975, 0.0
          %v2055 = vsel %vm1319, %v1977, 0.0
          %v2056 = vsel %vm1320, %v1979, 0.0
          %v2057 = vsel %vm1321, %v1981, 0.0
          %v2058 = vsel %vm1322, %v1983, 0.0
          %v2059 = vsel %vm1323, %v1985, 0.0
          %v2060 = vsel %vm1324, %v1987, 0.0
          %v2061 = vsel %vm1325, %v1989, 0.0
          %v2062 = vsel %vm1326, %v1991, 0.0
          %v2063 = vsel %vm1327, %v1993, 0.0
          %v2064 = vsel %vm1328, %v1995, 0.0
          %v2065 = vsel %vm1329, %v1997, 0.0
          %v2066 = vsel %vm1330, %v1999, 0.0
          %v2067 = vsel %vm1331, %v2001, 0.0
          %v2068 = vsel %vm1332, %v2003, 0.0
          %v2069 = vsel %vm1333, %v2005, 0.0
          %v2070 = vld [vmem:[#allocation3] sm:$0xff]
          %v2071 = vld [vmem:[#allocation3 + $0x8] sm:$0xff]
          %v2072 = vld [vmem:[#allocation3 + $0x10] sm:$0xff]
          %v2073 = vld [vmem:[#allocation3 + $0x18] sm:$0xff]
          %v2074 = vld [vmem:[#allocation3 + $0x20] sm:$0xff]
          %v2075 = vld [vmem:[#allocation3 + $0x28] sm:$0xff]
          %v2076 = vld [vmem:[#allocation3 + $0x30] sm:$0xff]
          %v2077 = vld [vmem:[#allocation3 + $0x38] sm:$0xff]
          %v2078 = vld [vmem:[#allocation3 + $0x40] sm:$0xff]
          %v2079 = vld [vmem:[#allocation3 + $0x48] sm:$0xff]
          %v2080 = vld [vmem:[#allocation3 + $0x50] sm:$0xff]
          %v2081 = vld [vmem:[#allocation3 + $0x58] sm:$0xff]
          %v2082 = vld [vmem:[#allocation3 + $0x60] sm:$0xff]
          %v2083 = vld [vmem:[#allocation3 + $0x68] sm:$0xff]
          %v2084 = vld [vmem:[#allocation3 + $0x70] sm:$0xff]
          %v2085 = vld [vmem:[#allocation3 + $0x78] sm:$0xff]
          %v2086 = vld [vmem:[#allocation3 + $0x80] sm:$0xff]
          %v2087 = vld [vmem:[#allocation3 + $0x88] sm:$0xff]
          %v2088 = vld [vmem:[#allocation3 + $0x90] sm:$0xff]
          %v2089 = vld [vmem:[#allocation3 + $0x98] sm:$0xff]
          %v2090 = vld [vmem:[#allocation3 + $0xa0] sm:$0xff]
          %v2091 = vld [vmem:[#allocation3 + $0xa8] sm:$0xff]
          %v2092 = vld [vmem:[#allocation3 + $0xb0] sm:$0xff]
          %v2093 = vld [vmem:[#allocation3 + $0xb8] sm:$0xff]
          %v2094 = vld [vmem:[#allocation3 + $0xc0] sm:$0xff]
          %v2095 = vld [vmem:[#allocation3 + $0xc8] sm:$0xff]
          %v2096 = vld [vmem:[#allocation3 + $0xd0] sm:$0xff]
          %v2097 = vld [vmem:[#allocation3 + $0xd8] sm:$0xff]
          %v2098 = vld [vmem:[#allocation3 + $0xe0] sm:$0xff]
          %v2099 = vld [vmem:[#allocation3 + $0xe8] sm:$0xff]
          %v2100 = vld [vmem:[#allocation3 + $0xf0] sm:$0xff]
          %v2101 = vld [vmem:[#allocation3 + $0xf8] sm:$0xff]
          %v2102 = vmul.f32 %v1591, %v2070
          %v2103 = vmul.f32 %v1593, %v2071
          %v2104 = vmul.f32 %v1595, %v2072
          %v2105 = vmul.f32 %v1597, %v2073
          %v2106 = vmul.f32 %v1599, %v2074
          %v2107 = vmul.f32 %v1601, %v2075
          %v2108 = vmul.f32 %v1603, %v2076
          %v2109 = vmul.f32 %v1605, %v2077
          %v2110 = vmul.f32 %v1607, %v2078
          %v2111 = vmul.f32 %v1609, %v2079
          %v2112 = vmul.f32 %v1611, %v2080
          %v2113 = vmul.f32 %v1613, %v2081
          %v2114 = vmul.f32 %v1615, %v2082
          %v2115 = vmul.f32 %v1617, %v2083
          %v2116 = vmul.f32 %v1619, %v2084
          %v2117 = vmul.f32 %v1621, %v2085
          %v2118 = vmul.f32 %v1623, %v2086
          %v2119 = vmul.f32 %v1625, %v2087
          %v2120 = vmul.f32 %v1627, %v2088
          %v2121 = vmul.f32 %v1629, %v2089
          %v2122 = vmul.f32 %v1631, %v2090
          %v2123 = vmul.f32 %v1633, %v2091
          %v2124 = vmul.f32 %v1635, %v2092
          %v2125 = vmul.f32 %v1637, %v2093
          %v2126 = vmul.f32 %v1639, %v2094
          %v2127 = vmul.f32 %v1641, %v2095
          %v2128 = vmul.f32 %v1643, %v2096
          %v2129 = vmul.f32 %v1645, %v2097
          %v2130 = vmul.f32 %v1647, %v2098
          %v2131 = vmul.f32 %v1649, %v2099
          %v2132 = vmul.f32 %v1651, %v2100
          %v2133 = vmul.f32 %v1653, %v2101
          %v2134 = vadd.f32 %v2006, %v2007
          %2135 = vadd.xlane.f32.xlu0 %v2134
          %v2136 = vpop.xlane.xlu0 %2135
          %v2137 = vadd.f32 %v2008, %v2009
          %2138 = vadd.xlane.f32.xlu0 %v2137
          %v2139 = vpop.xlane.xlu0 %2138
          %v2140 = vadd.f32 %v2010, %v2011
          %2141 = vadd.xlane.f32.xlu0 %v2140
          %v2142 = vpop.xlane.xlu0 %2141
          %v2143 = vadd.f32 %v2012, %v2013
          %2144 = vadd.xlane.f32.xlu0 %v2143
          %v2145 = vpop.xlane.xlu0 %2144
          %v2146 = vadd.f32 %v2014, %v2015
          %2147 = vadd.xlane.f32.xlu0 %v2146
          %v2148 = vpop.xlane.xlu0 %2147
          %v2149 = vadd.f32 %v2016, %v2017
          %2150 = vadd.xlane.f32.xlu0 %v2149
          %v2151 = vpop.xlane.xlu0 %2150
          %v2152 = vadd.f32 %v2018, %v2019
          %2153 = vadd.xlane.f32.xlu0 %v2152
          %v2154 = vpop.xlane.xlu0 %2153
          %v2155 = vadd.f32 %v2020, %v2021
          %2156 = vadd.xlane.f32.xlu0 %v2155
          %v2157 = vpop.xlane.xlu0 %2156
          %v2158 = vadd.f32 %v2022, %v2023
          %2159 = vadd.xlane.f32.xlu0 %v2158
          %v2160 = vpop.xlane.xlu0 %2159
          %v2161 = vadd.f32 %v2024, %v2025
          %2162 = vadd.xlane.f32.xlu0 %v2161
          %v2163 = vpop.xlane.xlu0 %2162
          %v2164 = vadd.f32 %v2026, %v2027
          %2165 = vadd.xlane.f32.xlu0 %v2164
          %v2166 = vpop.xlane.xlu0 %2165
          %v2167 = vadd.f32 %v2028, %v2029
          %2168 = vadd.xlane.f32.xlu0 %v2167
          %v2169 = vpop.xlane.xlu0 %2168
          %v2170 = vadd.f32 %v2030, %v2031
          %2171 = vadd.xlane.f32.xlu0 %v2170
          %v2172 = vpop.xlane.xlu0 %2171
          %v2173 = vadd.f32 %v2032, %v2033
          %2174 = vadd.xlane.f32.xlu0 %v2173
          %v2175 = vpop.xlane.xlu0 %2174
          %v2176 = vadd.f32 %v2034, %v2035
          %2177 = vadd.xlane.f32.xlu0 %v2176
          %v2178 = vpop.xlane.xlu0 %2177
          %v2179 = vadd.f32 %v2036, %v2037
          %2180 = vadd.xlane.f32.xlu0 %v2179
          %v2181 = vpop.xlane.xlu0 %2180
          %v2182 = vadd.f32 %v2038, %v2039
          %2183 = vadd.xlane.f32.xlu0 %v2182
          %v2184 = vpop.xlane.xlu0 %2183
          %v2185 = vadd.f32 %v2040, %v2041
          %2186 = vadd.xlane.f32.xlu0 %v2185
          %v2187 = vpop.xlane.xlu0 %2186
          %v2188 = vadd.f32 %v2042, %v2043
          %2189 = vadd.xlane.f32.xlu0 %v2188
          %v2190 = vpop.xlane.xlu0 %2189
          %v2191 = vadd.f32 %v2044, %v2045
          %2192 = vadd.xlane.f32.xlu0 %v2191
          %v2193 = vpop.xlane.xlu0 %2192
          %v2194 = vadd.f32 %v2046, %v2047
          %2195 = vadd.xlane.f32.xlu0 %v2194
          %v2196 = vpop.xlane.xlu0 %2195
          %v2197 = vadd.f32 %v2048, %v2049
          %2198 = vadd.xlane.f32.xlu0 %v2197
          %v2199 = vpop.xlane.xlu0 %2198
          %v2200 = vadd.f32 %v2050, %v2051
          %2201 = vadd.xlane.f32.xlu0 %v2200
          %v2202 = vpop.xlane.xlu0 %2201
          %v2203 = vadd.f32 %v2052, %v2053
          %2204 = vadd.xlane.f32.xlu0 %v2203
          %v2205 = vpop.xlane.xlu0 %2204
          %v2206 = vadd.f32 %v2054, %v2055
          %2207 = vadd.xlane.f32.xlu0 %v2206
          %v2208 = vpop.xlane.xlu0 %2207
          %v2209 = vadd.f32 %v2056, %v2057
          %2210 = vadd.xlane.f32.xlu0 %v2209
          %v2211 = vpop.xlane.xlu0 %2210
          %v2212 = vadd.f32 %v2058, %v2059
          %2213 = vadd.xlane.f32.xlu0 %v2212
          %v2214 = vpop.xlane.xlu0 %2213
          %v2215 = vadd.f32 %v2060, %v2061
          %2216 = vadd.xlane.f32.xlu0 %v2215
          %v2217 = vpop.xlane.xlu0 %2216
          %v2218 = vadd.f32 %v2062, %v2063
          %2219 = vadd.xlane.f32.xlu0 %v2218
          %v2220 = vpop.xlane.xlu0 %2219
          %v2221 = vadd.f32 %v2064, %v2065
          %2222 = vadd.xlane.f32.xlu0 %v2221
          %v2223 = vpop.xlane.xlu0 %2222
          %v2224 = vadd.f32 %v2066, %v2067
          %2225 = vadd.xlane.f32.xlu0 %v2224
          %v2226 = vpop.xlane.xlu0 %2225
          %v2227 = vadd.f32 %v2068, %v2069
          %2228 = vadd.xlane.f32.xlu0 %v2227
          %v2229 = vpop.xlane.xlu0 %2228
          %v2230 = vadd.f32 %v2102, %v2136
          %v2231 = vadd.f32 %v2103, %v2139
          %v2232 = vadd.f32 %v2104, %v2142
          %v2233 = vadd.f32 %v2105, %v2145
          %v2234 = vadd.f32 %v2106, %v2148
          %v2235 = vadd.f32 %v2107, %v2151
          %v2236 = vadd.f32 %v2108, %v2154
          %v2237 = vadd.f32 %v2109, %v2157
          %v2238 = vadd.f32 %v2110, %v2160
          %v2239 = vadd.f32 %v2111, %v2163
          %v2240 = vadd.f32 %v2112, %v2166
          %v2241 = vadd.f32 %v2113, %v2169
          %v2242 = vadd.f32 %v2114, %v2172
          %v2243 = vadd.f32 %v2115, %v2175
          %v2244 = vadd.f32 %v2116, %v2178
          %v2245 = vadd.f32 %v2117, %v2181
          %v2246 = vadd.f32 %v2118, %v2184
          %v2247 = vadd.f32 %v2119, %v2187
          %v2248 = vadd.f32 %v2120, %v2190
          %v2249 = vadd.f32 %v2121, %v2193
          %v2250 = vadd.f32 %v2122, %v2196
          %v2251 = vadd.f32 %v2123, %v2199
          %v2252 = vadd.f32 %v2124, %v2202
          %v2253 = vadd.f32 %v2125, %v2205
          %v2254 = vadd.f32 %v2126, %v2208
          %v2255 = vadd.f32 %v2127, %v2211
          %v2256 = vadd.f32 %v2128, %v2214
          %v2257 = vadd.f32 %v2129, %v2217
          %v2258 = vadd.f32 %v2130, %v2220
          %v2259 = vadd.f32 %v2131, %v2223
          %v2260 = vadd.f32 %v2132, %v2226
          %v2261 = vadd.f32 %v2133, %v2229
          %vm2262 = vcmask 7168
          %2263 = vst.msk [vmem:[#allocation3] sm:$0xff] %vm2262, %v2230
          %2264 = vst.msk [vmem:[#allocation3 + $0x8] sm:$0xff] %vm2262, %v2231
          %2265 = vst.msk [vmem:[#allocation3 + $0x10] sm:$0xff] %vm2262, %v2232
          %2266 = vst.msk [vmem:[#allocation3 + $0x18] sm:$0xff] %vm2262, %v2233
          %2267 = vst.msk [vmem:[#allocation3 + $0x20] sm:$0xff] %vm2262, %v2234
          %2268 = vst.msk [vmem:[#allocation3 + $0x28] sm:$0xff] %vm2262, %v2235
          %2269 = vst.msk [vmem:[#allocation3 + $0x30] sm:$0xff] %vm2262, %v2236
          %2270 = vst.msk [vmem:[#allocation3 + $0x38] sm:$0xff] %vm2262, %v2237
          %2271 = vst.msk [vmem:[#allocation3 + $0x40] sm:$0xff] %vm2262, %v2238
          %2272 = vst.msk [vmem:[#allocation3 + $0x48] sm:$0xff] %vm2262, %v2239
          %2273 = vst.msk [vmem:[#allocation3 + $0x50] sm:$0xff] %vm2262, %v2240
          %2274 = vst.msk [vmem:[#allocation3 + $0x58] sm:$0xff] %vm2262, %v2241
          %2275 = vst.msk [vmem:[#allocation3 + $0x60] sm:$0xff] %vm2262, %v2242
          %2276 = vst.msk [vmem:[#allocation3 + $0x68] sm:$0xff] %vm2262, %v2243
          %2277 = vst.msk [vmem:[#allocation3 + $0x70] sm:$0xff] %vm2262, %v2244
          %2278 = vst.msk [vmem:[#allocation3 + $0x78] sm:$0xff] %vm2262, %v2245
          %2279 = vst.msk [vmem:[#allocation3 + $0x80] sm:$0xff] %vm2262, %v2246
          %2280 = vst.msk [vmem:[#allocation3 + $0x88] sm:$0xff] %vm2262, %v2247
          %2281 = vst.msk [vmem:[#allocation3 + $0x90] sm:$0xff] %vm2262, %v2248
          %2282 = vst.msk [vmem:[#allocation3 + $0x98] sm:$0xff] %vm2262, %v2249
          %2283 = vst.msk [vmem:[#allocation3 + $0xa0] sm:$0xff] %vm2262, %v2250
          %2284 = vst.msk [vmem:[#allocation3 + $0xa8] sm:$0xff] %vm2262, %v2251
          %2285 = vst.msk [vmem:[#allocation3 + $0xb0] sm:$0xff] %vm2262, %v2252
          %2286 = vst.msk [vmem:[#allocation3 + $0xb8] sm:$0xff] %vm2262, %v2253
          %2287 = vst.msk [vmem:[#allocation3 + $0xc0] sm:$0xff] %vm2262, %v2254
          %2288 = vst.msk [vmem:[#allocation3 + $0xc8] sm:$0xff] %vm2262, %v2255
          %2289 = vst.msk [vmem:[#allocation3 + $0xd0] sm:$0xff] %vm2262, %v2256
          %2290 = vst.msk [vmem:[#allocation3 + $0xd8] sm:$0xff] %vm2262, %v2257
          %2291 = vst.msk [vmem:[#allocation3 + $0xe0] sm:$0xff] %vm2262, %v2258
          %2292 = vst.msk [vmem:[#allocation3 + $0xe8] sm:$0xff] %vm2262, %v2259
          %2293 = vst.msk [vmem:[#allocation3 + $0xf0] sm:$0xff] %vm2262, %v2260
          %2294 = vst.msk [vmem:[#allocation3 + $0xf8] sm:$0xff] %vm2262, %v2261
          %s2295 = smul.u32 %s32, 32
          %s2296 = smul.addr %s2295, 4
          %s2297 = scalar_lea.vmem %s4, %s2296
          %v2298 = vld [vmem:[%s2297] sm:$0xf]
          %v2299 = vld [vmem:[%s2297 + $0x4] sm:$0xf]
          %v2300 = vld [vmem:[%s2297 + $0x8] sm:$0xf]
          %v2301 = vld [vmem:[%s2297 + $0xc] sm:$0xf]
          %v2302 = vld [vmem:[%s2297 + $0x10] sm:$0xf]
          %v2303 = vld [vmem:[%s2297 + $0x14] sm:$0xf]
          %v2304 = vld [vmem:[%s2297 + $0x18] sm:$0xf]
          %v2305 = vld [vmem:[%s2297 + $0x1c] sm:$0xf]
          %v2306 = vld [vmem:[%s2297 + $0x20] sm:$0xf]
          %v2307 = vld [vmem:[%s2297 + $0x24] sm:$0xf]
          %v2308 = vld [vmem:[%s2297 + $0x28] sm:$0xf]
          %v2309 = vld [vmem:[%s2297 + $0x2c] sm:$0xf]
          %v2310 = vld [vmem:[%s2297 + $0x30] sm:$0xf]
          %v2311 = vld [vmem:[%s2297 + $0x34] sm:$0xf]
          %v2312 = vld [vmem:[%s2297 + $0x38] sm:$0xf]
          %v2313 = vld [vmem:[%s2297 + $0x3c] sm:$0xf]
          %v2314 = vld [vmem:[%s2297 + $0x40] sm:$0xf]
          %v2315 = vld [vmem:[%s2297 + $0x44] sm:$0xf]
          %v2316 = vld [vmem:[%s2297 + $0x48] sm:$0xf]
          %v2317 = vld [vmem:[%s2297 + $0x4c] sm:$0xf]
          %v2318 = vld [vmem:[%s2297 + $0x50] sm:$0xf]
          %v2319 = vld [vmem:[%s2297 + $0x54] sm:$0xf]
          %v2320 = vld [vmem:[%s2297 + $0x58] sm:$0xf]
          %v2321 = vld [vmem:[%s2297 + $0x5c] sm:$0xf]
          %v2322 = vld [vmem:[%s2297 + $0x60] sm:$0xf]
          %v2323 = vld [vmem:[%s2297 + $0x64] sm:$0xf]
          %v2324 = vld [vmem:[%s2297 + $0x68] sm:$0xf]
          %v2325 = vld [vmem:[%s2297 + $0x6c] sm:$0xf]
          %v2326 = vld [vmem:[%s2297 + $0x70] sm:$0xf]
          %v2327 = vld [vmem:[%s2297 + $0x74] sm:$0xf]
          %v2328 = vld [vmem:[%s2297 + $0x78] sm:$0xf]
          %v2329 = vld [vmem:[%s2297 + $0x7c] sm:$0xf]
          %v2330 = vld [vmem:[%s529] sm:$0xff]
          %v2331 = vld [vmem:[%s529 + $0x8] sm:$0xff]
          %v2332 = vld [vmem:[%s529 + $0x10] sm:$0xff]
          %v2333 = vld [vmem:[%s529 + $0x18] sm:$0xff]
          %v2334 = vld [vmem:[%s529 + $0x20] sm:$0xff]
          %v2335 = vld [vmem:[%s529 + $0x28] sm:$0xff]
          %v2336 = vld [vmem:[%s529 + $0x30] sm:$0xff]
          %v2337 = vld [vmem:[%s529 + $0x38] sm:$0xff]
          %v2338 = vld [vmem:[%s529 + $0x40] sm:$0xff]
          %v2339 = vld [vmem:[%s529 + $0x48] sm:$0xff]
          %v2340 = vld [vmem:[%s529 + $0x50] sm:$0xff]
          %v2341 = vld [vmem:[%s529 + $0x58] sm:$0xff]
          %v2342 = vld [vmem:[%s529 + $0x60] sm:$0xff]
          %v2343 = vld [vmem:[%s529 + $0x68] sm:$0xff]
          %v2344 = vld [vmem:[%s529 + $0x70] sm:$0xff]
          %v2345 = vld [vmem:[%s529 + $0x78] sm:$0xff]
          %v2346 = vld [vmem:[%s529 + $0x80] sm:$0xff]
          %v2347 = vld [vmem:[%s529 + $0x88] sm:$0xff]
          %v2348 = vld [vmem:[%s529 + $0x90] sm:$0xff]
          %v2349 = vld [vmem:[%s529 + $0x98] sm:$0xff]
          %v2350 = vld [vmem:[%s529 + $0xa0] sm:$0xff]
          %v2351 = vld [vmem:[%s529 + $0xa8] sm:$0xff]
          %v2352 = vld [vmem:[%s529 + $0xb0] sm:$0xff]
          %v2353 = vld [vmem:[%s529 + $0xb8] sm:$0xff]
          %v2354 = vld [vmem:[%s529 + $0xc0] sm:$0xff]
          %v2355 = vld [vmem:[%s529 + $0xc8] sm:$0xff]
          %v2356 = vld [vmem:[%s529 + $0xd0] sm:$0xff]
          %v2357 = vld [vmem:[%s529 + $0xd8] sm:$0xff]
          %v2358 = vld [vmem:[%s529 + $0xe0] sm:$0xff]
          %v2359 = vld [vmem:[%s529 + $0xe8] sm:$0xff]
          %v2360 = vld [vmem:[%s529 + $0xf0] sm:$0xff]
          %v2361 = vld [vmem:[%s529 + $0xf8] sm:$0xff]
          %2363 = vset.pattern.permute.xlu0 0
          %2364 = vperm.xlu0 %2363, %v1591
          %v2365 = vpop.permute.xlu0 %2364
          %2368 = vset.pattern.permute.xlu0 0
          %2369 = vperm.xlu0 %2368, %v1593
          %v2370 = vpop.permute.xlu0 %2369
          %2373 = vset.pattern.permute.xlu0 0
          %2374 = vperm.xlu0 %2373, %v1595
          %v2375 = vpop.permute.xlu0 %2374
          %2378 = vset.pattern.permute.xlu0 0
          %2379 = vperm.xlu0 %2378, %v1597
          %v2380 = vpop.permute.xlu0 %2379
          %2383 = vset.pattern.permute.xlu0 0
          %2384 = vperm.xlu0 %2383, %v1599
          %v2385 = vpop.permute.xlu0 %2384
          %2388 = vset.pattern.permute.xlu0 0
          %2389 = vperm.xlu0 %2388, %v1601
          %v2390 = vpop.permute.xlu0 %2389
          %2393 = vset.pattern.permute.xlu0 0
          %2394 = vperm.xlu0 %2393, %v1603
          %v2395 = vpop.permute.xlu0 %2394
          %2398 = vset.pattern.permute.xlu0 0
          %2399 = vperm.xlu0 %2398, %v1605
          %v2400 = vpop.permute.xlu0 %2399
          %2403 = vset.pattern.permute.xlu0 0
          %2404 = vperm.xlu0 %2403, %v1607
          %v2405 = vpop.permute.xlu0 %2404
          %2408 = vset.pattern.permute.xlu0 0
          %2409 = vperm.xlu0 %2408, %v1609
          %v2410 = vpop.permute.xlu0 %2409
          %2413 = vset.pattern.permute.xlu0 0
          %2414 = vperm.xlu0 %2413, %v1611
          %v2415 = vpop.permute.xlu0 %2414
          %2418 = vset.pattern.permute.xlu0 0
          %2419 = vperm.xlu0 %2418, %v1613
          %v2420 = vpop.permute.xlu0 %2419
          %2423 = vset.pattern.permute.xlu0 0
          %2424 = vperm.xlu0 %2423, %v1615
          %v2425 = vpop.permute.xlu0 %2424
          %2428 = vset.pattern.permute.xlu0 0
          %2429 = vperm.xlu0 %2428, %v1617
          %v2430 = vpop.permute.xlu0 %2429
          %2433 = vset.pattern.permute.xlu0 0
          %2434 = vperm.xlu0 %2433, %v1619
          %v2435 = vpop.permute.xlu0 %2434
          %2438 = vset.pattern.permute.xlu0 0
          %2439 = vperm.xlu0 %2438, %v1621
          %v2440 = vpop.permute.xlu0 %2439
          %2443 = vset.pattern.permute.xlu0 0
          %2444 = vperm.xlu0 %2443, %v1623
          %v2445 = vpop.permute.xlu0 %2444
          %2448 = vset.pattern.permute.xlu0 0
          %2449 = vperm.xlu0 %2448, %v1625
          %v2450 = vpop.permute.xlu0 %2449
          %2453 = vset.pattern.permute.xlu0 0
          %2454 = vperm.xlu0 %2453, %v1627
          %v2455 = vpop.permute.xlu0 %2454
          %2458 = vset.pattern.permute.xlu0 0
          %2459 = vperm.xlu0 %2458, %v1629
          %v2460 = vpop.permute.xlu0 %2459
          %2463 = vset.pattern.permute.xlu0 0
          %2464 = vperm.xlu0 %2463, %v1631
          %v2465 = vpop.permute.xlu0 %2464
          %2468 = vset.pattern.permute.xlu0 0
          %2469 = vperm.xlu0 %2468, %v1633
          %v2470 = vpop.permute.xlu0 %2469
          %2473 = vset.pattern.permute.xlu0 0
          %2474 = vperm.xlu0 %2473, %v1635
          %v2475 = vpop.permute.xlu0 %2474
          %2478 = vset.pattern.permute.xlu0 0
          %2479 = vperm.xlu0 %2478, %v1637
          %v2480 = vpop.permute.xlu0 %2479
          %2483 = vset.pattern.permute.xlu0 0
          %2484 = vperm.xlu0 %2483, %v1639
          %v2485 = vpop.permute.xlu0 %2484
          %2488 = vset.pattern.permute.xlu0 0
          %2489 = vperm.xlu0 %2488, %v1641
          %v2490 = vpop.permute.xlu0 %2489
          %2493 = vset.pattern.permute.xlu0 0
          %2494 = vperm.xlu0 %2493, %v1643
          %v2495 = vpop.permute.xlu0 %2494
          %2498 = vset.pattern.permute.xlu0 0
          %2499 = vperm.xlu0 %2498, %v1645
          %v2500 = vpop.permute.xlu0 %2499
          %2503 = vset.pattern.permute.xlu0 0
          %2504 = vperm.xlu0 %2503, %v1647
          %v2505 = vpop.permute.xlu0 %2504
          %2508 = vset.pattern.permute.xlu0 0
          %2509 = vperm.xlu0 %2508, %v1649
          %v2510 = vpop.permute.xlu0 %2509
          %2513 = vset.pattern.permute.xlu0 0
          %2514 = vperm.xlu0 %2513, %v1651
          %v2515 = vpop.permute.xlu0 %2514
          %2518 = vset.pattern.permute.xlu0 0
          %2519 = vperm.xlu0 %2518, %v1653
          %v2520 = vpop.permute.xlu0 %2519
          %v2522 = vmul.f32 %v2365, %v2330
          %v2523 = vmul.f32 %v2370, %v2331
          %v2524 = vmul.f32 %v2375, %v2332
          %v2525 = vmul.f32 %v2380, %v2333
          %v2526 = vmul.f32 %v2385, %v2334
          %v2527 = vmul.f32 %v2390, %v2335
          %v2528 = vmul.f32 %v2395, %v2336
          %v2529 = vmul.f32 %v2400, %v2337
          %v2530 = vmul.f32 %v2405, %v2338
          %v2531 = vmul.f32 %v2410, %v2339
          %v2532 = vmul.f32 %v2415, %v2340
          %v2533 = vmul.f32 %v2420, %v2341
          %v2534 = vmul.f32 %v2425, %v2342
          %v2535 = vmul.f32 %v2430, %v2343
          %v2536 = vmul.f32 %v2435, %v2344
          %v2537 = vmul.f32 %v2440, %v2345
          %v2538 = vmul.f32 %v2445, %v2346
          %v2539 = vmul.f32 %v2450, %v2347
          %v2540 = vmul.f32 %v2455, %v2348
          %v2541 = vmul.f32 %v2460, %v2349
          %v2542 = vmul.f32 %v2465, %v2350
          %v2543 = vmul.f32 %v2470, %v2351
          %v2544 = vmul.f32 %v2475, %v2352
          %v2545 = vmul.f32 %v2480, %v2353
          %v2546 = vmul.f32 %v2485, %v2354
          %v2547 = vmul.f32 %v2490, %v2355
          %v2548 = vmul.f32 %v2495, %v2356
          %v2549 = vmul.f32 %v2500, %v2357
          %v2550 = vmul.f32 %v2505, %v2358
          %v2551 = vmul.f32 %v2510, %v2359
          %v2552 = vmul.f32 %v2515, %v2360
          %v2553 = vmul.f32 %v2520, %v2361
          %v2554 = vpack.c.bf16 %v2008, %v2006
          %v2555 = vpack.c.bf16 %v2009, %v2007
          %v2556 = vpack.c.bf16 %v2012, %v2010
          %v2557 = vpack.c.bf16 %v2013, %v2011
          %v2558 = vpack.c.bf16 %v2016, %v2014
          %v2559 = vpack.c.bf16 %v2017, %v2015
          %v2560 = vpack.c.bf16 %v2020, %v2018
          %v2561 = vpack.c.bf16 %v2021, %v2019
          %v2562 = vpack.c.bf16 %v2024, %v2022
          %v2563 = vpack.c.bf16 %v2025, %v2023
          %v2564 = vpack.c.bf16 %v2028, %v2026
          %v2565 = vpack.c.bf16 %v2029, %v2027
          %v2566 = vpack.c.bf16 %v2032, %v2030
          %v2567 = vpack.c.bf16 %v2033, %v2031
          %v2568 = vpack.c.bf16 %v2036, %v2034
          %v2569 = vpack.c.bf16 %v2037, %v2035
          %v2570 = vpack.c.bf16 %v2040, %v2038
          %v2571 = vpack.c.bf16 %v2041, %v2039
          %v2572 = vpack.c.bf16 %v2044, %v2042
          %v2573 = vpack.c.bf16 %v2045, %v2043
          %v2574 = vpack.c.bf16 %v2048, %v2046
          %v2575 = vpack.c.bf16 %v2049, %v2047
          %v2576 = vpack.c.bf16 %v2052, %v2050
          %v2577 = vpack.c.bf16 %v2053, %v2051
          %v2578 = vpack.c.bf16 %v2056, %v2054
          %v2579 = vpack.c.bf16 %v2057, %v2055
          %v2580 = vpack.c.bf16 %v2060, %v2058
          %v2581 = vpack.c.bf16 %v2061, %v2059
          %v2582 = vpack.c.bf16 %v2064, %v2062
          %v2583 = vpack.c.bf16 %v2065, %v2063
          %v2584 = vpack.c.bf16 %v2068, %v2066
          %v2585 = vpack.c.bf16 %v2069, %v2067
          %v2618 = vunpack.c.l.b16 %v2298
          %v2619 = vunpack.c.l.b16 %v2299
          %v2620 = vunpack.c.l.b16 %v2300
          %v2621 = vunpack.c.l.b16 %v2301
          %v2622 = vunpack.c.l.b16 %v2302
          %v2623 = vunpack.c.l.b16 %v2303
          %v2624 = vunpack.c.l.b16 %v2304
          %v2625 = vunpack.c.l.b16 %v2305
          %v2626 = vunpack.c.l.b16 %v2306
          %v2627 = vunpack.c.l.b16 %v2307
          %v2628 = vunpack.c.l.b16 %v2308
          %v2629 = vunpack.c.l.b16 %v2309
          %v2630 = vunpack.c.l.b16 %v2310
          %v2631 = vunpack.c.l.b16 %v2311
          %v2632 = vunpack.c.l.b16 %v2312
          %v2633 = vunpack.c.l.b16 %v2313
          %v2634 = vunpack.c.l.b16 %v2314
          %v2635 = vunpack.c.l.b16 %v2315
          %v2636 = vunpack.c.l.b16 %v2316
          %v2637 = vunpack.c.l.b16 %v2317
          %v2638 = vunpack.c.l.b16 %v2318
          %v2639 = vunpack.c.l.b16 %v2319
          %v2640 = vunpack.c.l.b16 %v2320
          %v2641 = vunpack.c.l.b16 %v2321
          %v2642 = vunpack.c.l.b16 %v2322
          %v2643 = vunpack.c.l.b16 %v2323
          %v2644 = vunpack.c.l.b16 %v2324
          %v2645 = vunpack.c.l.b16 %v2325
          %v2646 = vunpack.c.l.b16 %v2326
          %v2647 = vunpack.c.l.b16 %v2327
          %v2648 = vunpack.c.l.b16 %v2328
          %v2649 = vunpack.c.l.b16 %v2329
          %v2650 = vpack.c.b16 %v2619, %v2618
          %v2651 = vpack.c.b16 %v2621, %v2620
          %v2652 = vpack.c.b16 %v2623, %v2622
          %v2653 = vpack.c.b16 %v2625, %v2624
          %v2654 = vpack.c.b16 %v2627, %v2626
          %v2655 = vpack.c.b16 %v2629, %v2628
          %v2656 = vpack.c.b16 %v2631, %v2630
          %v2657 = vpack.c.b16 %v2633, %v2632
          %v2658 = vpack.c.b16 %v2635, %v2634
          %v2659 = vpack.c.b16 %v2637, %v2636
          %v2660 = vpack.c.b16 %v2639, %v2638
          %v2661 = vpack.c.b16 %v2641, %v2640
          %v2662 = vpack.c.b16 %v2643, %v2642
          %v2663 = vpack.c.b16 %v2645, %v2644
          %v2664 = vpack.c.b16 %v2647, %v2646
          %v2665 = vpack.c.b16 %v2649, %v2648
          %2682 = vmatprep.subr.bf16.mxu0 0
          %2683 = vmatpush1.bf16.msra.mxu0 %v2657
          %2684 = vmatprep.subr.bf16.mxu0 0
          %2685 = vmatpush1.bf16.msra.mxu0 %v2656
          %2686 = vmatprep.subr.bf16.mxu0 0
          %2687 = vmatpush1.bf16.msra.mxu0 %v2655
          %2688 = vmatprep.subr.bf16.mxu0 0
          %2689 = vmatpush1.bf16.msra.mxu0 %v2654
          %2690 = vmatprep.subr.bf16.mxu0 0
          %2691 = vmatpush1.bf16.msra.mxu0 %v2653
          %2692 = vmatprep.subr.bf16.mxu0 0
          %2693 = vmatpush1.bf16.msra.mxu0 %v2652
          %2694 = vmatprep.subr.bf16.mxu0 0
          %2695 = vmatpush1.bf16.msra.mxu0 %v2651
          %2696 = vmatprep.subr.bf16.mxu0 0
          %2697 = vmatpush1.bf16.msra.mxu0 %v2650
          %2698 = vmatprep.subr.bf16.mxu0 0
          %2699 = vmatpush2.bf16.msra.mxu0 %v2665
          %2700 = vmatprep.subr.bf16.mxu0 0
          %2701 = vmatpush2.bf16.msra.mxu0 %v2664
          %2702 = vmatprep.subr.bf16.mxu0 0
          %2703 = vmatpush2.bf16.msra.mxu0 %v2663
          %2704 = vmatprep.subr.bf16.mxu0 0
          %2705 = vmatpush2.bf16.msra.mxu0 %v2662
          %2706 = vmatprep.subr.bf16.mxu0 0
          %2707 = vmatpush2.bf16.msra.mxu0 %v2661
          %2708 = vmatprep.subr.bf16.mxu0 0
          %2709 = vmatpush2.bf16.msra.mxu0 %v2660
          %2710 = vmatprep.subr.bf16.mxu0 0
          %2711 = vmatpush2.bf16.msra.mxu0 %v2659
          %2712 = vmatprep.subr.bf16.mxu0 0
          %2713 = vmatpush2.bf16.msra.mxu0 %v2658
          %2714 = vmatprep.mubr.bf16.mxu0 %v2555
          %2715 = vmatmul.mubr.bf16.gmra.mxu0 %v2554
          %v2716 = vpop.f32.mrf.mxu0
          %v2717 = vadd.f32 0.0, %v2716
          %v2718 = vpop.f32.mrf.mxu0
          %v2719 = vpop.f32.mrf.mxu0
          %v2720 = vadd.f32 0.0, %v2719
          %v2721 = vpop.f32.mrf.mxu0
          %2722 = vmatprep.mubr.bf16.mxu0 %v2557
          %2723 = vmatmul.mubr.bf16.gmra.mxu0 %v2556
          %v2724 = vpop.f32.mrf.mxu0
          %v2725 = vadd.f32 0.0, %v2724
          %v2726 = vpop.f32.mrf.mxu0
          %v2727 = vpop.f32.mrf.mxu0
          %v2728 = vadd.f32 0.0, %v2727
          %v2729 = vpop.f32.mrf.mxu0
          %2730 = vmatprep.mubr.bf16.mxu0 %v2559
          %2731 = vmatmul.mubr.bf16.gmra.mxu0 %v2558
          %v2732 = vpop.f32.mrf.mxu0
          %v2733 = vadd.f32 0.0, %v2732
          %v2734 = vpop.f32.mrf.mxu0
          %v2735 = vpop.f32.mrf.mxu0
          %v2736 = vadd.f32 0.0, %v2735
          %v2737 = vpop.f32.mrf.mxu0
          %2738 = vmatprep.mubr.bf16.mxu0 %v2561
          %2739 = vmatmul.mubr.bf16.gmra.mxu0 %v2560
          %v2740 = vpop.f32.mrf.mxu0
          %v2741 = vadd.f32 0.0, %v2740
          %v2742 = vpop.f32.mrf.mxu0
          %v2743 = vpop.f32.mrf.mxu0
          %v2744 = vadd.f32 0.0, %v2743
          %v2745 = vpop.f32.mrf.mxu0
          %2746 = vmatprep.mubr.bf16.mxu0 %v2563
          %2747 = vmatmul.mubr.bf16.gmra.mxu0 %v2562
          %v2748 = vpop.f32.mrf.mxu0
          %v2749 = vadd.f32 0.0, %v2748
          %v2750 = vpop.f32.mrf.mxu0
          %v2751 = vpop.f32.mrf.mxu0
          %v2752 = vadd.f32 0.0, %v2751
          %v2753 = vpop.f32.mrf.mxu0
          %2754 = vmatprep.mubr.bf16.mxu0 %v2565
          %2755 = vmatmul.mubr.bf16.gmra.mxu0 %v2564
          %v2756 = vpop.f32.mrf.mxu0
          %v2757 = vadd.f32 0.0, %v2756
          %v2758 = vpop.f32.mrf.mxu0
          %v2759 = vpop.f32.mrf.mxu0
          %v2760 = vadd.f32 0.0, %v2759
          %v2761 = vpop.f32.mrf.mxu0
          %2762 = vmatprep.mubr.bf16.mxu0 %v2567
          %2763 = vmatmul.mubr.bf16.gmra.mxu0 %v2566
          %v2764 = vpop.f32.mrf.mxu0
          %v2765 = vadd.f32 0.0, %v2764
          %v2766 = vpop.f32.mrf.mxu0
          %v2767 = vpop.f32.mrf.mxu0
          %v2768 = vadd.f32 0.0, %v2767
          %v2769 = vpop.f32.mrf.mxu0
          %2770 = vmatprep.mubr.bf16.mxu0 %v2569
          %2771 = vmatmul.mubr.bf16.gmra.mxu0 %v2568
          %v2772 = vpop.f32.mrf.mxu0
          %v2773 = vadd.f32 0.0, %v2772
          %v2774 = vpop.f32.mrf.mxu0
          %v2775 = vpop.f32.mrf.mxu0
          %v2776 = vadd.f32 0.0, %v2775
          %v2777 = vpop.f32.mrf.mxu0
          %2778 = vmatprep.mubr.bf16.mxu0 %v2571
          %2779 = vmatmul.mubr.bf16.gmra.mxu0 %v2570
          %v2780 = vpop.f32.mrf.mxu0
          %v2781 = vadd.f32 0.0, %v2780
          %v2782 = vpop.f32.mrf.mxu0
          %v2783 = vpop.f32.mrf.mxu0
          %v2784 = vadd.f32 0.0, %v2783
          %v2785 = vpop.f32.mrf.mxu0
          %2786 = vmatprep.mubr.bf16.mxu0 %v2573
          %2787 = vmatmul.mubr.bf16.gmra.mxu0 %v2572
          %v2788 = vpop.f32.mrf.mxu0
          %v2789 = vadd.f32 0.0, %v2788
          %v2790 = vpop.f32.mrf.mxu0
          %v2791 = vpop.f32.mrf.mxu0
          %v2792 = vadd.f32 0.0, %v2791
          %v2793 = vpop.f32.mrf.mxu0
          %2794 = vmatprep.mubr.bf16.mxu0 %v2575
          %2795 = vmatmul.mubr.bf16.gmra.mxu0 %v2574
          %v2796 = vpop.f32.mrf.mxu0
          %v2797 = vadd.f32 0.0, %v2796
          %v2798 = vpop.f32.mrf.mxu0
          %v2799 = vpop.f32.mrf.mxu0
          %v2800 = vadd.f32 0.0, %v2799
          %v2801 = vpop.f32.mrf.mxu0
          %2802 = vmatprep.mubr.bf16.mxu0 %v2577
          %2803 = vmatmul.mubr.bf16.gmra.mxu0 %v2576
          %v2804 = vpop.f32.mrf.mxu0
          %v2805 = vadd.f32 0.0, %v2804
          %v2806 = vpop.f32.mrf.mxu0
          %v2807 = vpop.f32.mrf.mxu0
          %v2808 = vadd.f32 0.0, %v2807
          %v2809 = vpop.f32.mrf.mxu0
          %2810 = vmatprep.mubr.bf16.mxu0 %v2579
          %2811 = vmatmul.mubr.bf16.gmra.mxu0 %v2578
          %v2812 = vpop.f32.mrf.mxu0
          %v2813 = vadd.f32 0.0, %v2812
          %v2814 = vpop.f32.mrf.mxu0
          %v2815 = vpop.f32.mrf.mxu0
          %v2816 = vadd.f32 0.0, %v2815
          %v2817 = vpop.f32.mrf.mxu0
          %2818 = vmatprep.mubr.bf16.mxu0 %v2581
          %2819 = vmatmul.mubr.bf16.gmra.mxu0 %v2580
          %v2820 = vpop.f32.mrf.mxu0
          %v2821 = vadd.f32 0.0, %v2820
          %v2822 = vpop.f32.mrf.mxu0
          %v2823 = vpop.f32.mrf.mxu0
          %v2824 = vadd.f32 0.0, %v2823
          %v2825 = vpop.f32.mrf.mxu0
          %2826 = vmatprep.mubr.bf16.mxu0 %v2583
          %2827 = vmatmul.mubr.bf16.gmra.mxu0 %v2582
          %v2828 = vpop.f32.mrf.mxu0
          %v2829 = vadd.f32 0.0, %v2828
          %v2830 = vpop.f32.mrf.mxu0
          %v2831 = vpop.f32.mrf.mxu0
          %v2832 = vadd.f32 0.0, %v2831
          %v2833 = vpop.f32.mrf.mxu0
          %2834 = vmatprep.mubr.bf16.mxu0 %v2585
          %2835 = vmatmul.mubr.bf16.gmra.mxu0 %v2584
          %v2836 = vpop.f32.mrf.mxu0
          %v2837 = vadd.f32 0.0, %v2836
          %v2838 = vpop.f32.mrf.mxu0
          %v2839 = vpop.f32.mrf.mxu0
          %v2840 = vadd.f32 0.0, %v2839
          %v2841 = vpop.f32.mrf.mxu0
          %2842 = vdwg.mxu0
          %v2843 = vadd.f32 %v2522, %v2717
          %v2844 = vadd.f32 %v2523, %v2720
          %v2845 = vadd.f32 %v2524, %v2725
          %v2846 = vadd.f32 %v2525, %v2728
          %v2847 = vadd.f32 %v2526, %v2733
          %v2848 = vadd.f32 %v2527, %v2736
          %v2849 = vadd.f32 %v2528, %v2741
          %v2850 = vadd.f32 %v2529, %v2744
          %v2851 = vadd.f32 %v2530, %v2749
          %v2852 = vadd.f32 %v2531, %v2752
          %v2853 = vadd.f32 %v2532, %v2757
          %v2854 = vadd.f32 %v2533, %v2760
          %v2855 = vadd.f32 %v2534, %v2765
          %v2856 = vadd.f32 %v2535, %v2768
          %v2857 = vadd.f32 %v2536, %v2773
          %v2858 = vadd.f32 %v2537, %v2776
          %v2859 = vadd.f32 %v2538, %v2781
          %v2860 = vadd.f32 %v2539, %v2784
          %v2861 = vadd.f32 %v2540, %v2789
          %v2862 = vadd.f32 %v2541, %v2792
          %v2863 = vadd.f32 %v2542, %v2797
          %v2864 = vadd.f32 %v2543, %v2800
          %v2865 = vadd.f32 %v2544, %v2805
          %v2866 = vadd.f32 %v2545, %v2808
          %v2867 = vadd.f32 %v2546, %v2813
          %v2868 = vadd.f32 %v2547, %v2816
          %v2869 = vadd.f32 %v2548, %v2821
          %v2870 = vadd.f32 %v2549, %v2824
          %v2871 = vadd.f32 %v2550, %v2829
          %v2872 = vadd.f32 %v2551, %v2832
          %v2873 = vadd.f32 %v2552, %v2837
          %v2874 = vadd.f32 %v2553, %v2840
          %2875 = vst [vmem:[%s529] sm:$0xff] %v2843
          %2876 = vst [vmem:[%s529 + $0x8] sm:$0xff] %v2844
          %2877 = vst [vmem:[%s529 + $0x10] sm:$0xff] %v2845
          %2878 = vst [vmem:[%s529 + $0x18] sm:$0xff] %v2846
          %2879 = vst [vmem:[%s529 + $0x20] sm:$0xff] %v2847
          %2880 = vst [vmem:[%s529 + $0x28] sm:$0xff] %v2848
          %2881 = vst [vmem:[%s529 + $0x30] sm:$0xff] %v2849
          %2882 = vst [vmem:[%s529 + $0x38] sm:$0xff] %v2850
          %2883 = vst [vmem:[%s529 + $0x40] sm:$0xff] %v2851
          %2884 = vst [vmem:[%s529 + $0x48] sm:$0xff] %v2852
          %2885 = vst [vmem:[%s529 + $0x50] sm:$0xff] %v2853
          %2886 = vst [vmem:[%s529 + $0x58] sm:$0xff] %v2854
          %2887 = vst [vmem:[%s529 + $0x60] sm:$0xff] %v2855
          %2888 = vst [vmem:[%s529 + $0x68] sm:$0xff] %v2856
          %2889 = vst [vmem:[%s529 + $0x70] sm:$0xff] %v2857
          %2890 = vst [vmem:[%s529 + $0x78] sm:$0xff] %v2858
          %2891 = vst [vmem:[%s529 + $0x80] sm:$0xff] %v2859
          %2892 = vst [vmem:[%s529 + $0x88] sm:$0xff] %v2860
          %2893 = vst [vmem:[%s529 + $0x90] sm:$0xff] %v2861
          %2894 = vst [vmem:[%s529 + $0x98] sm:$0xff] %v2862
          %2895 = vst [vmem:[%s529 + $0xa0] sm:$0xff] %v2863
          %2896 = vst [vmem:[%s529 + $0xa8] sm:$0xff] %v2864
          %2897 = vst [vmem:[%s529 + $0xb0] sm:$0xff] %v2865
          %2898 = vst [vmem:[%s529 + $0xb8] sm:$0xff] %v2866
          %2899 = vst [vmem:[%s529 + $0xc0] sm:$0xff] %v2867
          %2900 = vst [vmem:[%s529 + $0xc8] sm:$0xff] %v2868
          %2901 = vst [vmem:[%s529 + $0xd0] sm:$0xff] %v2869
          %2902 = vst [vmem:[%s529 + $0xd8] sm:$0xff] %v2870
          %2903 = vst [vmem:[%s529 + $0xe0] sm:$0xff] %v2871
          %2904 = vst [vmem:[%s529 + $0xe8] sm:$0xff] %v2872
          %2905 = vst [vmem:[%s529 + $0xf0] sm:$0xff] %v2873
          %2906 = vst [vmem:[%s529 + $0xf8] sm:$0xff] %v2874
          %2907 = vst.msk [vmem:[#allocation2] sm:$0xff] %vm2262, %v1526
          %2908 = vst.msk [vmem:[#allocation2 + $0x8] sm:$0xff] %vm2262, %v1527
          %2909 = vst.msk [vmem:[#allocation2 + $0x10] sm:$0xff] %vm2262, %v1528
          %2910 = vst.msk [vmem:[#allocation2 + $0x18] sm:$0xff] %vm2262, %v1529
          %2911 = vst.msk [vmem:[#allocation2 + $0x20] sm:$0xff] %vm2262, %v1530
          %2912 = vst.msk [vmem:[#allocation2 + $0x28] sm:$0xff] %vm2262, %v1531
          %2913 = vst.msk [vmem:[#allocation2 + $0x30] sm:$0xff] %vm2262, %v1532
          %2914 = vst.msk [vmem:[#allocation2 + $0x38] sm:$0xff] %vm2262, %v1533
          %2915 = vst.msk [vmem:[#allocation2 + $0x40] sm:$0xff] %vm2262, %v1534
          %2916 = vst.msk [vmem:[#allocation2 + $0x48] sm:$0xff] %vm2262, %v1535
          %2917 = vst.msk [vmem:[#allocation2 + $0x50] sm:$0xff] %vm2262, %v1536
          %2918 = vst.msk [vmem:[#allocation2 + $0x58] sm:$0xff] %vm2262, %v1537
          %2919 = vst.msk [vmem:[#allocation2 + $0x60] sm:$0xff] %vm2262, %v1538
          %2920 = vst.msk [vmem:[#allocation2 + $0x68] sm:$0xff] %vm2262, %v1539
          %2921 = vst.msk [vmem:[#allocation2 + $0x70] sm:$0xff] %vm2262, %v1540
          %2922 = vst.msk [vmem:[#allocation2 + $0x78] sm:$0xff] %vm2262, %v1541
          %2923 = vst.msk [vmem:[#allocation2 + $0x80] sm:$0xff] %vm2262, %v1542
          %2924 = vst.msk [vmem:[#allocation2 + $0x88] sm:$0xff] %vm2262, %v1543
          %2925 = vst.msk [vmem:[#allocation2 + $0x90] sm:$0xff] %vm2262, %v1544
          %2926 = vst.msk [vmem:[#allocation2 + $0x98] sm:$0xff] %vm2262, %v1545
          %2927 = vst.msk [vmem:[#allocation2 + $0xa0] sm:$0xff] %vm2262, %v1546
          %2928 = vst.msk [vmem:[#allocation2 + $0xa8] sm:$0xff] %vm2262, %v1547
          %2929 = vst.msk [vmem:[#allocation2 + $0xb0] sm:$0xff] %vm2262, %v1548
          %2930 = vst.msk [vmem:[#allocation2 + $0xb8] sm:$0xff] %vm2262, %v1549
          %2931 = vst.msk [vmem:[#allocation2 + $0xc0] sm:$0xff] %vm2262, %v1550
          %2932 = vst.msk [vmem:[#allocation2 + $0xc8] sm:$0xff] %vm2262, %v1551
          %2933 = vst.msk [vmem:[#allocation2 + $0xd0] sm:$0xff] %vm2262, %v1552
          %2934 = vst.msk [vmem:[#allocation2 + $0xd8] sm:$0xff] %vm2262, %v1553
          %2935 = vst.msk [vmem:[#allocation2 + $0xe0] sm:$0xff] %vm2262, %v1554
          %2936 = vst.msk [vmem:[#allocation2 + $0xe8] sm:$0xff] %vm2262, %v1555
          %2937 = vst.msk [vmem:[#allocation2 + $0xf0] sm:$0xff] %vm2262, %v1556
          %2938 = vst.msk [vmem:[#allocation2 + $0xf8] sm:$0xff] %vm2262, %v1557
        $region97: #{gat_forward.3} parent=84 // pred_fallthru
          _
        %p2939 = scmp.eq.s32.totalorder %s32, 2
        // Predicated region
        $region98: #{gat_forward.3} parent=84 // pred_check
          %p2940 = pneg %p2939
        $region99: #{gat_forward.3} parent=84 // pred_check_branch
          %2942 = sbr.rel (%p2940) target = $region101
        $region100: #{gat_forward.3} parent=84 // pred_region
          %v2943 = vld [vmem:[#allocation3] sm:$0xff]
          %v2944 = vld [vmem:[#allocation3 + $0x8] sm:$0xff]
          %v2945 = vld [vmem:[#allocation3 + $0x10] sm:$0xff]
          %v2946 = vld [vmem:[#allocation3 + $0x18] sm:$0xff]
          %v2947 = vld [vmem:[#allocation3 + $0x20] sm:$0xff]
          %v2948 = vld [vmem:[#allocation3 + $0x28] sm:$0xff]
          %v2949 = vld [vmem:[#allocation3 + $0x30] sm:$0xff]
          %v2950 = vld [vmem:[#allocation3 + $0x38] sm:$0xff]
          %v2951 = vld [vmem:[#allocation3 + $0x40] sm:$0xff]
          %v2952 = vld [vmem:[#allocation3 + $0x48] sm:$0xff]
          %v2953 = vld [vmem:[#allocation3 + $0x50] sm:$0xff]
          %v2954 = vld [vmem:[#allocation3 + $0x58] sm:$0xff]
          %v2955 = vld [vmem:[#allocation3 + $0x60] sm:$0xff]
          %v2956 = vld [vmem:[#allocation3 + $0x68] sm:$0xff]
          %v2957 = vld [vmem:[#allocation3 + $0x70] sm:$0xff]
          %v2958 = vld [vmem:[#allocation3 + $0x78] sm:$0xff]
          %v2959 = vld [vmem:[#allocation3 + $0x80] sm:$0xff]
          %v2960 = vld [vmem:[#allocation3 + $0x88] sm:$0xff]
          %v2961 = vld [vmem:[#allocation3 + $0x90] sm:$0xff]
          %v2962 = vld [vmem:[#allocation3 + $0x98] sm:$0xff]
          %v2963 = vld [vmem:[#allocation3 + $0xa0] sm:$0xff]
          %v2964 = vld [vmem:[#allocation3 + $0xa8] sm:$0xff]
          %v2965 = vld [vmem:[#allocation3 + $0xb0] sm:$0xff]
          %v2966 = vld [vmem:[#allocation3 + $0xb8] sm:$0xff]
          %v2967 = vld [vmem:[#allocation3 + $0xc0] sm:$0xff]
          %v2968 = vld [vmem:[#allocation3 + $0xc8] sm:$0xff]
          %v2969 = vld [vmem:[#allocation3 + $0xd0] sm:$0xff]
          %v2970 = vld [vmem:[#allocation3 + $0xd8] sm:$0xff]
          %v2971 = vld [vmem:[#allocation3 + $0xe0] sm:$0xff]
          %v2972 = vld [vmem:[#allocation3 + $0xe8] sm:$0xff]
          %v2973 = vld [vmem:[#allocation3 + $0xf0] sm:$0xff]
          %v2974 = vld [vmem:[#allocation3 + $0xf8] sm:$0xff]
          %v2975 = vrcp.pop %v2943
          %v2976 = vrcp.pop %v2944
          %v2977 = vrcp.pop %v2945
          %v2978 = vrcp.pop %v2946
          %v2979 = vrcp.pop %v2947
          %v2980 = vrcp.pop %v2948
          %v2981 = vrcp.pop %v2949
          %v2982 = vrcp.pop %v2950
          %v2983 = vrcp.pop %v2951
          %v2984 = vrcp.pop %v2952
          %v2985 = vrcp.pop %v2953
          %v2986 = vrcp.pop %v2954
          %v2987 = vrcp.pop %v2955
          %v2988 = vrcp.pop %v2956
          %v2989 = vrcp.pop %v2957
          %v2990 = vrcp.pop %v2958
          %v2991 = vrcp.pop %v2959
          %v2992 = vrcp.pop %v2960
          %v2993 = vrcp.pop %v2961
          %v2994 = vrcp.pop %v2962
          %v2995 = vrcp.pop %v2963
          %v2996 = vrcp.pop %v2964
          %v2997 = vrcp.pop %v2965
          %v2998 = vrcp.pop %v2966
          %v2999 = vrcp.pop %v2967
          %v3000 = vrcp.pop %v2968
          %v3001 = vrcp.pop %v2969
          %v3002 = vrcp.pop %v2970
          %v3003 = vrcp.pop %v2971
          %v3004 = vrcp.pop %v2972
          %v3005 = vrcp.pop %v2973
          %v3006 = vrcp.pop %v2974
          %v3007 = vld [vmem:[%s529] sm:$0xff]
          %v3008 = vld [vmem:[%s529 + $0x8] sm:$0xff]
          %v3009 = vld [vmem:[%s529 + $0x10] sm:$0xff]
          %v3010 = vld [vmem:[%s529 + $0x18] sm:$0xff]
          %v3011 = vld [vmem:[%s529 + $0x20] sm:$0xff]
          %v3012 = vld [vmem:[%s529 + $0x28] sm:$0xff]
          %v3013 = vld [vmem:[%s529 + $0x30] sm:$0xff]
          %v3014 = vld [vmem:[%s529 + $0x38] sm:$0xff]
          %v3015 = vld [vmem:[%s529 + $0x40] sm:$0xff]
          %v3016 = vld [vmem:[%s529 + $0x48] sm:$0xff]
          %v3017 = vld [vmem:[%s529 + $0x50] sm:$0xff]
          %v3018 = vld [vmem:[%s529 + $0x58] sm:$0xff]
          %v3019 = vld [vmem:[%s529 + $0x60] sm:$0xff]
          %v3020 = vld [vmem:[%s529 + $0x68] sm:$0xff]
          %v3021 = vld [vmem:[%s529 + $0x70] sm:$0xff]
          %v3022 = vld [vmem:[%s529 + $0x78] sm:$0xff]
          %v3023 = vld [vmem:[%s529 + $0x80] sm:$0xff]
          %v3024 = vld [vmem:[%s529 + $0x88] sm:$0xff]
          %v3025 = vld [vmem:[%s529 + $0x90] sm:$0xff]
          %v3026 = vld [vmem:[%s529 + $0x98] sm:$0xff]
          %v3027 = vld [vmem:[%s529 + $0xa0] sm:$0xff]
          %v3028 = vld [vmem:[%s529 + $0xa8] sm:$0xff]
          %v3029 = vld [vmem:[%s529 + $0xb0] sm:$0xff]
          %v3030 = vld [vmem:[%s529 + $0xb8] sm:$0xff]
          %v3031 = vld [vmem:[%s529 + $0xc0] sm:$0xff]
          %v3032 = vld [vmem:[%s529 + $0xc8] sm:$0xff]
          %v3033 = vld [vmem:[%s529 + $0xd0] sm:$0xff]
          %v3034 = vld [vmem:[%s529 + $0xd8] sm:$0xff]
          %v3035 = vld [vmem:[%s529 + $0xe0] sm:$0xff]
          %v3036 = vld [vmem:[%s529 + $0xe8] sm:$0xff]
          %v3037 = vld [vmem:[%s529 + $0xf0] sm:$0xff]
          %v3038 = vld [vmem:[%s529 + $0xf8] sm:$0xff]
          %3040 = vset.pattern.permute.xlu0 0
          %3041 = vperm.xlu0 %3040, %v2975
          %v3042 = vpop.permute.xlu0 %3041
          %3045 = vset.pattern.permute.xlu0 0
          %3046 = vperm.xlu0 %3045, %v2976
          %v3047 = vpop.permute.xlu0 %3046
          %3050 = vset.pattern.permute.xlu0 0
          %3051 = vperm.xlu0 %3050, %v2977
          %v3052 = vpop.permute.xlu0 %3051
          %3055 = vset.pattern.permute.xlu0 0
          %3056 = vperm.xlu0 %3055, %v2978
          %v3057 = vpop.permute.xlu0 %3056
          %3060 = vset.pattern.permute.xlu0 0
          %3061 = vperm.xlu0 %3060, %v2979
          %v3062 = vpop.permute.xlu0 %3061
          %3065 = vset.pattern.permute.xlu0 0
          %3066 = vperm.xlu0 %3065, %v2980
          %v3067 = vpop.permute.xlu0 %3066
          %3070 = vset.pattern.permute.xlu0 0
          %3071 = vperm.xlu0 %3070, %v2981
          %v3072 = vpop.permute.xlu0 %3071
          %3075 = vset.pattern.permute.xlu0 0
          %3076 = vperm.xlu0 %3075, %v2982
          %v3077 = vpop.permute.xlu0 %3076
          %3080 = vset.pattern.permute.xlu0 0
          %3081 = vperm.xlu0 %3080, %v2983
          %v3082 = vpop.permute.xlu0 %3081
          %3085 = vset.pattern.permute.xlu0 0
          %3086 = vperm.xlu0 %3085, %v2984
          %v3087 = vpop.permute.xlu0 %3086
          %3090 = vset.pattern.permute.xlu0 0
          %3091 = vperm.xlu0 %3090, %v2985
          %v3092 = vpop.permute.xlu0 %3091
          %3095 = vset.pattern.permute.xlu0 0
          %3096 = vperm.xlu0 %3095, %v2986
          %v3097 = vpop.permute.xlu0 %3096
          %3100 = vset.pattern.permute.xlu0 0
          %3101 = vperm.xlu0 %3100, %v2987
          %v3102 = vpop.permute.xlu0 %3101
          %3105 = vset.pattern.permute.xlu0 0
          %3106 = vperm.xlu0 %3105, %v2988
          %v3107 = vpop.permute.xlu0 %3106
          %3110 = vset.pattern.permute.xlu0 0
          %3111 = vperm.xlu0 %3110, %v2989
          %v3112 = vpop.permute.xlu0 %3111
          %3115 = vset.pattern.permute.xlu0 0
          %3116 = vperm.xlu0 %3115, %v2990
          %v3117 = vpop.permute.xlu0 %3116
          %3120 = vset.pattern.permute.xlu0 0
          %3121 = vperm.xlu0 %3120, %v2991
          %v3122 = vpop.permute.xlu0 %3121
          %3125 = vset.pattern.permute.xlu0 0
          %3126 = vperm.xlu0 %3125, %v2992
          %v3127 = vpop.permute.xlu0 %3126
          %3130 = vset.pattern.permute.xlu0 0
          %3131 = vperm.xlu0 %3130, %v2993
          %v3132 = vpop.permute.xlu0 %3131
          %3135 = vset.pattern.permute.xlu0 0
          %3136 = vperm.xlu0 %3135, %v2994
          %v3137 = vpop.permute.xlu0 %3136
          %3140 = vset.pattern.permute.xlu0 0
          %3141 = vperm.xlu0 %3140, %v2995
          %v3142 = vpop.permute.xlu0 %3141
          %3145 = vset.pattern.permute.xlu0 0
          %3146 = vperm.xlu0 %3145, %v2996
          %v3147 = vpop.permute.xlu0 %3146
          %3150 = vset.pattern.permute.xlu0 0
          %3151 = vperm.xlu0 %3150, %v2997
          %v3152 = vpop.permute.xlu0 %3151
          %3155 = vset.pattern.permute.xlu0 0
          %3156 = vperm.xlu0 %3155, %v2998
          %v3157 = vpop.permute.xlu0 %3156
          %3160 = vset.pattern.permute.xlu0 0
          %3161 = vperm.xlu0 %3160, %v2999
          %v3162 = vpop.permute.xlu0 %3161
          %3165 = vset.pattern.permute.xlu0 0
          %3166 = vperm.xlu0 %3165, %v3000
          %v3167 = vpop.permute.xlu0 %3166
          %3170 = vset.pattern.permute.xlu0 0
          %3171 = vperm.xlu0 %3170, %v3001
          %v3172 = vpop.permute.xlu0 %3171
          %3175 = vset.pattern.permute.xlu0 0
          %3176 = vperm.xlu0 %3175, %v3002
          %v3177 = vpop.permute.xlu0 %3176
          %3180 = vset.pattern.permute.xlu0 0
          %3181 = vperm.xlu0 %3180, %v3003
          %v3182 = vpop.permute.xlu0 %3181
          %3185 = vset.pattern.permute.xlu0 0
          %3186 = vperm.xlu0 %3185, %v3004
          %v3187 = vpop.permute.xlu0 %3186
          %3190 = vset.pattern.permute.xlu0 0
          %3191 = vperm.xlu0 %3190, %v3005
          %v3192 = vpop.permute.xlu0 %3191
          %3195 = vset.pattern.permute.xlu0 0
          %3196 = vperm.xlu0 %3195, %v3006
          %v3197 = vpop.permute.xlu0 %3196
          %v3199 = vmul.f32 %v3007, %v3042
          %v3200 = vmul.f32 %v3008, %v3047
          %v3201 = vmul.f32 %v3009, %v3052
          %v3202 = vmul.f32 %v3010, %v3057
          %v3203 = vmul.f32 %v3011, %v3062
          %v3204 = vmul.f32 %v3012, %v3067
          %v3205 = vmul.f32 %v3013, %v3072
          %v3206 = vmul.f32 %v3014, %v3077
          %v3207 = vmul.f32 %v3015, %v3082
          %v3208 = vmul.f32 %v3016, %v3087
          %v3209 = vmul.f32 %v3017, %v3092
          %v3210 = vmul.f32 %v3018, %v3097
          %v3211 = vmul.f32 %v3019, %v3102
          %v3212 = vmul.f32 %v3020, %v3107
          %v3213 = vmul.f32 %v3021, %v3112
          %v3214 = vmul.f32 %v3022, %v3117
          %v3215 = vmul.f32 %v3023, %v3122
          %v3216 = vmul.f32 %v3024, %v3127
          %v3217 = vmul.f32 %v3025, %v3132
          %v3218 = vmul.f32 %v3026, %v3137
          %v3219 = vmul.f32 %v3027, %v3142
          %v3220 = vmul.f32 %v3028, %v3147
          %v3221 = vmul.f32 %v3029, %v3152
          %v3222 = vmul.f32 %v3030, %v3157
          %v3223 = vmul.f32 %v3031, %v3162
          %v3224 = vmul.f32 %v3032, %v3167
          %v3225 = vmul.f32 %v3033, %v3172
          %v3226 = vmul.f32 %v3034, %v3177
          %v3227 = vmul.f32 %v3035, %v3182
          %v3228 = vmul.f32 %v3036, %v3187
          %v3229 = vmul.f32 %v3037, %v3192
          %v3230 = vmul.f32 %v3038, %v3197
          %v3231 = vld [vmem:[%s5] sm:$0x1]
          %v3233 = vlaneseq
          %v3234 = vshrl.u32 %v3233, 7
          %v3235 = vsub.s32 0, %v3234
          %v3236 = vrot.slane %v3231, %v3235
          %v3238 = vadd.f32 %v3199, %v3236
          %v3239 = vadd.f32 %v3200, %v3236
          %v3240 = vadd.f32 %v3201, %v3236
          %v3241 = vadd.f32 %v3202, %v3236
          %v3242 = vadd.f32 %v3203, %v3236
          %v3243 = vadd.f32 %v3204, %v3236
          %v3244 = vadd.f32 %v3205, %v3236
          %v3245 = vadd.f32 %v3206, %v3236
          %v3246 = vadd.f32 %v3207, %v3236
          %v3247 = vadd.f32 %v3208, %v3236
          %v3248 = vadd.f32 %v3209, %v3236
          %v3249 = vadd.f32 %v3210, %v3236
          %v3250 = vadd.f32 %v3211, %v3236
          %v3251 = vadd.f32 %v3212, %v3236
          %v3252 = vadd.f32 %v3213, %v3236
          %v3253 = vadd.f32 %v3214, %v3236
          %v3254 = vadd.f32 %v3215, %v3236
          %v3255 = vadd.f32 %v3216, %v3236
          %v3256 = vadd.f32 %v3217, %v3236
          %v3257 = vadd.f32 %v3218, %v3236
          %v3258 = vadd.f32 %v3219, %v3236
          %v3259 = vadd.f32 %v3220, %v3236
          %v3260 = vadd.f32 %v3221, %v3236
          %v3261 = vadd.f32 %v3222, %v3236
          %v3262 = vadd.f32 %v3223, %v3236
          %v3263 = vadd.f32 %v3224, %v3236
          %v3264 = vadd.f32 %v3225, %v3236
          %v3265 = vadd.f32 %v3226, %v3236
          %v3266 = vadd.f32 %v3227, %v3236
          %v3267 = vadd.f32 %v3228, %v3236
          %v3268 = vadd.f32 %v3229, %v3236
          %v3269 = vadd.f32 %v3230, %v3236
          %v3270 = vmax.f32 %v3238, 0.0
          %v3271 = vmax.f32 %v3239, 0.0
          %v3272 = vmax.f32 %v3240, 0.0
          %v3273 = vmax.f32 %v3241, 0.0
          %v3274 = vmax.f32 %v3242, 0.0
          %v3275 = vmax.f32 %v3243, 0.0
          %v3276 = vmax.f32 %v3244, 0.0
          %v3277 = vmax.f32 %v3245, 0.0
          %v3278 = vmax.f32 %v3246, 0.0
          %v3279 = vmax.f32 %v3247, 0.0
          %v3280 = vmax.f32 %v3248, 0.0
          %v3281 = vmax.f32 %v3249, 0.0
          %v3282 = vmax.f32 %v3250, 0.0
          %v3283 = vmax.f32 %v3251, 0.0
          %v3284 = vmax.f32 %v3252, 0.0
          %v3285 = vmax.f32 %v3253, 0.0
          %v3286 = vmax.f32 %v3254, 0.0
          %v3287 = vmax.f32 %v3255, 0.0
          %v3288 = vmax.f32 %v3256, 0.0
          %v3289 = vmax.f32 %v3257, 0.0
          %v3290 = vmax.f32 %v3258, 0.0
          %v3291 = vmax.f32 %v3259, 0.0
          %v3292 = vmax.f32 %v3260, 0.0
          %v3293 = vmax.f32 %v3261, 0.0
          %v3294 = vmax.f32 %v3262, 0.0
          %v3295 = vmax.f32 %v3263, 0.0
          %v3296 = vmax.f32 %v3264, 0.0
          %v3297 = vmax.f32 %v3265, 0.0
          %v3298 = vmax.f32 %v3266, 0.0
          %v3299 = vmax.f32 %v3267, 0.0
          %v3300 = vmax.f32 %v3268, 0.0
          %v3301 = vmax.f32 %v3269, 0.0
          %3302 = vst [vmem:[%s529] sm:$0xff] %v3270
          %3303 = vst [vmem:[%s529 + $0x8] sm:$0xff] %v3271
          %3304 = vst [vmem:[%s529 + $0x10] sm:$0xff] %v3272
          %3305 = vst [vmem:[%s529 + $0x18] sm:$0xff] %v3273
          %3306 = vst [vmem:[%s529 + $0x20] sm:$0xff] %v3274
          %3307 = vst [vmem:[%s529 + $0x28] sm:$0xff] %v3275
          %3308 = vst [vmem:[%s529 + $0x30] sm:$0xff] %v3276
          %3309 = vst [vmem:[%s529 + $0x38] sm:$0xff] %v3277
          %3310 = vst [vmem:[%s529 + $0x40] sm:$0xff] %v3278
          %3311 = vst [vmem:[%s529 + $0x48] sm:$0xff] %v3279
          %3312 = vst [vmem:[%s529 + $0x50] sm:$0xff] %v3280
          %3313 = vst [vmem:[%s529 + $0x58] sm:$0xff] %v3281
          %3314 = vst [vmem:[%s529 + $0x60] sm:$0xff] %v3282
          %3315 = vst [vmem:[%s529 + $0x68] sm:$0xff] %v3283
          %3316 = vst [vmem:[%s529 + $0x70] sm:$0xff] %v3284
          %3317 = vst [vmem:[%s529 + $0x78] sm:$0xff] %v3285
          %3318 = vst [vmem:[%s529 + $0x80] sm:$0xff] %v3286
          %3319 = vst [vmem:[%s529 + $0x88] sm:$0xff] %v3287
          %3320 = vst [vmem:[%s529 + $0x90] sm:$0xff] %v3288
          %3321 = vst [vmem:[%s529 + $0x98] sm:$0xff] %v3289
          %3322 = vst [vmem:[%s529 + $0xa0] sm:$0xff] %v3290
          %3323 = vst [vmem:[%s529 + $0xa8] sm:$0xff] %v3291
          %3324 = vst [vmem:[%s529 + $0xb0] sm:$0xff] %v3292
          %3325 = vst [vmem:[%s529 + $0xb8] sm:$0xff] %v3293
          %3326 = vst [vmem:[%s529 + $0xc0] sm:$0xff] %v3294
          %3327 = vst [vmem:[%s529 + $0xc8] sm:$0xff] %v3295
          %3328 = vst [vmem:[%s529 + $0xd0] sm:$0xff] %v3296
          %3329 = vst [vmem:[%s529 + $0xd8] sm:$0xff] %v3297
          %3330 = vst [vmem:[%s529 + $0xe0] sm:$0xff] %v3298
          %3331 = vst [vmem:[%s529 + $0xe8] sm:$0xff] %v3299
          %3332 = vst [vmem:[%s529 + $0xf0] sm:$0xff] %v3300
          %3333 = vst [vmem:[%s529 + $0xf8] sm:$0xff] %v3301
          %v3334 = vpack.c.bf16 %v3271, %v3270
          %v3335 = vpack.c.bf16 %v3273, %v3272
          %v3336 = vpack.c.bf16 %v3275, %v3274
          %v3337 = vpack.c.bf16 %v3277, %v3276
          %v3338 = vpack.c.bf16 %v3279, %v3278
          %v3339 = vpack.c.bf16 %v3281, %v3280
          %v3340 = vpack.c.bf16 %v3283, %v3282
          %v3341 = vpack.c.bf16 %v3285, %v3284
          %v3342 = vpack.c.bf16 %v3287, %v3286
          %v3343 = vpack.c.bf16 %v3289, %v3288
          %v3344 = vpack.c.bf16 %v3291, %v3290
          %v3345 = vpack.c.bf16 %v3293, %v3292
          %v3346 = vpack.c.bf16 %v3295, %v3294
          %v3347 = vpack.c.bf16 %v3297, %v3296
          %v3348 = vpack.c.bf16 %v3299, %v3298
          %v3349 = vpack.c.bf16 %v3301, %v3300
          %v3350 = vld [vmem:[%s6] sm:$0xf]
          %v3351 = vld [vmem:[%s6 + $0x4] sm:$0xf]
          %v3352 = vld [vmem:[%s6 + $0x8] sm:$0xf]
          %v3353 = vld [vmem:[%s6 + $0xc] sm:$0xf]
          %v3354 = vld [vmem:[%s6 + $0x10] sm:$0xf]
          %v3355 = vld [vmem:[%s6 + $0x14] sm:$0xf]
          %v3356 = vld [vmem:[%s6 + $0x18] sm:$0xf]
          %v3357 = vld [vmem:[%s6 + $0x1c] sm:$0xf]
          %v3358 = vld [vmem:[%s6 + $0x20] sm:$0xf]
          %v3359 = vld [vmem:[%s6 + $0x24] sm:$0xf]
          %v3360 = vld [vmem:[%s6 + $0x28] sm:$0xf]
          %v3361 = vld [vmem:[%s6 + $0x2c] sm:$0xf]
          %v3362 = vld [vmem:[%s6 + $0x30] sm:$0xf]
          %v3363 = vld [vmem:[%s6 + $0x34] sm:$0xf]
          %v3364 = vld [vmem:[%s6 + $0x38] sm:$0xf]
          %v3365 = vld [vmem:[%s6 + $0x3c] sm:$0xf]
          %v3366 = vld [vmem:[%s7] sm:$0x1]
          %v3368 = vlaneseq
          %v3369 = vshrl.u32 %v3368, 7
          %v3370 = vsub.s32 0, %v3369
          %v3371 = vrot.slane %v3366, %v3370
          %v3389 = vunpack.c.l.b16 %v3350
          %v3390 = vunpack.c.l.b16 %v3351
          %v3391 = vunpack.c.l.b16 %v3352
          %v3392 = vunpack.c.l.b16 %v3353
          %v3393 = vunpack.c.l.b16 %v3354
          %v3394 = vunpack.c.l.b16 %v3355
          %v3395 = vunpack.c.l.b16 %v3356
          %v3396 = vunpack.c.l.b16 %v3357
          %v3397 = vunpack.c.l.b16 %v3358
          %v3398 = vunpack.c.l.b16 %v3359
          %v3399 = vunpack.c.l.b16 %v3360
          %v3400 = vunpack.c.l.b16 %v3361
          %v3401 = vunpack.c.l.b16 %v3362
          %v3402 = vunpack.c.l.b16 %v3363
          %v3403 = vunpack.c.l.b16 %v3364
          %v3404 = vunpack.c.l.b16 %v3365
          %v3405 = vpack.c.b16 %v3390, %v3389
          %v3406 = vpack.c.b16 %v3392, %v3391
          %v3407 = vpack.c.b16 %v3394, %v3393
          %v3408 = vpack.c.b16 %v3396, %v3395
          %v3409 = vpack.c.b16 %v3398, %v3397
          %v3410 = vpack.c.b16 %v3400, %v3399
          %v3411 = vpack.c.b16 %v3402, %v3401
          %v3412 = vpack.c.b16 %v3404, %v3403
          %3421 = vmatprep.subr.bf16.mxu0 0
          %3422 = vmatpush1.bf16.msra.mxu0 %v3412
          %3423 = vmatprep.subr.bf16.mxu0 0
          %3424 = vmatpush1.bf16.msra.mxu0 %v3411
          %3425 = vmatprep.subr.bf16.mxu0 0
          %3426 = vmatpush1.bf16.msra.mxu0 %v3410
          %3427 = vmatprep.subr.bf16.mxu0 0
          %3428 = vmatpush1.bf16.msra.mxu0 %v3409
          %3429 = vmatprep.subr.bf16.mxu0 0
          %3430 = vmatpush1.bf16.msra.mxu0 %v3408
          %3431 = vmatprep.subr.bf16.mxu0 0
          %3432 = vmatpush1.bf16.msra.mxu0 %v3407
          %3433 = vmatprep.subr.bf16.mxu0 0
          %3434 = vmatpush1.bf16.msra.mxu0 %v3406
          %3435 = vmatprep.subr.bf16.mxu0 0
          %3436 = vmatpush1.bf16.msra.mxu0 %v3405
          %3437 = vmatprep.subr.bf16.mxu0 0
          %3438 = vmatpush2.bf16.msra.mxu0 0
          %3439 = vmatprep.subr.bf16.mxu0 0
          %3440 = vmatpush2.bf16.msra.mxu0 0
          %3441 = vmatprep.subr.bf16.mxu0 0
          %3442 = vmatpush2.bf16.msra.mxu0 0
          %3443 = vmatprep.subr.bf16.mxu0 0
          %3444 = vmatpush2.bf16.msra.mxu0 0
          %3445 = vmatprep.subr.bf16.mxu0 0
          %3446 = vmatpush2.bf16.msra.mxu0 0
          %3447 = vmatprep.subr.bf16.mxu0 0
          %3448 = vmatpush2.bf16.msra.mxu0 0
          %3449 = vmatprep.subr.bf16.mxu0 0
          %3450 = vmatpush2.bf16.msra.mxu0 0
          %3451 = vmatprep.subr.bf16.mxu0 0
          %3452 = vmatpush2.bf16.msra.mxu0 0
          %3453 = vmatprep.mubr.bf16.mxu0 0
          %3454 = vmatmul.mubr.bf16.gmra.mxu0 %v3334
          %v3455 = vpop.f32.mrf.mxu0
          %v3456 = vadd.f32 %v3371, %v3455
          %v3457 = vpop.f32.mrf.mxu0
          %v3458 = vpop.f32.mrf.mxu0
          %v3459 = vadd.f32 %v3371, %v3458
          %v3460 = vpop.f32.mrf.mxu0
          %3461 = vmatprep.mubr.bf16.mxu0 0
          %3462 = vmatmul.mubr.bf16.gmra.mxu0 %v3335
          %v3463 = vpop.f32.mrf.mxu0
          %v3464 = vadd.f32 %v3371, %v3463
          %v3465 = vpop.f32.mrf.mxu0
          %v3466 = vpop.f32.mrf.mxu0
          %v3467 = vadd.f32 %v3371, %v3466
          %v3468 = vpop.f32.mrf.mxu0
          %3469 = vmatprep.mubr.bf16.mxu0 0
          %3470 = vmatmul.mubr.bf16.gmra.mxu0 %v3336
          %v3471 = vpop.f32.mrf.mxu0
          %v3472 = vadd.f32 %v3371, %v3471
          %v3473 = vpop.f32.mrf.mxu0
          %v3474 = vpop.f32.mrf.mxu0
          %v3475 = vadd.f32 %v3371, %v3474
          %v3476 = vpop.f32.mrf.mxu0
          %3477 = vmatprep.mubr.bf16.mxu0 0
          %3478 = vmatmul.mubr.bf16.gmra.mxu0 %v3337
          %v3479 = vpop.f32.mrf.mxu0
          %v3480 = vadd.f32 %v3371, %v3479
          %v3481 = vpop.f32.mrf.mxu0
          %v3482 = vpop.f32.mrf.mxu0
          %v3483 = vadd.f32 %v3371, %v3482
          %v3484 = vpop.f32.mrf.mxu0
          %3485 = vmatprep.mubr.bf16.mxu0 0
          %3486 = vmatmul.mubr.bf16.gmra.mxu0 %v3338
          %v3487 = vpop.f32.mrf.mxu0
          %v3488 = vadd.f32 %v3371, %v3487
          %v3489 = vpop.f32.mrf.mxu0
          %v3490 = vpop.f32.mrf.mxu0
          %v3491 = vadd.f32 %v3371, %v3490
          %v3492 = vpop.f32.mrf.mxu0
          %3493 = vmatprep.mubr.bf16.mxu0 0
          %3494 = vmatmul.mubr.bf16.gmra.mxu0 %v3339
          %v3495 = vpop.f32.mrf.mxu0
          %v3496 = vadd.f32 %v3371, %v3495
          %v3497 = vpop.f32.mrf.mxu0
          %v3498 = vpop.f32.mrf.mxu0
          %v3499 = vadd.f32 %v3371, %v3498
          %v3500 = vpop.f32.mrf.mxu0
          %3501 = vmatprep.mubr.bf16.mxu0 0
          %3502 = vmatmul.mubr.bf16.gmra.mxu0 %v3340
          %v3503 = vpop.f32.mrf.mxu0
          %v3504 = vadd.f32 %v3371, %v3503
          %v3505 = vpop.f32.mrf.mxu0
          %v3506 = vpop.f32.mrf.mxu0
          %v3507 = vadd.f32 %v3371, %v3506
          %v3508 = vpop.f32.mrf.mxu0
          %3509 = vmatprep.mubr.bf16.mxu0 0
          %3510 = vmatmul.mubr.bf16.gmra.mxu0 %v3341
          %v3511 = vpop.f32.mrf.mxu0
          %v3512 = vadd.f32 %v3371, %v3511
          %v3513 = vpop.f32.mrf.mxu0
          %v3514 = vpop.f32.mrf.mxu0
          %v3515 = vadd.f32 %v3371, %v3514
          %v3516 = vpop.f32.mrf.mxu0
          %3517 = vmatprep.mubr.bf16.mxu0 0
          %3518 = vmatmul.mubr.bf16.gmra.mxu0 %v3342
          %v3519 = vpop.f32.mrf.mxu0
          %v3520 = vadd.f32 %v3371, %v3519
          %v3521 = vpop.f32.mrf.mxu0
          %v3522 = vpop.f32.mrf.mxu0
          %v3523 = vadd.f32 %v3371, %v3522
          %v3524 = vpop.f32.mrf.mxu0
          %3525 = vmatprep.mubr.bf16.mxu0 0
          %3526 = vmatmul.mubr.bf16.gmra.mxu0 %v3343
          %v3527 = vpop.f32.mrf.mxu0
          %v3528 = vadd.f32 %v3371, %v3527
          %v3529 = vpop.f32.mrf.mxu0
          %v3530 = vpop.f32.mrf.mxu0
          %v3531 = vadd.f32 %v3371, %v3530
          %v3532 = vpop.f32.mrf.mxu0
          %3533 = vmatprep.mubr.bf16.mxu0 0
          %3534 = vmatmul.mubr.bf16.gmra.mxu0 %v3344
          %v3535 = vpop.f32.mrf.mxu0
          %v3536 = vadd.f32 %v3371, %v3535
          %v3537 = vpop.f32.mrf.mxu0
          %v3538 = vpop.f32.mrf.mxu0
          %v3539 = vadd.f32 %v3371, %v3538
          %v3540 = vpop.f32.mrf.mxu0
          %3541 = vmatprep.mubr.bf16.mxu0 0
          %3542 = vmatmul.mubr.bf16.gmra.mxu0 %v3345
          %v3543 = vpop.f32.mrf.mxu0
          %v3544 = vadd.f32 %v3371, %v3543
          %v3545 = vpop.f32.mrf.mxu0
          %v3546 = vpop.f32.mrf.mxu0
          %v3547 = vadd.f32 %v3371, %v3546
          %v3548 = vpop.f32.mrf.mxu0
          %3549 = vmatprep.mubr.bf16.mxu0 0
          %3550 = vmatmul.mubr.bf16.gmra.mxu0 %v3346
          %v3551 = vpop.f32.mrf.mxu0
          %v3552 = vadd.f32 %v3371, %v3551
          %v3553 = vpop.f32.mrf.mxu0
          %v3554 = vpop.f32.mrf.mxu0
          %v3555 = vadd.f32 %v3371, %v3554
          %v3556 = vpop.f32.mrf.mxu0
          %3557 = vmatprep.mubr.bf16.mxu0 0
          %3558 = vmatmul.mubr.bf16.gmra.mxu0 %v3347
          %v3559 = vpop.f32.mrf.mxu0
          %v3560 = vadd.f32 %v3371, %v3559
          %v3561 = vpop.f32.mrf.mxu0
          %v3562 = vpop.f32.mrf.mxu0
          %v3563 = vadd.f32 %v3371, %v3562
          %v3564 = vpop.f32.mrf.mxu0
          %3565 = vmatprep.mubr.bf16.mxu0 0
          %3566 = vmatmul.mubr.bf16.gmra.mxu0 %v3348
          %v3567 = vpop.f32.mrf.mxu0
          %v3568 = vadd.f32 %v3371, %v3567
          %v3569 = vpop.f32.mrf.mxu0
          %v3570 = vpop.f32.mrf.mxu0
          %v3571 = vadd.f32 %v3371, %v3570
          %v3572 = vpop.f32.mrf.mxu0
          %3573 = vmatprep.mubr.bf16.mxu0 0
          %3574 = vmatmul.mubr.bf16.gmra.mxu0 %v3349
          %v3575 = vpop.f32.mrf.mxu0
          %v3576 = vadd.f32 %v3371, %v3575
          %v3577 = vpop.f32.mrf.mxu0
          %v3578 = vpop.f32.mrf.mxu0
          %v3579 = vadd.f32 %v3371, %v3578
          %v3580 = vpop.f32.mrf.mxu0
          %3581 = vdwg.mxu0
          %3582 = vst [vmem:[%s535] sm:$0xff] %v3456
          %3583 = vst [vmem:[%s535 + $0x8] sm:$0xff] %v3459
          %3584 = vst [vmem:[%s535 + $0x10] sm:$0xff] %v3464
          %3585 = vst [vmem:[%s535 + $0x18] sm:$0xff] %v3467
          %3586 = vst [vmem:[%s535 + $0x20] sm:$0xff] %v3472
          %3587 = vst [vmem:[%s535 + $0x28] sm:$0xff] %v3475
          %3588 = vst [vmem:[%s535 + $0x30] sm:$0xff] %v3480
          %3589 = vst [vmem:[%s535 + $0x38] sm:$0xff] %v3483
          %3590 = vst [vmem:[%s535 + $0x40] sm:$0xff] %v3488
          %3591 = vst [vmem:[%s535 + $0x48] sm:$0xff] %v3491
          %3592 = vst [vmem:[%s535 + $0x50] sm:$0xff] %v3496
          %3593 = vst [vmem:[%s535 + $0x58] sm:$0xff] %v3499
          %3594 = vst [vmem:[%s535 + $0x60] sm:$0xff] %v3504
          %3595 = vst [vmem:[%s535 + $0x68] sm:$0xff] %v3507
          %3596 = vst [vmem:[%s535 + $0x70] sm:$0xff] %v3512
          %3597 = vst [vmem:[%s535 + $0x78] sm:$0xff] %v3515
          %3598 = vst [vmem:[%s535 + $0x80] sm:$0xff] %v3520
          %3599 = vst [vmem:[%s535 + $0x88] sm:$0xff] %v3523
          %3600 = vst [vmem:[%s535 + $0x90] sm:$0xff] %v3528
          %3601 = vst [vmem:[%s535 + $0x98] sm:$0xff] %v3531
          %3602 = vst [vmem:[%s535 + $0xa0] sm:$0xff] %v3536
          %3603 = vst [vmem:[%s535 + $0xa8] sm:$0xff] %v3539
          %3604 = vst [vmem:[%s535 + $0xb0] sm:$0xff] %v3544
          %3605 = vst [vmem:[%s535 + $0xb8] sm:$0xff] %v3547
          %3606 = vst [vmem:[%s535 + $0xc0] sm:$0xff] %v3552
          %3607 = vst [vmem:[%s535 + $0xc8] sm:$0xff] %v3555
          %3608 = vst [vmem:[%s535 + $0xd0] sm:$0xff] %v3560
          %3609 = vst [vmem:[%s535 + $0xd8] sm:$0xff] %v3563
          %3610 = vst [vmem:[%s535 + $0xe0] sm:$0xff] %v3568
          %3611 = vst [vmem:[%s535 + $0xe8] sm:$0xff] %v3571
          %3612 = vst [vmem:[%s535 + $0xf0] sm:$0xff] %v3576
          %3613 = vst [vmem:[%s535 + $0xf8] sm:$0xff] %v3579
        $region101: #{gat_forward.3} parent=84 // pred_fallthru
          _
        %s3614 = smul.u32 32, %s31
        %p3615 = scmp.lt.s32.totalorder %s3614, 95
        %s3616 = scalar_select %p3615, %s3614, 95
        %s3617 = smul.addr %s3616, 8
        %s3618 = scalar_lea.vmem %s8, %s3617
        %s3619 = smul.u32 32, %s31
        %p3620 = scmp.lt.s32.totalorder %s3619, 95
        %s3621 = scalar_select %p3620, %s3619, 95
        %s3622 = smul.addr %s3621, 8
        %s3623 = scalar_lea.vmem %s9, %s3622
        // Predicated region
        $region102: #{gat_forward.3} parent=84 // pred_check
          %p3624 = pneg %p216
        $region103: #{gat_forward.3} parent=84 // pred_check_branch
          %3626 = sbr.rel (%p3624) target = $region105
        $region104: #{gat_forward.3} parent=84 // pred_region
          %s3627 = smul.u32 32, %s31
        $region105: #{gat_forward.3} parent=84 // pred_fallthru
          _
        // Predicated region
        $region106: #{gat_forward.3} parent=84 // pred_check
          %p3628 = pneg %p242
        $region107: #{gat_forward.3} parent=84 // pred_check_branch
          %3630 = sbr.rel (%p3628) target = $region109
        $region108: #{gat_forward.3} parent=84 // pred_region
          %s3631 = smul.u32 32, %s31
        $region109: #{gat_forward.3} parent=84 // pred_fallthru
          _
      $region85: #{gat_forward.3} parent=5 // pred_fallthru
        _
      %p3632 = scmp.le.s32.totalorder 2, %s22
      // Predicated region
      $region110: #{gat_forward.3} parent=5 // pred_check
        %p3633 = pneg %p3632
      $region111: #{gat_forward.3} parent=5 // pred_check_branch
        %3635 = sbr.rel (%p3633) target = $region113
      $region112: #{gat_forward.3} parent=5 // pred_region
        %s3636 = ssub.s32 %s22, 2
        // Predicated region
        $region114: #{gat_forward.3} parent=112 // pred_check
          %p3637 = pneg %p222
        $region115: #{gat_forward.3} parent=112 // pred_check_branch
          %3639 = sbr.rel (%p3637) target = $region117
        $region116: #{gat_forward.3} parent=112 // pred_region
          %s3640 = smul.u32 32, %s33
          %p3641 = scmp.lt.s32.totalorder %s3640, 95
          %s3642 = scalar_select %p3641, %s3640, 95
          %s3643 = smul.addr %s3642, 8
          %s3644 = scalar_lea.vmem %s8, %s3643
        $region117: #{gat_forward.3} parent=112 // pred_fallthru
          _
        // Predicated region
        $region118: #{gat_forward.3} parent=112 // pred_check
          %p3645 = pneg %p248
        $region119: #{gat_forward.3} parent=112 // pred_check_branch
          %3647 = sbr.rel (%p3645) target = $region121
        $region120: #{gat_forward.3} parent=112 // pred_region
          %s3648 = smul.u32 32, %s33
          %p3649 = scmp.lt.s32.totalorder %s3648, 95
          %s3650 = scalar_select %p3649, %s3648, 95
          %s3651 = smul.addr %s3650, 8
          %s3652 = scalar_lea.vmem %s9, %s3651
        $region121: #{gat_forward.3} parent=112 // pred_fallthru
          _
      $region113: #{gat_forward.3} parent=5 // pred_fallthru
        _
    $region6: #{gat_forward.3} parent=1 // loop_footer
      %s26 = sadd.s32 1, %s22
    $region7: #{gat_forward.3} parent=1 // loop_footer_branch
      %21 = sbr.rel target = $region3
    $region8: #{gat_forward.3} parent=1 // loop_exit
      _

</llo_original>
